<compile_context>
chip_gen: v5e
topology: v5e:2x2
jax: 0.10.0
libtpu: 0.0.40
codegen_flags: <defaults>
</compile_context>

<pallas_src>
import functools

import jax
import jax.numpy as jnp
from jax import lax
from jax.experimental import pallas as pl
from jax.experimental.pallas import tpu as pltpu

EPS = 1e-6                      # norm_layer = partial(nn.LayerNorm, eps=1e-6)
VMEM_LIMIT = 32 * 1024 * 1024   # safe on v5e/v6e/v7x with the tile sizes below


# --------------------------------------------------------------------------
# helpers
# --------------------------------------------------------------------------
def _round_up(v, m):
    return ((v + m - 1) // m) * m


def _choose_tm(m):
    """Row-tile size.  Aim for >=2 parallel M tiles (v7x dual TC) at small M,
    256 rows at large M; always a multiple of 8 (sublane alignment)."""
    if m % 8 == 0 and m <= 512:
        half = m // 2
        if half > 0 and half % 8 == 0:
            return half
        return m
    if m <= 512:
        return _round_up(m, 8)
    return 256


def _pad_rows(x, rows):
    r = x.shape[0]
    if r == rows:
        return x
    return jnp.pad(x, ((0, rows - r), (0, 0)))


# --------------------------------------------------------------------------
# Matmul with VMEM-resident weights (+bias, optional fused residual add)
# --------------------------------------------------------------------------
def _matmul_kernel(x_ref, w_ref, b_ref, o_ref):
    acc = jnp.dot(x_ref[...], w_ref[...],
                  preferred_element_type=jnp.float32) + b_ref[...]
    o_ref[...] = acc.astype(o_ref.dtype)


def _matmul_res_kernel(x_ref, w_ref, b_ref, r_ref, o_ref):
    acc = (jnp.dot(x_ref[...], w_ref[...], preferred_element_type=jnp.float32)
           + b_ref[...] + r_ref[...].astype(jnp.float32))
    o_ref[...] = acc.astype(o_ref.dtype)


def matmul(x2d, w, b, residual=None, out_dtype=jnp.bfloat16):
    """out = x2d @ w + b (+ residual).  bf16 MXU operands, f32 accumulation.
    The full (K, N) weight lives in VMEM (constant block index -> DMA'd once)."""
    M, K = x2d.shape
    N = w.shape[1]
    tm = _choose_tm(M)
    Mp = _round_up(M, tm)

    xp = _pad_rows(x2d.astype(jnp.bfloat16), Mp)
    wp = w.astype(jnp.bfloat16)
    bp = b.astype(jnp.float32).reshape(1, N)

    in_specs = [
        pl.BlockSpec((tm, K), lambda i: (i, 0)),
        pl.BlockSpec((K, N), lambda i: (0, 0)),    # weight: VMEM-resident
        pl.BlockSpec((1, N), lambda i: (0, 0)),
    ]
    args = [xp, wp, bp]
    kernel = _matmul_kernel
    bytes_accessed = xp.size * 2 + wp.size * 2 + Mp * N * jnp.dtype(out_dtype).itemsize
    if residual is not None:
        rp = _pad_rows(residual.astype(jnp.bfloat16), Mp)
        in_specs.append(pl.BlockSpec((tm, N), lambda i: (i, 0)))
        args.append(rp)
        kernel = _matmul_res_kernel
        bytes_accessed += rp.size * 2

    out = pl.pallas_call(
        kernel,
        grid=(Mp // tm,),
        in_specs=in_specs,
        out_specs=pl.BlockSpec((tm, N), lambda i: (i, 0)),
        out_shape=jax.ShapeDtypeStruct((Mp, N), out_dtype),
        compiler_params=pltpu.CompilerParams(
            dimension_semantics=("parallel",), vmem_limit_bytes=VMEM_LIMIT),
        cost_estimate=pl.CostEstimate(flops=2 * Mp * N * K, transcendentals=0,
                                      bytes_accessed=int(bytes_accessed)),
    )(*args)
    return out if Mp == M else out[:M]


# --------------------------------------------------------------------------
# Fused LayerNorm -> matmul (+bias) [-> GELU], weights resident, LN once per tile
# --------------------------------------------------------------------------
def _ln_matmul_kernel(x_ref, g_ref, b_ref, w_ref, bias_ref, o_ref, *, act):
    x = x_ref[...].astype(jnp.float32)
    mu = jnp.mean(x, axis=-1, keepdims=True)
    var = jnp.mean(jnp.square(x - mu), axis=-1, keepdims=True)
    xn = (x - mu) * lax.rsqrt(var + EPS) * g_ref[...] + b_ref[...]
    acc = jnp.dot(xn.astype(jnp.bfloat16), w_ref[...],
                  preferred_element_type=jnp.float32) + bias_ref[...]
    if act == "gelu":
        # TODO(synk): PyTorch nn.GELU defaults to exact erf; tanh approx used here.
        acc = jax.nn.gelu(acc, approximate=True)
    o_ref[...] = acc.astype(o_ref.dtype)


def ln_matmul(x2d, gamma, beta, w, bias, act=None, out_dtype=jnp.bfloat16):
    M, K = x2d.shape
    N = w.shape[1]
    tm = _choose_tm(M)
    Mp = _round_up(M, tm)
    xp = _pad_rows(x2d.astype(jnp.bfloat16), Mp)

    out = pl.pallas_call(
        functools.partial(_ln_matmul_kernel, act=act),
        grid=(Mp // tm,),
        in_specs=[
            pl.BlockSpec((tm, K), lambda i: (i, 0)),
            pl.BlockSpec((1, K), lambda i: (0, 0)),
            pl.BlockSpec((1, K), lambda i: (0, 0)),
            pl.BlockSpec((K, N), lambda i: (0, 0)),   # weight: VMEM-resident
            pl.BlockSpec((1, N), lambda i: (0, 0)),
        ],
        out_specs=pl.BlockSpec((tm, N), lambda i: (i, 0)),
        out_shape=jax.ShapeDtypeStruct((Mp, N), out_dtype),
        compiler_params=pltpu.CompilerParams(
            dimension_semantics=("parallel",), vmem_limit_bytes=VMEM_LIMIT),
        cost_estimate=pl.CostEstimate(
            flops=2 * Mp * N * K + 8 * Mp * K,
            transcendentals=(Mp * N if act == "gelu" else 0) + Mp,
            bytes_accessed=int(xp.size * 2 + w.size * 2
                               + Mp * N * jnp.dtype(out_dtype).itemsize)),
    )(xp, gamma.astype(jnp.float32).reshape(1, K),
      beta.astype(jnp.float32).reshape(1, K),
      w.astype(jnp.bfloat16), bias.astype(jnp.float32).reshape(1, N))
    return out if Mp == M else out[:M]


# --------------------------------------------------------------------------
# Fused per-layer kernel: prompt-LN + Gate_Prompt + Gate_Feature + LN1 + QKV
# (replaces the per-layer slice / prompt_gate / concat glue of the reference)
# --------------------------------------------------------------------------
def _gate_ln_qkv_kernel(x_ref, prev_ref, gcol_ref, gp_ref, png_ref, pnb_ref,
                        g1_ref, b1_ref, w_ref, bias_ref,
                        q_ref, k_ref, v_ref, xg_ref, carry_ref, *, D):
    x = x_ref[...].astype(jnp.float32)                       # (tm, D)
    # prompt LayerNorm (Prompter(dim=768) is external -> identity; see TODO below)
    mu = jnp.mean(x, axis=-1, keepdims=True)
    var = jnp.mean(jnp.square(x - mu), axis=-1, keepdims=True)
    pn = (x - mu) * lax.rsqrt(var + EPS) * png_ref[...] + pnb_ref[...]
    gp = gp_ref[0]                                           # Gate_Prompt sigmoid (SMEM)
    new_prompt = (1.0 - gp) * pn + gp * prev_ref[...].astype(jnp.float32)
    carry_ref[...] = new_prompt.astype(carry_ref.dtype)
    # Gate_Feature: sigmoid(gf)[token] * new_prompt + x  (gcol == 0 on template rows)
    xg = gcol_ref[...] * new_prompt + x
    xg_ref[...] = xg.astype(xg_ref.dtype)                    # new residual stream
    # block LN1 + QKV projection (resident weight)
    mu2 = jnp.mean(xg, axis=-1, keepdims=True)
    var2 = jnp.mean(jnp.square(xg - mu2), axis=-1, keepdims=True)
    xn = (xg - mu2) * lax.rsqrt(var2 + EPS) * g1_ref[...] + b1_ref[...]
    acc = jnp.dot(xn.astype(jnp.bfloat16), w_ref[...],
                  preferred_element_type=jnp.float32) + bias_ref[...]
    q_ref[...] = acc[:, 0:D].astype(q_ref.dtype)
    k_ref[...] = acc[:, D:2 * D].astype(k_ref.dtype)
    v_ref[...] = acc[:, 2 * D:3 * D].astype(v_ref.dtype)


def gate_ln_qkv(xc, prev, gate_col, gp, pn_g, pn_b, g1, b1, w, bias):
    """xc/prev: (B, L, D) bf16; gate_col: (B*L, 1) f32; gp: (1,) f32.
    Returns q, k, v, gated residual, new prompt carry (all (B, L, D) bf16)."""
    B, L, D = xc.shape
    M = B * L
    tm = _choose_tm(M)
    Mp = _round_up(M, tm)
    xp = _pad_rows(xc.reshape(M, D), Mp)
    pp = _pad_rows(prev.reshape(M, D), Mp)
    gc = _pad_rows(gate_col, Mp)

    row_spec = pl.BlockSpec((tm, D), lambda i: (i, 0))
    const_spec = pl.BlockSpec((1, D), lambda i: (0, 0))
    outs = pl.pallas_call(
        functools.partial(_gate_ln_qkv_kernel, D=D),
        grid=(Mp // tm,),
        in_specs=[
            row_spec,                                         # x
            row_spec,                                         # prompt carry in
            pl.BlockSpec((tm, 1), lambda i: (i, 0)),          # per-token feature gate
            pl.BlockSpec(memory_space=pltpu.MemorySpace.SMEM),  # gate_prompt scalar
            const_spec, const_spec,                           # prompt-LN gamma/beta
            const_spec, const_spec,                           # LN1 gamma/beta
            pl.BlockSpec((D, 3 * D), lambda i: (0, 0)),       # qkv weight: resident
            pl.BlockSpec((1, 3 * D), lambda i: (0, 0)),       # qkv bias
        ],
        out_specs=tuple(pl.BlockSpec((tm, D), lambda i: (i, 0)) for _ in range(5)),
        out_shape=tuple(jax.ShapeDtypeStruct((Mp, D), jnp.bfloat16) for _ in range(5)),
        compiler_params=pltpu.CompilerParams(
            dimension_semantics=("parallel",), vmem_limit_bytes=VMEM_LIMIT),
        cost_estimate=pl.CostEstimate(
            flops=2 * Mp * 3 * D * D + 20 * Mp * D,
            transcendentals=2 * Mp,
            bytes_accessed=int(xp.size * 2 * 2 + w.size * 2 + 5 * Mp * D * 2)),
    )(xp, pp, gc, gp,
      pn_g.astype(jnp.float32).reshape(1, D), pn_b.astype(jnp.float32).reshape(1, D),
      g1.astype(jnp.float32).reshape(1, D), b1.astype(jnp.float32).reshape(1, D),
      w.astype(jnp.bfloat16), bias.astype(jnp.float32).reshape(1, 3 * D))

    q, k, v, xg, carry = outs
    if Mp != M:
        q, k, v, xg, carry = (t[:M] for t in (q, k, v, xg, carry))
    rs = lambda t: t.reshape(B, L, D)
    return rs(q), rs(k), rs(v), rs(xg), rs(carry)


# --------------------------------------------------------------------------
# Fused multi-head self-attention: grid=(B, head_groups), scores stay in VMEM,
# per-head results stored directly into o_ref (no concat / big live ranges).
# --------------------------------------------------------------------------
def _attention_kernel(q_ref, k_ref, v_ref, o_ref, *, heads_per_grp, head_dim, scale):
    for h in range(heads_per_grp):            # static unroll over heads in this group
        lo = h * head_dim
        # TODO(synk): head_dim=64 slices sit at half-vreg lane offsets for odd heads;
        # a sublane-major per-head relayout would remove the residual XLU shuffles.
        q = q_ref[:, lo:lo + head_dim]
        k = k_ref[:, lo:lo + head_dim]
        v = v_ref[:, lo:lo + head_dim]
        s = lax.dot_general(q, k, (((1,), (1,)), ((), ())),
                            preferred_element_type=jnp.float32) * scale
        m = jnp.max(s, axis=-1, keepdims=True)
        p = jnp.exp(s - m)
        p = p * pl.reciprocal(jnp.sum(p, axis=-1, keepdims=True), approx=True)
        o_ref[:, lo:lo + head_dim] = jnp.dot(
            p.astype(jnp.bfloat16), v,
            preferred_element_type=jnp.float32).astype(o_ref.dtype)


def fused_attention(q, k, v, num_heads):
    """q/k/v: (B, L, D) bf16.  Full-L attention per (batch, head-group); ARTrack
    sequences are short (<= ~320 tokens) so the (L, L) scores fit in VMEM."""
    # TODO(synk): flash-style q/kv tiling would be needed for very long sequences.
    B, L, D = q.shape
    Dh = D // num_heads
    G = 1
    for cand in (4, 2):   # extra parallel grid work for v7x dual TC, lane-aligned only
        if num_heads % cand == 0 and D % cand == 0 and (D // cand) % 128 == 0:
            G = cand
            break
    Hg = num_heads // G
    Dg = D // G
    spec = pl.BlockSpec((None, L, Dg), lambda b, g: (b, 0, g))
    kernel = functools.partial(_attention_kernel, heads_per_grp=Hg,
                               head_dim=Dh, scale=Dh ** -0.5)
    return pl.pallas_call(
        kernel,
        grid=(B, G),
        in_specs=[spec, spec, spec],
        out_specs=pl.BlockSpec((None, L, Dg), lambda b, g: (b, 0, g)),
        out_shape=jax.ShapeDtypeStruct((B, L, D), jnp.bfloat16),
        compiler_params=pltpu.CompilerParams(
            dimension_semantics=("parallel", "parallel"),
            vmem_limit_bytes=VMEM_LIMIT),
        cost_estimate=pl.CostEstimate(
            flops=4 * B * num_heads * L * L * Dh,
            transcendentals=B * num_heads * L * L,
            bytes_accessed=int(4 * B * L * D * 2)),
    )(q, k, v)


# --------------------------------------------------------------------------
# Layer-0 prompt path: prompt-LN + Gate_Feature (before pos-embed / concat)
# --------------------------------------------------------------------------
def _gate0_kernel(x_ref, g_ref, b_ref, gate_ref, xg_ref, carry_ref):
    x = x_ref[...]
    mu = jnp.mean(x, axis=-1, keepdims=True)
    var = jnp.mean(jnp.square(x - mu), axis=-1, keepdims=True)
    xn = (x - mu) * lax.rsqrt(var + EPS) * g_ref[...] + b_ref[...]
    carry_ref[...] = xn.astype(carry_ref.dtype)
    xg_ref[...] = gate_ref[...] * xn + x


def prompt_gate0(x, pn_g, pn_b, gf_logit):
    B, Lx, D = x.shape
    M = B * Lx
    x2 = x.reshape(M, D).astype(jnp.float32)
    gate_col = jnp.broadcast_to(jax.nn.sigmoid(gf_logit)[None, :],
                                (B, Lx)).reshape(M, 1).astype(jnp.float32)
    tm = _choose_tm(M)
    Mp = _round_up(M, tm)
    xp = _pad_rows(x2, Mp)
    gc = _pad_rows(gate_col, Mp)
    xg, carry = pl.pallas_call(
        _gate0_kernel,
        grid=(Mp // tm,),
        in_specs=[pl.BlockSpec((tm, D), lambda i: (i, 0)),
                  pl.BlockSpec((1, D), lambda i: (0, 0)),
                  pl.BlockSpec((1, D), lambda i: (0, 0)),
                  pl.BlockSpec((tm, 1), lambda i: (i, 0))],
        out_specs=(pl.BlockSpec((tm, D), lambda i: (i, 0)),
                   pl.BlockSpec((tm, D), lambda i: (i, 0))),
        out_shape=(jax.ShapeDtypeStruct((Mp, D), jnp.float32),
                   jax.ShapeDtypeStruct((Mp, D), jnp.bfloat16)),
        compiler_params=pltpu.CompilerParams(
            dimension_semantics=("parallel",), vmem_limit_bytes=VMEM_LIMIT),
    )(xp, pn_g.astype(jnp.float32).reshape(1, D),
      pn_b.astype(jnp.float32).reshape(1, D), gc)
    if Mp != M:
        xg, carry = xg[:M], carry[:M]
    return xg.reshape(B, Lx, D), carry.reshape(B, Lx, D)


# --------------------------------------------------------------------------
# Standalone LayerNorm (final norm)
# --------------------------------------------------------------------------
def _layernorm_kernel(x_ref, g_ref, b_ref, o_ref):
    x = x_ref[...].astype(jnp.float32)
    mu = jnp.mean(x, axis=-1, keepdims=True)
    var = jnp.mean(jnp.square(x - mu), axis=-1, keepdims=True)
    o_ref[...] = ((x - mu) * lax.rsqrt(var + EPS) * g_ref[...]
                  + b_ref[...]).astype(o_ref.dtype)


def layernorm(x, gamma, beta):
    B, L, D = x.shape
    M = B * L
    tm = _choose_tm(M)
    Mp = _round_up(M, tm)
    xp = _pad_rows(x.reshape(M, D), Mp)
    y = pl.pallas_call(
        _layernorm_kernel,
        grid=(Mp // tm,),
        in_specs=[pl.BlockSpec((tm, D), lambda i: (i, 0)),
                  pl.BlockSpec((1, D), lambda i: (0, 0)),
                  pl.BlockSpec((1, D), lambda i: (0, 0))],
        out_specs=pl.BlockSpec((tm, D), lambda i: (i, 0)),
        out_shape=jax.ShapeDtypeStruct((Mp, D), jnp.float32),
        compiler_params=pltpu.CompilerParams(
            dimension_semantics=("parallel",), vmem_limit_bytes=VMEM_LIMIT),
    )(xp, gamma.astype(jnp.float32).reshape(1, D),
      beta.astype(jnp.float32).reshape(1, D))
    if Mp != M:
        y = y[:M]
    return y.reshape(B, L, D)


# --------------------------------------------------------------------------
# Module pieces (glue matching the PyTorch reference)
# --------------------------------------------------------------------------
def patch_embed(img, w, b):
    """ViT PatchEmbed: Conv2d(k=p, s=p) as a resident-weight Pallas matmul."""
    Do, C, p, _ = w.shape
    B, _, H, W = img.shape
    Hp, Wp = H // p, W // p
    xp = img.reshape(B, C, Hp, p, Wp, p)
    xp = jnp.transpose(xp, (0, 2, 4, 1, 3, 5)).reshape(B * Hp * Wp, C * p * p)
    w2 = jnp.transpose(w.reshape(Do, C * p * p))      # (C*p*p, D)
    tok = matmul(xp, w2, b, out_dtype=jnp.float32)
    return tok.reshape(B, Hp * Wp, Do)


# --------------------------------------------------------------------------
# BaseBackbone.forward_features / forward
# --------------------------------------------------------------------------
def forward_features(params, z_img, x_img, identity, *, num_heads):
    B = x_img.shape[0]

    x = patch_embed(x_img, params["patch_w"], params["patch_b"])  # (B, L_x, D) f32
    z = patch_embed(z_img, params["patch_w"], params["patch_b"])  # (B, L_z, D) f32
    L_x, D = x.shape[1], x.shape[2]
    L_z = z.shape[1]
    L = L_z + L_x
    depth = params["prompt_norm_g"].shape[0]

    # layer-0 prompt path: carry = Prompter(LN0(x)) == LN0(x) (Prompter ~ identity),
    # x = sigmoid(gf0) * carry + x
    # TODO(synk): Prompter(dim=768) is defined outside this module; treated as identity.
    x, carry_x = prompt_gate0(x, params["prompt_norm_g"][0],
                              params["prompt_norm_b"][0],
                              params["gate_feature_logit"][0])

    z = z + params["pos_embed_z"] + identity[:, 0:1, :]
    x = x + params["pos_embed_x"] + identity[:, 1:2, :]

    # combine_tokens(mode="direct"); residual stream carried in bf16 from here on.
    xc = jnp.concatenate([z, x], axis=1).astype(jnp.bfloat16)         # (B, L, D)
    carry = jnp.concatenate([jnp.zeros((B, L_z, D), jnp.bfloat16),
                             carry_x], axis=1)                        # z rows unused
    # pos_drop is nn.Dropout -> identity at inference.

    # per-layer elementwise-gate schedule (layer 0 does no in-loop gating: gate=0, gp=1)
    gf = jax.nn.sigmoid(params["gate_feature_logit"])                 # (depth, L_x)
    gate_rows = jnp.concatenate([jnp.zeros((depth, L_z), jnp.float32), gf], axis=1)
    gate_rows = gate_rows.at[0].set(0.0)
    gate_cols = jnp.broadcast_to(gate_rows[:, None, :],
                                 (depth, B, L)).reshape(depth, B * L, 1)
    gp = jnp.concatenate(
        [jnp.ones((1,), jnp.float32),
         jax.nn.sigmoid(params["gate_prompt_logit"]).reshape(-1)]).reshape(depth, 1)

    scan_in = {"blk": params["blocks"],
               "pn_g": params["prompt_norm_g"],
               "pn_b": params["prompt_norm_b"],
               "gate_col": gate_cols,
               "gp": gp}

    def body(state, inp):
        xc, carry = state
        blk = inp["blk"]
        # fused: prompt-LN + Gate_Prompt + Gate_Feature + LN1 + QKV (no slice/concat)
        q, k, v, xg, carry_new = gate_ln_qkv(
            xc, carry, inp["gate_col"], inp["gp"], inp["pn_g"], inp["pn_b"],
            blk["norm1_g"], blk["norm1_b"], blk["qkv_w"], blk["qkv_b"])
        attn = fused_attention(q, k, v, num_heads)                    # (B, L, D) bf16
        x2 = matmul(attn.reshape(B * L, D), blk["proj_w"], blk["proj_b"],
                    residual=xg.reshape(B * L, D))                    # + residual
        h = ln_matmul(x2, blk["norm2_g"], blk["norm2_b"],
                      blk["fc1_w"], blk["fc1_b"], act="gelu")         # LN2+FC1+GELU
        x2 = matmul(h, blk["fc2_w"], blk["fc2_b"], residual=x2)       # FC2 + residual
        return (x2.reshape(B, L, D), carry_new), None

    (xc, _), _ = lax.scan(body, (xc, carry), scan_in)

    out = layernorm(xc, params["norm_g"], params["norm_b"])
    return out, {"attn": None}


@functools.partial(jax.jit, static_argnames=("num_heads",))
def base_backbone_forward(params, z, x, identity, *, num_heads):
    return forward_features(params, z, x, identity, num_heads=num_heads)


# --------------------------------------------------------------------------
# Deterministic parameter initialization (synthetic; shapes follow __init__)
# --------------------------------------------------------------------------
def init_params(key, *, depth, D, C, patch, L_z, L_x, mlp_ratio):
    ks = jax.random.split(key, 8)

    def nrm(k, shape, std=0.02, dtype=jnp.float32):
        return (std * jax.random.normal(k, shape, jnp.float32)).astype(dtype)

    Dm = mlp_ratio * D
    bf16 = jnp.bfloat16  # matmul weights stored bf16 (MXU native, half the DMA)

    def block_params(k):
        bk = jax.random.split(k, 4)
        return {
            "norm1_g": jnp.ones((D,), jnp.float32),
            "norm1_b": jnp.zeros((D,), jnp.float32),
            "qkv_w": nrm(bk[0], (D, 3 * D), dtype=bf16),
            "qkv_b": jnp.zeros((3 * D,), jnp.float32),
            "proj_w": nrm(bk[1], (D, D), dtype=bf16),
            "proj_b": jnp.zeros((D,), jnp.float32),
            "norm2_g": jnp.ones((D,), jnp.float32),
            "norm2_b": jnp.zeros((D,), jnp.float32),
            "fc1_w": nrm(bk[2], (D, Dm), dtype=bf16),
            "fc1_b": jnp.zeros((Dm,), jnp.float32),
            "fc2_w": nrm(bk[3], (Dm, D), dtype=bf16),
            "fc2_b": jnp.zeros((D,), jnp.float32),
        }

    bkeys = jax.random.split(ks[3], depth)
    blocks = [block_params(k) for k in bkeys]

    return {
        "patch_w": nrm(ks[0], (D, C, patch, patch), dtype=bf16),
        "patch_b": jnp.zeros((D,), jnp.float32),
        "pos_embed_z": nrm(ks[1], (1, L_z, D)),
        "pos_embed_x": nrm(ks[2], (1, L_x, D)),
        # prompt_norms: depth x LayerNorm(D), eps=1e-6
        "prompt_norm_g": jnp.ones((depth, D), jnp.float32),
        "prompt_norm_b": jnp.zeros((depth, D), jnp.float32),
        # Gate_Feature(NUM=L_x, GATE_INIT=10) x depth -> logits = +10
        "gate_feature_logit": 10.0 * jnp.ones((depth, L_x), jnp.float32),
        # Gate_Prompt(NUM=1, GATE_INIT=10) x (depth-1) -> logits = -10
        "gate_prompt_logit": -10.0 * jnp.ones((depth - 1, 1), jnp.float32),
        "blocks": jax.tree_util.tree_map(lambda *xs: jnp.stack(xs), *blocks),
        "norm_g": jnp.ones((D,), jnp.float32),
        "norm_b": jnp.zeros((D,), jnp.float32),
    }


# --------------------------------------------------------------------------
if __name__ == "__main__":
    B, C, PATCH = 2, 3, 4
    D, NUM_HEADS, DEPTH, MLP_RATIO = 32, 4, 12, 4
    Hz = Wz = 8    # template  -> L_z = 4
    Hx = Wx = 16   # search    -> L_x = 16 (perfect square token grid)
    L_z = (Hz // PATCH) * (Wz // PATCH)
    L_x = (Hx // PATCH) * (Wx // PATCH)

    key = jax.random.PRNGKey(0)
    kz, kx, kid, kp = jax.random.split(key, 4)
    z = jax.random.normal(kz, (B, C, Hz, Wz), jnp.float32)
    x = jax.random.normal(kx, (B, C, Hx, Wx), jnp.float32)
    identity = 0.02 * jax.random.normal(kid, (1, 2, D), jnp.float32)

    params = init_params(kp, depth=DEPTH, D=D, C=C, patch=PATCH,
                         L_z=L_z, L_x=L_x, mlp_ratio=MLP_RATIO)

    out, aux = base_backbone_forward(params, z, x, identity, num_heads=NUM_HEADS)
    out = jax.block_until_ready(out)

    assert out.shape == (B, L_z + L_x, D), out.shape
    assert jnp.all(jnp.isfinite(out))
    assert aux["attn"] is None
    print("KERNEL_OK")
</pallas_src>

<mosaic_0001>
module attributes {stable_mosaic.version = 11 : i64} {
  func.func @_matmul_kernel(%arg0: i32, %arg1: memref<16x48xbf16, #tpu.memory_space<vmem>>, %arg2: memref<48x32xbf16, #tpu.memory_space<vmem>>, %arg3: memref<1x32xf32, #tpu.memory_space<vmem>>, %arg4: memref<16x32xf32, #tpu.memory_space<vmem>>) attributes {dimension_semantics = [#tpu.dimension_semantics<parallel>], iteration_bounds = array<i64: 2>, scalar_prefetch = 0 : i64, scratch_operands = 0 : i64, tpu.core_type = #tpu.core_type<tc>, window_params = [{transform_indices = @transform_0, window_bounds = array<i64: 16, 48>}, {pipeline_mode = #tpu.pipeline_mode<synchronous>, transform_indices = @transform_1, window_bounds = array<i64: 48, 32>}, {pipeline_mode = #tpu.pipeline_mode<synchronous>, transform_indices = @transform_2, window_bounds = array<i64: 1, 32>}, {transform_indices = @transform_3, window_bounds = array<i64: 16, 32>}]} {
    %c0 = arith.constant 0 : index
    %c0_0 = arith.constant 0 : index
    %0 = vector.load %arg1[%c0, %c0_0] : memref<16x48xbf16, #tpu.memory_space<vmem>>, vector<16x48xbf16>
    %c0_1 = arith.constant 0 : index
    %c0_2 = arith.constant 0 : index
    %1 = vector.load %arg2[%c0_1, %c0_2] : memref<48x32xbf16, #tpu.memory_space<vmem>>, vector<48x32xbf16>
    %cst = arith.constant dense<0.000000e+00> : vector<16x32xf32>
    %2 = tpu.matmul %0, %1, %cst {dimension_numbers = #tpu.dot_dimension_numbers<[1], [0], [0], [1], [0, 0, 1, 1], [], []>} : vector<16x48xbf16>, vector<48x32xbf16>, vector<16x32xf32> -> vector<16x32xf32>
    %c0_3 = arith.constant 0 : index
    %c0_4 = arith.constant 0 : index
    %3 = vector.load %arg3[%c0_3, %c0_4] : memref<1x32xf32, #tpu.memory_space<vmem>>, vector<1x32xf32>
    %4 = vector.broadcast %3 : vector<1x32xf32> to vector<16x32xf32>
    %5 = arith.addf %2, %4 : vector<16x32xf32>
    %c0_5 = arith.constant 0 : index
    %c0_6 = arith.constant 0 : index
    %6 = vector.load %arg4[%c0_5, %c0_6] : memref<16x32xf32, #tpu.memory_space<vmem>>, vector<16x32xf32>
    tpu.vector_store %arg4[%c0_5, %c0_6], %5 {strides = array<i32>} : memref<16x32xf32, #tpu.memory_space<vmem>>, vector<16x32xf32>,
    return
  }
  func.func @transform_0(%arg0: i32) -> (i32, i32) {
    %c0_i32 = arith.constant 0 : i32
    %c0_i32_0 = arith.constant 0 : i32
    return %arg0, %c0_i32 : i32, i32
  }
  func.func @transform_1(%arg0: i32) -> (i32, i32) {
    %c0_i32 = arith.constant 0 : i32
    %c0_i32_0 = arith.constant 0 : i32
    %c0_i32_1 = arith.constant 0 : i32
    return %c0_i32, %c0_i32_0 : i32, i32
  }
  func.func @transform_2(%arg0: i32) -> (i32, i32) {
    %c0_i32 = arith.constant 0 : i32
    %c0_i32_0 = arith.constant 0 : i32
    %c0_i32_1 = arith.constant 0 : i32
    return %c0_i32, %c0_i32_0 : i32, i32
  }
  func.func @transform_3(%arg0: i32) -> (i32, i32) {
    %c0_i32 = arith.constant 0 : i32
    %c0_i32_0 = arith.constant 0 : i32
    return %arg0, %c0_i32 : i32, i32
  }
}

module attributes {stable_mosaic.version = 11 : i64} {
  func.func @_gate0_kernel(%arg0: i32, %arg1: memref<16x32xf32, #tpu.memory_space<vmem>>, %arg2: memref<1x32xf32, #tpu.memory_space<vmem>>, %arg3: memref<1x32xf32, #tpu.memory_space<vmem>>, %arg4: memref<16x1xf32, #tpu.memory_space<vmem>>, %arg5: memref<16x32xf32, #tpu.memory_space<vmem>>, %arg6: memref<16x32xbf16, #tpu.memory_space<vmem>>) attributes {dimension_semantics = [#tpu.dimension_semantics<parallel>], iteration_bounds = array<i64: 2>, scalar_prefetch = 0 : i64, scratch_operands = 0 : i64, tpu.core_type = #tpu.core_type<tc>, window_params = [{transform_indices = @transform_0, window_bounds = array<i64: 16, 32>}, {pipeline_mode = #tpu.pipeline_mode<synchronous>, transform_indices = @transform_1, window_bounds = array<i64: 1, 32>}, {pipeline_mode = #tpu.pipeline_mode<synchronous>, transform_indices = @transform_2, window_bounds = array<i64: 1, 32>}, {transform_indices = @transform_3, window_bounds = array<i64: 16, 1>}, {transform_indices = @transform_4, window_bounds = array<i64: 16, 32>}, {transform_indices = @transform_5, window_bounds = array<i64: 16, 32>}]} {
    %c0 = arith.constant 0 : index
    %c0_0 = arith.constant 0 : index
    %0 = vector.load %arg1[%c0, %c0_0] : memref<16x32xf32, #tpu.memory_space<vmem>>, vector<16x32xf32>
    %cst = arith.constant dense<0.000000e+00> : vector<16xf32>
    %1 = vector.multi_reduction <add>, %0, %cst [1] : vector<16x32xf32> to vector<16xf32>
    %2 = vector.shape_cast %1 : vector<16xf32> to vector<16x1xf32>
    %cst_1 = arith.constant 3.200000e+01 : f32
    %3 = vector.broadcast %cst_1 : f32 to vector<16x1xf32>
    %4 = arith.divf %2, %3 : vector<16x1xf32>
    %5 = vector.broadcast %4 : vector<16x1xf32> to vector<16x32xf32>
    %6 = arith.subf %0, %5 : vector<16x32xf32>
    %7 = arith.mulf %6, %6 : vector<16x32xf32>
    %cst_2 = arith.constant dense<0.000000e+00> : vector<16xf32>
    %8 = vector.multi_reduction <add>, %7, %cst_2 [1] : vector<16x32xf32> to vector<16xf32>
    %9 = vector.shape_cast %8 : vector<16xf32> to vector<16x1xf32>
    %cst_3 = arith.constant 3.200000e+01 : f32
    %10 = vector.broadcast %cst_3 : f32 to vector<16x1xf32>
    %11 = arith.divf %9, %10 : vector<16x1xf32>
    %12 = vector.broadcast %4 : vector<16x1xf32> to vector<16x32xf32>
    %13 = arith.subf %0, %12 : vector<16x32xf32>
    %cst_4 = arith.constant 9.99999997E-7 : f32
    %14 = vector.broadcast %cst_4 : f32 to vector<16x1xf32>
    %15 = arith.addf %11, %14 : vector<16x1xf32>
    %16 = math.rsqrt %15 : vector<16x1xf32>
    %17 = vector.broadcast %16 : vector<16x1xf32> to vector<16x32xf32>
    %18 = arith.mulf %13, %17 : vector<16x32xf32>
    %c0_5 = arith.constant 0 : index
    %c0_6 = arith.constant 0 : index
    %19 = vector.load %arg2[%c0_5, %c0_6] : memref<1x32xf32, #tpu.memory_space<vmem>>, vector<1x32xf32>
    %20 = vector.broadcast %19 : vector<1x32xf32> to vector<16x32xf32>
    %21 = arith.mulf %18, %20 : vector<16x32xf32>
    %c0_7 = arith.constant 0 : index
    %c0_8 = arith.constant 0 : index
    %22 = vector.load %arg3[%c0_7, %c0_8] : memref<1x32xf32, #tpu.memory_space<vmem>>, vector<1x32xf32>
    %23 = vector.broadcast %22 : vector<1x32xf32> to vector<16x32xf32>
    %24 = arith.addf %21, %23 : vector<16x32xf32>
    %25 = arith.truncf %24 : vector<16x32xf32> to vector<16x32xbf16>
    %c0_9 = arith.constant 0 : index
    %c0_10 = arith.constant 0 : index
    %26 = vector.load %arg6[%c0_9, %c0_10] : memref<16x32xbf16, #tpu.memory_space<vmem>>, vector<16x32xbf16>
    tpu.vector_store %arg6[%c0_9, %c0_10], %25 {strides = array<i32>} : memref<16x32xbf16, #tpu.memory_space<vmem>>, vector<16x32xbf16>,
    %c0_11 = arith.constant 0 : index
    %c0_12 = arith.constant 0 : index
    %27 = vector.load %arg4[%c0_11, %c0_12] : memref<16x1xf32, #tpu.memory_space<vmem>>, vector<16x1xf32>
    %28 = vector.broadcast %27 : vector<16x1xf32> to vector<16x32xf32>
    %29 = arith.mulf %28, %24 : vector<16x32xf32>
    %30 = arith.addf %29, %0 : vector<16x32xf32>
    %c0_13 = arith.constant 0 : index
    %c0_14 = arith.constant 0 : index
    %31 = vector.load %arg5[%c0_13, %c0_14] : memref<16x32xf32, #tpu.memory_space<vmem>>, vector<16x32xf32>
    tpu.vector_store %arg5[%c0_13, %c0_14], %30 {strides = array<i32>} : memref<16x32xf32, #tpu.memory_space<vmem>>, vector<16x32xf32>,
    return
  }
  func.func @transform_0(%arg0: i32) -> (i32, i32) {
    %c0_i32 = arith.constant 0 : i32
    %c0_i32_0 = arith.constant 0 : i32
    return %arg0, %c0_i32 : i32, i32
  }
  func.func @transform_1(%arg0: i32) -> (i32, i32) {
    %c0_i32 = arith.constant 0 : i32
    %c0_i32_0 = arith.constant 0 : i32
    %c0_i32_1 = arith.constant 0 : i32
    return %c0_i32, %c0_i32_0 : i32, i32
  }
  func.func @transform_2(%arg0: i32) -> (i32, i32) {
    %c0_i32 = arith.constant 0 : i32
    %c0_i32_0 = arith.constant 0 : i32
    %c0_i32_1 = arith.constant 0 : i32
    return %c0_i32, %c0_i32_0 : i32, i32
  }
  func.func @transform_3(%arg0: i32) -> (i32, i32) {
    %c0_i32 = arith.constant 0 : i32
    %c0_i32_0 = arith.constant 0 : i32
    return %arg0, %c0_i32 : i32, i32
  }
  func.func @transform_4(%arg0: i32) -> (i32, i32) {
    %c0_i32 = arith.constant 0 : i32
    %c0_i32_0 = arith.constant 0 : i32
    return %arg0, %c0_i32 : i32, i32
  }
  func.func @transform_5(%arg0: i32) -> (i32, i32) {
    %c0_i32 = arith.constant 0 : i32
    %c0_i32_0 = arith.constant 0 : i32
    return %arg0, %c0_i32 : i32, i32
  }
}

module attributes {stable_mosaic.version = 11 : i64} {
  func.func @_matmul_kernel(%arg0: i32, %arg1: memref<8x48xbf16, #tpu.memory_space<vmem>>, %arg2: memref<48x32xbf16, #tpu.memory_space<vmem>>, %arg3: memref<1x32xf32, #tpu.memory_space<vmem>>, %arg4: memref<8x32xf32, #tpu.memory_space<vmem>>) attributes {dimension_semantics = [#tpu.dimension_semantics<parallel>], iteration_bounds = array<i64: 1>, scalar_prefetch = 0 : i64, scratch_operands = 0 : i64, tpu.core_type = #tpu.core_type<tc>, window_params = [{transform_indices = @transform_0, window_bounds = array<i64: 8, 48>}, {pipeline_mode = #tpu.pipeline_mode<synchronous>, transform_indices = @transform_1, window_bounds = array<i64: 48, 32>}, {pipeline_mode = #tpu.pipeline_mode<synchronous>, transform_indices = @transform_2, window_bounds = array<i64: 1, 32>}, {transform_indices = @transform_3, window_bounds = array<i64: 8, 32>}]} {
    %c0 = arith.constant 0 : index
    %c0_0 = arith.constant 0 : index
    %0 = vector.load %arg1[%c0, %c0_0] : memref<8x48xbf16, #tpu.memory_space<vmem>>, vector<8x48xbf16>
    %c0_1 = arith.constant 0 : index
    %c0_2 = arith.constant 0 : index
    %1 = vector.load %arg2[%c0_1, %c0_2] : memref<48x32xbf16, #tpu.memory_space<vmem>>, vector<48x32xbf16>
    %cst = arith.constant dense<0.000000e+00> : vector<8x32xf32>
    %2 = tpu.matmul %0, %1, %cst {dimension_numbers = #tpu.dot_dimension_numbers<[1], [0], [0], [1], [0, 0, 1, 1], [], []>} : vector<8x48xbf16>, vector<48x32xbf16>, vector<8x32xf32> -> vector<8x32xf32>
    %c0_3 = arith.constant 0 : index
    %c0_4 = arith.constant 0 : index
    %3 = vector.load %arg3[%c0_3, %c0_4] : memref<1x32xf32, #tpu.memory_space<vmem>>, vector<1x32xf32>
    %4 = vector.broadcast %3 : vector<1x32xf32> to vector<8x32xf32>
    %5 = arith.addf %2, %4 : vector<8x32xf32>
    %c0_5 = arith.constant 0 : index
    %c0_6 = arith.constant 0 : index
    %6 = vector.load %arg4[%c0_5, %c0_6] : memref<8x32xf32, #tpu.memory_space<vmem>>, vector<8x32xf32>
    tpu.vector_store %arg4[%c0_5, %c0_6], %5 {strides = array<i32>} : memref<8x32xf32, #tpu.memory_space<vmem>>, vector<8x32xf32>,
    return
  }
  func.func @transform_0(%arg0: i32) -> (i32, i32) {
    %c0_i32 = arith.constant 0 : i32
    %c0_i32_0 = arith.constant 0 : i32
    return %arg0, %c0_i32 : i32, i32
  }
  func.func @transform_1(%arg0: i32) -> (i32, i32) {
    %c0_i32 = arith.constant 0 : i32
    %c0_i32_0 = arith.constant 0 : i32
    %c0_i32_1 = arith.constant 0 : i32
    return %c0_i32, %c0_i32_0 : i32, i32
  }
  func.func @transform_2(%arg0: i32) -> (i32, i32) {
    %c0_i32 = arith.constant 0 : i32
    %c0_i32_0 = arith.constant 0 : i32
    %c0_i32_1 = arith.constant 0 : i32
    return %c0_i32, %c0_i32_0 : i32, i32
  }
  func.func @transform_3(%arg0: i32) -> (i32, i32) {
    %c0_i32 = arith.constant 0 : i32
    %c0_i32_0 = arith.constant 0 : i32
    return %arg0, %c0_i32 : i32, i32
  }
}

module attributes {stable_mosaic.version = 11 : i64} {
  func.func @_gate_ln_qkv_kernel(%arg0: i32, %arg1: memref<40x32xbf16, #tpu.memory_space<vmem>>, %arg2: memref<40x32xbf16, #tpu.memory_space<vmem>>, %arg3: memref<40x1xf32, #tpu.memory_space<vmem>>, %arg4: memref<1xf32, #tpu.memory_space<smem>>, %arg5: memref<1x32xf32, #tpu.memory_space<vmem>>, %arg6: memref<1x32xf32, #tpu.memory_space<vmem>>, %arg7: memref<1x32xf32, #tpu.memory_space<vmem>>, %arg8: memref<1x32xf32, #tpu.memory_space<vmem>>, %arg9: memref<32x96xbf16, #tpu.memory_space<vmem>>, %arg10: memref<1x96xf32, #tpu.memory_space<vmem>>, %arg11: memref<40x32xbf16, #tpu.memory_space<vmem>>, %arg12: memref<40x32xbf16, #tpu.memory_space<vmem>>, %arg13: memref<40x32xbf16, #tpu.memory_space<vmem>>, %arg14: memref<40x32xbf16, #tpu.memory_space<vmem>>, %arg15: memref<40x32xbf16, #tpu.memory_space<vmem>>) attributes {dimension_semantics = [#tpu.dimension_semantics<parallel>], iteration_bounds = array<i64: 1>, scalar_prefetch = 0 : i64, scratch_operands = 0 : i64, tpu.core_type = #tpu.core_type<tc>, window_params = [{transform_indices = @transform_0, window_bounds = array<i64: 40, 32>}, {transform_indices = @transform_1, window_bounds = array<i64: 40, 32>}, {transform_indices = @transform_2, window_bounds = array<i64: 40, 1>}, {transform_indices = @transform_3, window_bounds = array<i64: 1>}, {pipeline_mode = #tpu.pipeline_mode<synchronous>, transform_indices = @transform_4, window_bounds = array<i64: 1, 32>}, {pipeline_mode = #tpu.pipeline_mode<synchronous>, transform_indices = @transform_5, window_bounds = array<i64: 1, 32>}, {pipeline_mode = #tpu.pipeline_mode<synchronous>, transform_indices = @transform_6, window_bounds = array<i64: 1, 32>}, {pipeline_mode = #tpu.pipeline_mode<synchronous>, transform_indices = @transform_7, window_bounds = array<i64: 1, 32>}, {pipeline_mode = #tpu.pipeline_mode<synchronous>, transform_indices = @transform_8, window_bounds = array<i64: 32, 96>}, {pipeline_mode = #tpu.pipeline_mode<synchronous>, transform_indices = @transform_9, window_bounds = array<i64: 1, 96>}, {transform_indices = @transform_10, window_bounds = array<i64: 40, 32>}, {transform_indices = @transform_11, window_bounds = array<i64: 40, 32>}, {transform_indices = @transform_12, window_bounds = array<i64: 40, 32>}, {transform_indices = @transform_13, window_bounds = array<i64: 40, 32>}, {transform_indices = @transform_14, window_bounds = array<i64: 40, 32>}]} {
    %c0 = arith.constant 0 : index
    %c0_0 = arith.constant 0 : index
    %0 = vector.load %arg1[%c0, %c0_0] : memref<40x32xbf16, #tpu.memory_space<vmem>>, vector<40x32xbf16>
    %1 = arith.extf %0 : vector<40x32xbf16> to vector<40x32xf32>
    %cst = arith.constant dense<0.000000e+00> : vector<40xf32>
    %2 = vector.multi_reduction <add>, %1, %cst [1] : vector<40x32xf32> to vector<40xf32>
    %3 = vector.shape_cast %2 : vector<40xf32> to vector<40x1xf32>
    %cst_1 = arith.constant 3.200000e+01 : f32
    %4 = vector.broadcast %cst_1 : f32 to vector<40x1xf32>
    %5 = arith.divf %3, %4 : vector<40x1xf32>
    %6 = vector.broadcast %5 : vector<40x1xf32> to vector<40x32xf32>
    %7 = arith.subf %1, %6 : vector<40x32xf32>
    %8 = arith.mulf %7, %7 : vector<40x32xf32>
    %cst_2 = arith.constant dense<0.000000e+00> : vector<40xf32>
    %9 = vector.multi_reduction <add>, %8, %cst_2 [1] : vector<40x32xf32> to vector<40xf32>
    %10 = vector.shape_cast %9 : vector<40xf32> to vector<40x1xf32>
    %cst_3 = arith.constant 3.200000e+01 : f32
    %11 = vector.broadcast %cst_3 : f32 to vector<40x1xf32>
    %12 = arith.divf %10, %11 : vector<40x1xf32>
    %13 = vector.broadcast %5 : vector<40x1xf32> to vector<40x32xf32>
    %14 = arith.subf %1, %13 : vector<40x32xf32>
    %cst_4 = arith.constant 9.99999997E-7 : f32
    %15 = vector.broadcast %cst_4 : f32 to vector<40x1xf32>
    %16 = arith.addf %12, %15 : vector<40x1xf32>
    %17 = math.rsqrt %16 : vector<40x1xf32>
    %18 = vector.broadcast %17 : vector<40x1xf32> to vector<40x32xf32>
    %19 = arith.mulf %14, %18 : vector<40x32xf32>
    %c0_5 = arith.constant 0 : index
    %c0_6 = arith.constant 0 : index
    %20 = vector.load %arg5[%c0_5, %c0_6] : memref<1x32xf32, #tpu.memory_space<vmem>>, vector<1x32xf32>
    %21 = vector.broadcast %20 : vector<1x32xf32> to vector<40x32xf32>
    %22 = arith.mulf %19, %21 : vector<40x32xf32>
    %c0_7 = arith.constant 0 : index
    %c0_8 = arith.constant 0 : index
    %23 = vector.load %arg6[%c0_7, %c0_8] : memref<1x32xf32, #tpu.memory_space<vmem>>, vector<1x32xf32>
    %24 = vector.broadcast %23 : vector<1x32xf32> to vector<40x32xf32>
    %25 = arith.addf %22, %24 : vector<40x32xf32>
    %c0_9 = arith.constant 0 : index
    %26 = memref.load %arg4[%c0_9] : memref<1xf32, #tpu.memory_space<smem>>
    %cst_10 = arith.constant 1.000000e+00 : f32
    %27 = arith.subf %cst_10, %26 : f32
    %28 = vector.broadcast %27 : f32 to vector<40x32xf32>
    %29 = arith.mulf %28, %25 : vector<40x32xf32>
    %c0_11 = arith.constant 0 : index
    %c0_12 = arith.constant 0 : index
    %30 = vector.load %arg2[%c0_11, %c0_12] : memref<40x32xbf16, #tpu.memory_space<vmem>>, vector<40x32xbf16>
    %31 = arith.extf %30 : vector<40x32xbf16> to vector<40x32xf32>
    %32 = vector.broadcast %26 : f32 to vector<40x32xf32>
    %33 = arith.mulf %32, %31 : vector<40x32xf32>
    %34 = arith.addf %29, %33 : vector<40x32xf32>
    %35 = arith.truncf %34 : vector<40x32xf32> to vector<40x32xbf16>
    %c0_13 = arith.constant 0 : index
    %c0_14 = arith.constant 0 : index
    %36 = vector.load %arg15[%c0_13, %c0_14] : memref<40x32xbf16, #tpu.memory_space<vmem>>, vector<40x32xbf16>
    tpu.vector_store %arg15[%c0_13, %c0_14], %35 {strides = array<i32>} : memref<40x32xbf16, #tpu.memory_space<vmem>>, vector<40x32xbf16>,
    %c0_15 = arith.constant 0 : index
    %c0_16 = arith.constant 0 : index
    %37 = vector.load %arg3[%c0_15, %c0_16] : memref<40x1xf32, #tpu.memory_space<vmem>>, vector<40x1xf32>
    %38 = vector.broadcast %37 : vector<40x1xf32> to vector<40x32xf32>
    %39 = arith.mulf %38, %34 : vector<40x32xf32>
    %40 = arith.addf %39, %1 : vector<40x32xf32>
    %41 = arith.truncf %40 : vector<40x32xf32> to vector<40x32xbf16>
    %c0_17 = arith.constant 0 : index
    %c0_18 = arith.constant 0 : index
    %42 = vector.load %arg14[%c0_17, %c0_18] : memref<40x32xbf16, #tpu.memory_space<vmem>>, vector<40x32xbf16>
    tpu.vector_store %arg14[%c0_17, %c0_18], %41 {strides = array<i32>} : memref<40x32xbf16, #tpu.memory_space<vmem>>, vector<40x32xbf16>,
    %cst_19 = arith.constant dense<0.000000e+00> : vector<40xf32>
    %43 = vector.multi_reduction <add>, %40, %cst_19 [1] : vector<40x32xf32> to vector<40xf32>
    %44 = vector.shape_cast %43 : vector<40xf32> to vector<40x1xf32>
    %cst_20 = arith.constant 3.200000e+01 : f32
    %45 = vector.broadcast %cst_20 : f32 to vector<40x1xf32>
    %46 = arith.divf %44, %45 : vector<40x1xf32>
    %47 = vector.broadcast %46 : vector<40x1xf32> to vector<40x32xf32>
    %48 = arith.subf %40, %47 : vector<40x32xf32>
    %49 = arith.mulf %48, %48 : vector<40x32xf32>
    %cst_21 = arith.constant dense<0.000000e+00> : vector<40xf32>
    %50 = vector.multi_reduction <add>, %49, %cst_21 [1] : vector<40x32xf32> to vector<40xf32>
    %51 = vector.shape_cast %50 : vector<40xf32> to vector<40x1xf32>
    %cst_22 = arith.constant 3.200000e+01 : f32
    %52 = vector.broadcast %cst_22 : f32 to vector<40x1xf32>
    %53 = arith.divf %51, %52 : vector<40x1xf32>
    %54 = vector.broadcast %46 : vector<40x1xf32> to vector<40x32xf32>
    %55 = arith.subf %40, %54 : vector<40x32xf32>
    %cst_23 = arith.constant 9.99999997E-7 : f32
    %56 = vector.broadcast %cst_23 : f32 to vector<40x1xf32>
    %57 = arith.addf %53, %56 : vector<40x1xf32>
    %58 = math.rsqrt %57 : vector<40x1xf32>
    %59 = vector.broadcast %58 : vector<40x1xf32> to vector<40x32xf32>
    %60 = arith.mulf %55, %59 : vector<40x32xf32>
    %c0_24 = arith.constant 0 : index
    %c0_25 = arith.constant 0 : index
    %61 = vector.load %arg7[%c0_24, %c0_25] : memref<1x32xf32, #tpu.memory_space<vmem>>, vector<1x32xf32>
    %62 = vector.broadcast %61 : vector<1x32xf32> to vector<40x32xf32>
    %63 = arith.mulf %60, %62 : vector<40x32xf32>
    %c0_26 = arith.constant 0 : index
    %c0_27 = arith.constant 0 : index
    %64 = vector.load %arg8[%c0_26, %c0_27] : memref<1x32xf32, #tpu.memory_space<vmem>>, vector<1x32xf32>
    %65 = vector.broadcast %64 : vector<1x32xf32> to vector<40x32xf32>
    %66 = arith.addf %63, %65 : vector<40x32xf32>
    %67 = arith.truncf %66 : vector<40x32xf32> to vector<40x32xbf16>
    %c0_28 = arith.constant 0 : index
    %c0_29 = arith.constant 0 : index
    %68 = vector.load %arg9[%c0_28, %c0_29] : memref<32x96xbf16, #tpu.memory_space<vmem>>, vector<32x96xbf16>
    %cst_30 = arith.constant dense<0.000000e+00> : vector<40x96xf32>
    %69 = tpu.matmul %67, %68, %cst_30 {dimension_numbers = #tpu.dot_dimension_numbers<[1], [0], [0], [1], [0, 0, 1, 1], [], []>} : vector<40x32xbf16>, vector<32x96xbf16>, vector<40x96xf32> -> vector<40x96xf32>
    %c0_31 = arith.constant 0 : index
    %c0_32 = arith.constant 0 : index
    %70 = vector.load %arg10[%c0_31, %c0_32] : memref<1x96xf32, #tpu.memory_space<vmem>>, vector<1x96xf32>
    %71 = vector.broadcast %70 : vector<1x96xf32> to vector<40x96xf32>
    %72 = arith.addf %69, %71 : vector<40x96xf32>
    %73 = vector.extract_strided_slice %72 {offsets = [0, 0], sizes = [40, 32], strides = [1, 1]} : vector<40x96xf32> to vector<40x32xf32>
    %74 = arith.truncf %73 : vector<40x32xf32> to vector<40x32xbf16>
    %c0_33 = arith.constant 0 : index
    %c0_34 = arith.constant 0 : index
    %75 = vector.load %arg11[%c0_33, %c0_34] : memref<40x32xbf16, #tpu.memory_space<vmem>>, vector<40x32xbf16>
    tpu.vector_store %arg11[%c0_33, %c0_34], %74 {strides = array<i32>} : memref<40x32xbf16, #tpu.memory_space<vmem>>, vector<40x32xbf16>,
    %76 = vector.extract_strided_slice %72 {offsets = [0, 32], sizes = [40, 32], strides = [1, 1]} : vector<40x96xf32> to vector<40x32xf32>
    %77 = arith.truncf %76 : vector<40x32xf32> to vector<40x32xbf16>
    %c0_35 = arith.constant 0 : index
    %c0_36 = arith.constant 0 : index
    %78 = vector.load %arg12[%c0_35, %c0_36] : memref<40x32xbf16, #tpu.memory_space<vmem>>, vector<40x32xbf16>
    tpu.vector_store %arg12[%c0_35, %c0_36], %77 {strides = array<i32>} : memref<40x32xbf16, #tpu.memory_space<vmem>>, vector<40x32xbf16>,
    %79 = vector.extract_strided_slice %72 {offsets = [0, 64], sizes = [40, 32], strides = [1, 1]} : vector<40x96xf32> to vector<40x32xf32>
    %80 = arith.truncf %79 : vector<40x32xf32> to vector<40x32xbf16>
    %c0_37 = arith.constant 0 : index
    %c0_38 = arith.constant 0 : index
    %81 = vector.load %arg13[%c0_37, %c0_38] : memref<40x32xbf16, #tpu.memory_space<vmem>>, vector<40x32xbf16>
    tpu.vector_store %arg13[%c0_37, %c0_38], %80 {strides = array<i32>} : memref<40x32xbf16, #tpu.memory_space<vmem>>, vector<40x32xbf16>,
    return
  }
  func.func @transform_0(%arg0: i32) -> (i32, i32) {
    %c0_i32 = arith.constant 0 : i32
    %c0_i32_0 = arith.constant 0 : i32
    return %arg0, %c0_i32 : i32, i32
  }
  func.func @transform_1(%arg0: i32) -> (i32, i32) {
    %c0_i32 = arith.constant 0 : i32
    %c0_i32_0 = arith.constant 0 : i32
    return %arg0, %c0_i32 : i32, i32
  }
  func.func @transform_2(%arg0: i32) -> (i32, i32) {
    %c0_i32 = arith.constant 0 : i32
    %c0_i32_0 = arith.constant 0 : i32
    return %arg0, %c0_i32 : i32, i32
  }
  func.func @transform_3(%arg0: i32) -> i32 {
    %c0_i32 = arith.constant 0 : i32
    %c0_i32_0 = arith.constant 0 : i32
    return %c0_i32 : i32
  }
  func.func @transform_4(%arg0: i32) -> (i32, i32) {
    %c0_i32 = arith.constant 0 : i32
    %c0_i32_0 = arith.constant 0 : i32
    %c0_i32_1 = arith.constant 0 : i32
    return %c0_i32, %c0_i32_0 : i32, i32
  }
  func.func @transform_5(%arg0: i32) -> (i32, i32) {
    %c0_i32 = arith.constant 0 : i32
    %c0_i32_0 = arith.constant 0 : i32
    %c0_i32_1 = arith.constant 0 : i32
    return %c0_i32, %c0_i32_0 : i32, i32
  }
  func.func @transform_6(%arg0: i32) -> (i32, i32) {
    %c0_i32 = arith.constant 0 : i32
    %c0_i32_0 = arith.constant 0 : i32
    %c0_i32_1 = arith.constant 0 : i32
    return %c0_i32, %c0_i32_0 : i32, i32
  }
  func.func @transform_7(%arg0: i32) -> (i32, i32) {
    %c0_i32 = arith.constant 0 : i32
    %c0_i32_0 = arith.constant 0 : i32
    %c0_i32_1 = arith.constant 0 : i32
    return %c0_i32, %c0_i32_0 : i32, i32
  }
  func.func @transform_8(%arg0: i32) -> (i32, i32) {
    %c0_i32 = arith.constant 0 : i32
    %c0_i32_0 = arith.constant 0 : i32
    %c0_i32_1 = arith.constant 0 : i32
    return %c0_i32, %c0_i32_0 : i32, i32
  }
  func.func @transform_9(%arg0: i32) -> (i32, i32) {
    %c0_i32 = arith.constant 0 : i32
    %c0_i32_0 = arith.constant 0 : i32
    %c0_i32_1 = arith.constant 0 : i32
    return %c0_i32, %c0_i32_0 : i32, i32
  }
  func.func @transform_10(%arg0: i32) -> (i32, i32) {
    %c0_i32 = arith.constant 0 : i32
    %c0_i32_0 = arith.constant 0 : i32
    return %arg0, %c0_i32 : i32, i32
  }
  func.func @transform_11(%arg0: i32) -> (i32, i32) {
    %c0_i32 = arith.constant 0 : i32
    %c0_i32_0 = arith.constant 0 : i32
    return %arg0, %c0_i32 : i32, i32
  }
  func.func @transform_12(%arg0: i32) -> (i32, i32) {
    %c0_i32 = arith.constant 0 : i32
    %c0_i32_0 = arith.constant 0 : i32
    return %arg0, %c0_i32 : i32, i32
  }
  func.func @transform_13(%arg0: i32) -> (i32, i32) {
    %c0_i32 = arith.constant 0 : i32
    %c0_i32_0 = arith.constant 0 : i32
    return %arg0, %c0_i32 : i32, i32
  }
  func.func @transform_14(%arg0: i32) -> (i32, i32) {
    %c0_i32 = arith.constant 0 : i32
    %c0_i32_0 = arith.constant 0 : i32
    return %arg0, %c0_i32 : i32, i32
  }
}

module attributes {stable_mosaic.version = 11 : i64} {
  func.func @_attention_kernel(%arg0: i32, %arg1: i32, %arg2: memref<1x20x32xbf16, #tpu.memory_space<vmem>>, %arg3: memref<1x20x32xbf16, #tpu.memory_space<vmem>>, %arg4: memref<1x20x32xbf16, #tpu.memory_space<vmem>>, %arg5: memref<1x20x32xbf16, #tpu.memory_space<vmem>>) attributes {dimension_semantics = [#tpu.dimension_semantics<parallel>, #tpu.dimension_semantics<parallel>], iteration_bounds = array<i64: 2, 1>, scalar_prefetch = 0 : i64, scratch_operands = 0 : i64, tpu.core_type = #tpu.core_type<tc>, window_params = [{transform_indices = @transform_0, window_bounds = array<i64: 1, 20, 32>}, {transform_indices = @transform_1, window_bounds = array<i64: 1, 20, 32>}, {transform_indices = @transform_2, window_bounds = array<i64: 1, 20, 32>}, {transform_indices = @transform_3, window_bounds = array<i64: 1, 20, 32>}]} {
    %c0 = arith.constant 0 : index
    %c0_0 = arith.constant 0 : index
    %c0_1 = arith.constant 0 : index
    %0 = vector.load %arg2[%c0, %c0_0, %c0_1] : memref<1x20x32xbf16, #tpu.memory_space<vmem>>, vector<1x20x8xbf16>
    %1 = vector.shape_cast %0 : vector<1x20x8xbf16> to vector<20x8xbf16>
    %c0_2 = arith.constant 0 : index
    %c0_3 = arith.constant 0 : index
    %c0_4 = arith.constant 0 : index
    %2 = vector.load %arg3[%c0_2, %c0_3, %c0_4] : memref<1x20x32xbf16, #tpu.memory_space<vmem>>, vector<1x20x8xbf16>
    %3 = vector.shape_cast %2 : vector<1x20x8xbf16> to vector<20x8xbf16>
    %c0_5 = arith.constant 0 : index
    %c0_6 = arith.constant 0 : index
    %c0_7 = arith.constant 0 : index
    %4 = vector.load %arg4[%c0_5, %c0_6, %c0_7] : memref<1x20x32xbf16, #tpu.memory_space<vmem>>, vector<1x20x8xbf16>
    %5 = vector.shape_cast %4 : vector<1x20x8xbf16> to vector<20x8xbf16>
    %cst = arith.constant dense<0.000000e+00> : vector<20x20xf32>
    %6 = tpu.matmul %1, %3, %cst {dimension_numbers = #tpu.dot_dimension_numbers<[1], [1], [0], [0], [0, 0, 1, 0], [], []>} : vector<20x8xbf16>, vector<20x8xbf16>, vector<20x20xf32> -> vector<20x20xf32>
    %cst_8 = arith.constant 0.353553385 : f32
    %7 = vector.broadcast %cst_8 : f32 to vector<20x20xf32>
    %8 = arith.mulf %6, %7 : vector<20x20xf32>
    %cst_9 = arith.constant dense<0xFF800000> : vector<20xf32>
    %9 = vector.multi_reduction <maximumf>, %8, %cst_9 [1] : vector<20x20xf32> to vector<20xf32>
    %10 = vector.shape_cast %9 : vector<20xf32> to vector<20x1xf32>
    %11 = vector.broadcast %10 : vector<20x1xf32> to vector<20x20xf32>
    %12 = arith.subf %8, %11 : vector<20x20xf32>
    %13 = math.exp %12 : vector<20x20xf32>
    %cst_10 = arith.constant dense<0.000000e+00> : vector<20xf32>
    %14 = vector.multi_reduction <add>, %13, %cst_10 [1] : vector<20x20xf32> to vector<20xf32>
    %15 = vector.shape_cast %14 : vector<20xf32> to vector<20x1xf32>
    %16 = tpu.reciprocal %15 {approx = true} : vector<20x1xf32> -> vector<20x1xf32>
    %17 = vector.broadcast %16 : vector<20x1xf32> to vector<20x20xf32>
    %18 = arith.mulf %13, %17 : vector<20x20xf32>
    %19 = arith.truncf %18 : vector<20x20xf32> to vector<20x20xbf16>
    %cst_11 = arith.constant dense<0.000000e+00> : vector<20x8xf32>
    %20 = tpu.matmul %19, %5, %cst_11 {dimension_numbers = #tpu.dot_dimension_numbers<[1], [0], [0], [1], [0, 0, 1, 1], [], []>} : vector<20x20xbf16>, vector<20x8xbf16>, vector<20x8xf32> -> vector<20x8xf32>
    %21 = arith.truncf %20 : vector<20x8xf32> to vector<20x8xbf16>
    %c0_12 = arith.constant 0 : index
    %c0_13 = arith.constant 0 : index
    %c0_14 = arith.constant 0 : index
    %22 = vector.load %arg5[%c0_12, %c0_13, %c0_14] : memref<1x20x32xbf16, #tpu.memory_space<vmem>>, vector<1x20x8xbf16>
    %23 = vector.shape_cast %22 : vector<1x20x8xbf16> to vector<20x8xbf16>
    %24 = vector.shape_cast %21 : vector<20x8xbf16> to vector<1x20x8xbf16>
    tpu.vector_store %arg5[%c0_12, %c0_13, %c0_14], %24 {strides = array<i32>} : memref<1x20x32xbf16, #tpu.memory_space<vmem>>, vector<1x20x8xbf16>,
    %c0_15 = arith.constant 0 : index
    %c0_16 = arith.constant 0 : index
    %c8 = arith.constant 8 : index
    %25 = vector.load %arg2[%c0_15, %c0_16, %c8] : memref<1x20x32xbf16, #tpu.memory_space<vmem>>, vector<1x20x8xbf16>
    %26 = vector.shape_cast %25 : vector<1x20x8xbf16> to vector<20x8xbf16>
    %c0_17 = arith.constant 0 : index
    %c0_18 = arith.constant 0 : index
    %c8_19 = arith.constant 8 : index
    %27 = vector.load %arg3[%c0_17, %c0_18, %c8_19] : memref<1x20x32xbf16, #tpu.memory_space<vmem>>, vector<1x20x8xbf16>
    %28 = vector.shape_cast %27 : vector<1x20x8xbf16> to vector<20x8xbf16>
    %c0_20 = arith.constant 0 : index
    %c0_21 = arith.constant 0 : index
    %c8_22 = arith.constant 8 : index
    %29 = vector.load %arg4[%c0_20, %c0_21, %c8_22] : memref<1x20x32xbf16, #tpu.memory_space<vmem>>, vector<1x20x8xbf16>
    %30 = vector.shape_cast %29 : vector<1x20x8xbf16> to vector<20x8xbf16>
    %cst_23 = arith.constant dense<0.000000e+00> : vector<20x20xf32>
    %31 = tpu.matmul %26, %28, %cst_23 {dimension_numbers = #tpu.dot_dimension_numbers<[1], [1], [0], [0], [0, 0, 1, 0], [], []>} : vector<20x8xbf16>, vector<20x8xbf16>, vector<20x20xf32> -> vector<20x20xf32>
    %cst_24 = arith.constant 0.353553385 : f32
    %32 = vector.broadcast %cst_24 : f32 to vector<20x20xf32>
    %33 = arith.mulf %31, %32 : vector<20x20xf32>
    %cst_25 = arith.constant dense<0xFF800000> : vector<20xf32>
    %34 = vector.multi_reduction <maximumf>, %33, %cst_25 [1] : vector<20x20xf32> to vector<20xf32>
    %35 = vector.shape_cast %34 : vector<20xf32> to vector<20x1xf32>
    %36 = vector.broadcast %35 : vector<20x1xf32> to vector<20x20xf32>
    %37 = arith.subf %33, %36 : vector<20x20xf32>
    %38 = math.exp %37 : vector<20x20xf32>
    %cst_26 = arith.constant dense<0.000000e+00> : vector<20xf32>
    %39 = vector.multi_reduction <add>, %38, %cst_26 [1] : vector<20x20xf32> to vector<20xf32>
    %40 = vector.shape_cast %39 : vector<20xf32> to vector<20x1xf32>
    %41 = tpu.reciprocal %40 {approx = true} : vector<20x1xf32> -> vector<20x1xf32>
    %42 = vector.broadcast %41 : vector<20x1xf32> to vector<20x20xf32>
    %43 = arith.mulf %38, %42 : vector<20x20xf32>
    %44 = arith.truncf %43 : vector<20x20xf32> to vector<20x20xbf16>
    %cst_27 = arith.constant dense<0.000000e+00> : vector<20x8xf32>
    %45 = tpu.matmul %44, %30, %cst_27 {dimension_numbers = #tpu.dot_dimension_numbers<[1], [0], [0], [1], [0, 0, 1, 1], [], []>} : vector<20x20xbf16>, vector<20x8xbf16>, vector<20x8xf32> -> vector<20x8xf32>
    %46 = arith.truncf %45 : vector<20x8xf32> to vector<20x8xbf16>
    %c0_28 = arith.constant 0 : index
    %c0_29 = arith.constant 0 : index
    %c8_30 = arith.constant 8 : index
    %47 = vector.load %arg5[%c0_28, %c0_29, %c8_30] : memref<1x20x32xbf16, #tpu.memory_space<vmem>>, vector<1x20x8xbf16>
    %48 = vector.shape_cast %47 : vector<1x20x8xbf16> to vector<20x8xbf16>
    %49 = vector.shape_cast %46 : vector<20x8xbf16> to vector<1x20x8xbf16>
    tpu.vector_store %arg5[%c0_28, %c0_29, %c8_30], %49 {strides = array<i32>} : memref<1x20x32xbf16, #tpu.memory_space<vmem>>, vector<1x20x8xbf16>,
    %c0_31 = arith.constant 0 : index
    %c0_32 = arith.constant 0 : index
    %c16 = arith.constant 16 : index
    %50 = vector.load %arg2[%c0_31, %c0_32, %c16] : memref<1x20x32xbf16, #tpu.memory_space<vmem>>, vector<1x20x8xbf16>
    %51 = vector.shape_cast %50 : vector<1x20x8xbf16> to vector<20x8xbf16>
    %c0_33 = arith.constant 0 : index
    %c0_34 = arith.constant 0 : index
    %c16_35 = arith.constant 16 : index
    %52 = vector.load %arg3[%c0_33, %c0_34, %c16_35] : memref<1x20x32xbf16, #tpu.memory_space<vmem>>, vector<1x20x8xbf16>
    %53 = vector.shape_cast %52 : vector<1x20x8xbf16> to vector<20x8xbf16>
    %c0_36 = arith.constant 0 : index
    %c0_37 = arith.constant 0 : index
    %c16_38 = arith.constant 16 : index
    %54 = vector.load %arg4[%c0_36, %c0_37, %c16_38] : memref<1x20x32xbf16, #tpu.memory_space<vmem>>, vector<1x20x8xbf16>
    %55 = vector.shape_cast %54 : vector<1x20x8xbf16> to vector<20x8xbf16>
    %cst_39 = arith.constant dense<0.000000e+00> : vector<20x20xf32>
    %56 = tpu.matmul %51, %53, %cst_39 {dimension_numbers = #tpu.dot_dimension_numbers<[1], [1], [0], [0], [0, 0, 1, 0], [], []>} : vector<20x8xbf16>, vector<20x8xbf16>, vector<20x20xf32> -> vector<20x20xf32>
    %cst_40 = arith.constant 0.353553385 : f32
    %57 = vector.broadcast %cst_40 : f32 to vector<20x20xf32>
    %58 = arith.mulf %56, %57 : vector<20x20xf32>
    %cst_41 = arith.constant dense<0xFF800000> : vector<20xf32>
    %59 = vector.multi_reduction <maximumf>, %58, %cst_41 [1] : vector<20x20xf32> to vector<20xf32>
    %60 = vector.shape_cast %59 : vector<20xf32> to vector<20x1xf32>
    %61 = vector.broadcast %60 : vector<20x1xf32> to vector<20x20xf32>
    %62 = arith.subf %58, %61 : vector<20x20xf32>
    %63 = math.exp %62 : vector<20x20xf32>
    %cst_42 = arith.constant dense<0.000000e+00> : vector<20xf32>
    %64 = vector.multi_reduction <add>, %63, %cst_42 [1] : vector<20x20xf32> to vector<20xf32>
    %65 = vector.shape_cast %64 : vector<20xf32> to vector<20x1xf32>
    %66 = tpu.reciprocal %65 {approx = true} : vector<20x1xf32> -> vector<20x1xf32>
    %67 = vector.broadcast %66 : vector<20x1xf32> to vector<20x20xf32>
    %68 = arith.mulf %63, %67 : vector<20x20xf32>
    %69 = arith.truncf %68 : vector<20x20xf32> to vector<20x20xbf16>
    %cst_43 = arith.constant dense<0.000000e+00> : vector<20x8xf32>
    %70 = tpu.matmul %69, %55, %cst_43 {dimension_numbers = #tpu.dot_dimension_numbers<[1], [0], [0], [1], [0, 0, 1, 1], [], []>} : vector<20x20xbf16>, vector<20x8xbf16>, vector<20x8xf32> -> vector<20x8xf32>
    %71 = arith.truncf %70 : vector<20x8xf32> to vector<20x8xbf16>
    %c0_44 = arith.constant 0 : index
    %c0_45 = arith.constant 0 : index
    %c16_46 = arith.constant 16 : index
    %72 = vector.load %arg5[%c0_44, %c0_45, %c16_46] : memref<1x20x32xbf16, #tpu.memory_space<vmem>>, vector<1x20x8xbf16>
    %73 = vector.shape_cast %72 : vector<1x20x8xbf16> to vector<20x8xbf16>
    %74 = vector.shape_cast %71 : vector<20x8xbf16> to vector<1x20x8xbf16>
    tpu.vector_store %arg5[%c0_44, %c0_45, %c16_46], %74 {strides = array<i32>} : memref<1x20x32xbf16, #tpu.memory_space<vmem>>, vector<1x20x8xbf16>,
    %c0_47 = arith.constant 0 : index
    %c0_48 = arith.constant 0 : index
    %c24 = arith.constant 24 : index
    %75 = vector.load %arg2[%c0_47, %c0_48, %c24] : memref<1x20x32xbf16, #tpu.memory_space<vmem>>, vector<1x20x8xbf16>
    %76 = vector.shape_cast %75 : vector<1x20x8xbf16> to vector<20x8xbf16>
    %c0_49 = arith.constant 0 : index
    %c0_50 = arith.constant 0 : index
    %c24_51 = arith.constant 24 : index
    %77 = vector.load %arg3[%c0_49, %c0_50, %c24_51] : memref<1x20x32xbf16, #tpu.memory_space<vmem>>, vector<1x20x8xbf16>
    %78 = vector.shape_cast %77 : vector<1x20x8xbf16> to vector<20x8xbf16>
    %c0_52 = arith.constant 0 : index
    %c0_53 = arith.constant 0 : index
    %c24_54 = arith.constant 24 : index
    %79 = vector.load %arg4[%c0_52, %c0_53, %c24_54] : memref<1x20x32xbf16, #tpu.memory_space<vmem>>, vector<1x20x8xbf16>
    %80 = vector.shape_cast %79 : vector<1x20x8xbf16> to vector<20x8xbf16>
    %cst_55 = arith.constant dense<0.000000e+00> : vector<20x20xf32>
    %81 = tpu.matmul %76, %78, %cst_55 {dimension_numbers = #tpu.dot_dimension_numbers<[1], [1], [0], [0], [0, 0, 1, 0], [], []>} : vector<20x8xbf16>, vector<20x8xbf16>, vector<20x20xf32> -> vector<20x20xf32>
    %cst_56 = arith.constant 0.353553385 : f32
    %82 = vector.broadcast %cst_56 : f32 to vector<20x20xf32>
    %83 = arith.mulf %81, %82 : vector<20x20xf32>
    %cst_57 = arith.constant dense<0xFF800000> : vector<20xf32>
    %84 = vector.multi_reduction <maximumf>, %83, %cst_57 [1] : vector<20x20xf32> to vector<20xf32>
    %85 = vector.shape_cast %84 : vector<20xf32> to vector<20x1xf32>
    %86 = vector.broadcast %85 : vector<20x1xf32> to vector<20x20xf32>
    %87 = arith.subf %83, %86 : vector<20x20xf32>
    %88 = math.exp %87 : vector<20x20xf32>
    %cst_58 = arith.constant dense<0.000000e+00> : vector<20xf32>
    %89 = vector.multi_reduction <add>, %88, %cst_58 [1] : vector<20x20xf32> to vector<20xf32>
    %90 = vector.shape_cast %89 : vector<20xf32> to vector<20x1xf32>
    %91 = tpu.reciprocal %90 {approx = true} : vector<20x1xf32> -> vector<20x1xf32>
    %92 = vector.broadcast %91 : vector<20x1xf32> to vector<20x20xf32>
    %93 = arith.mulf %88, %92 : vector<20x20xf32>
    %94 = arith.truncf %93 : vector<20x20xf32> to vector<20x20xbf16>
    %cst_59 = arith.constant dense<0.000000e+00> : vector<20x8xf32>
    %95 = tpu.matmul %94, %80, %cst_59 {dimension_numbers = #tpu.dot_dimension_numbers<[1], [0], [0], [1], [0, 0, 1, 1], [], []>} : vector<20x20xbf16>, vector<20x8xbf16>, vector<20x8xf32> -> vector<20x8xf32>
    %96 = arith.truncf %95 : vector<20x8xf32> to vector<20x8xbf16>
    %c0_60 = arith.constant 0 : index
    %c0_61 = arith.constant 0 : index
    %c24_62 = arith.constant 24 : index
    %97 = vector.load %arg5[%c0_60, %c0_61, %c24_62] : memref<1x20x32xbf16, #tpu.memory_space<vmem>>, vector<1x20x8xbf16>
    %98 = vector.shape_cast %97 : vector<1x20x8xbf16> to vector<20x8xbf16>
    %99 = vector.shape_cast %96 : vector<20x8xbf16> to vector<1x20x8xbf16>
    tpu.vector_store %arg5[%c0_60, %c0_61, %c24_62], %99 {strides = array<i32>} : memref<1x20x32xbf16, #tpu.memory_space<vmem>>, vector<1x20x8xbf16>,
    return
  }
  func.func @transform_0(%arg0: i32, %arg1: i32) -> (i32, i32, i32) {
    %c0_i32 = arith.constant 0 : i32
    %c0_i32_0 = arith.constant 0 : i32
    return %arg0, %c0_i32, %arg1 : i32, i32, i32
  }
  func.func @transform_1(%arg0: i32, %arg1: i32) -> (i32, i32, i32) {
    %c0_i32 = arith.constant 0 : i32
    %c0_i32_0 = arith.constant 0 : i32
    return %arg0, %c0_i32, %arg1 : i32, i32, i32
  }
  func.func @transform_2(%arg0: i32, %arg1: i32) -> (i32, i32, i32) {
    %c0_i32 = arith.constant 0 : i32
    %c0_i32_0 = arith.constant 0 : i32
    return %arg0, %c0_i32, %arg1 : i32, i32, i32
  }
  func.func @transform_3(%arg0: i32, %arg1: i32) -> (i32, i32, i32) {
    %c0_i32 = arith.constant 0 : i32
    %c0_i32_0 = arith.constant 0 : i32
    return %arg0, %c0_i32, %arg1 : i32, i32, i32
  }
}

module attributes {stable_mosaic.version = 11 : i64} {
  func.func @_matmul_res_kernel(%arg0: i32, %arg1: memref<40x32xbf16, #tpu.memory_space<vmem>>, %arg2: memref<32x32xbf16, #tpu.memory_space<vmem>>, %arg3: memref<1x32xf32, #tpu.memory_space<vmem>>, %arg4: memref<40x32xbf16, #tpu.memory_space<vmem>>, %arg5: memref<40x32xbf16, #tpu.memory_space<vmem>>) attributes {dimension_semantics = [#tpu.dimension_semantics<parallel>], iteration_bounds = array<i64: 1>, scalar_prefetch = 0 : i64, scratch_operands = 0 : i64, tpu.core_type = #tpu.core_type<tc>, window_params = [{transform_indices = @transform_0, window_bounds = array<i64: 40, 32>}, {pipeline_mode = #tpu.pipeline_mode<synchronous>, transform_indices = @transform_1, window_bounds = array<i64: 32, 32>}, {pipeline_mode = #tpu.pipeline_mode<synchronous>, transform_indices = @transform_2, window_bounds = array<i64: 1, 32>}, {transform_indices = @transform_3, window_bounds = array<i64: 40, 32>}, {transform_indices = @transform_4, window_bounds = array<i64: 40, 32>}]} {
    %c0 = arith.constant 0 : index
    %c0_0 = arith.constant 0 : index
    %0 = vector.load %arg1[%c0, %c0_0] : memref<40x32xbf16, #tpu.memory_space<vmem>>, vector<40x32xbf16>
    %c0_1 = arith.constant 0 : index
    %c0_2 = arith.constant 0 : index
    %1 = vector.load %arg2[%c0_1, %c0_2] : memref<32x32xbf16, #tpu.memory_space<vmem>>, vector<32x32xbf16>
    %cst = arith.constant dense<0.000000e+00> : vector<40x32xf32>
    %2 = tpu.matmul %0, %1, %cst {dimension_numbers = #tpu.dot_dimension_numbers<[1], [0], [0], [1], [0, 0, 1, 1], [], []>} : vector<40x32xbf16>, vector<32x32xbf16>, vector<40x32xf32> -> vector<40x32xf32>
    %c0_3 = arith.constant 0 : index
    %c0_4 = arith.constant 0 : index
    %3 = vector.load %arg3[%c0_3, %c0_4] : memref<1x32xf32, #tpu.memory_space<vmem>>, vector<1x32xf32>
    %4 = vector.broadcast %3 : vector<1x32xf32> to vector<40x32xf32>
    %5 = arith.addf %2, %4 : vector<40x32xf32>
    %c0_5 = arith.constant 0 : index
    %c0_6 = arith.constant 0 : index
    %6 = vector.load %arg4[%c0_5, %c0_6] : memref<40x32xbf16, #tpu.memory_space<vmem>>, vector<40x32xbf16>
    %7 = arith.extf %6 : vector<40x32xbf16> to vector<40x32xf32>
    %8 = arith.addf %5, %7 : vector<40x32xf32>
    %9 = arith.truncf %8 : vector<40x32xf32> to vector<40x32xbf16>
    %c0_7 = arith.constant 0 : index
    %c0_8 = arith.constant 0 : index
    %10 = vector.load %arg5[%c0_7, %c0_8] : memref<40x32xbf16, #tpu.memory_space<vmem>>, vector<40x32xbf16>
    tpu.vector_store %arg5[%c0_7, %c0_8], %9 {strides = array<i32>} : memref<40x32xbf16, #tpu.memory_space<vmem>>, vector<40x32xbf16>,
    return
  }
  func.func @transform_0(%arg0: i32) -> (i32, i32) {
    %c0_i32 = arith.constant 0 : i32
    %c0_i32_0 = arith.constant 0 : i32
    return %arg0, %c0_i32 : i32, i32
  }
  func.func @transform_1(%arg0: i32) -> (i32, i32) {
    %c0_i32 = arith.constant 0 : i32
    %c0_i32_0 = arith.constant 0 : i32
    %c0_i32_1 = arith.constant 0 : i32
    return %c0_i32, %c0_i32_0 : i32, i32
  }
  func.func @transform_2(%arg0: i32) -> (i32, i32) {
    %c0_i32 = arith.constant 0 : i32
    %c0_i32_0 = arith.constant 0 : i32
    %c0_i32_1 = arith.constant 0 : i32
    return %c0_i32, %c0_i32_0 : i32, i32
  }
  func.func @transform_3(%arg0: i32) -> (i32, i32) {
    %c0_i32 = arith.constant 0 : i32
    %c0_i32_0 = arith.constant 0 : i32
    return %arg0, %c0_i32 : i32, i32
  }
  func.func @transform_4(%arg0: i32) -> (i32, i32) {
    %c0_i32 = arith.constant 0 : i32
    %c0_i32_0 = arith.constant 0 : i32
    return %arg0, %c0_i32 : i32, i32
  }
}

module attributes {stable_mosaic.version = 11 : i64} {
  func.func @_ln_matmul_kernel(%arg0: i32, %arg1: memref<40x32xbf16, #tpu.memory_space<vmem>>, %arg2: memref<1x32xf32, #tpu.memory_space<vmem>>, %arg3: memref<1x32xf32, #tpu.memory_space<vmem>>, %arg4: memref<32x128xbf16, #tpu.memory_space<vmem>>, %arg5: memref<1x128xf32, #tpu.memory_space<vmem>>, %arg6: memref<40x128xbf16, #tpu.memory_space<vmem>>) attributes {dimension_semantics = [#tpu.dimension_semantics<parallel>], iteration_bounds = array<i64: 1>, scalar_prefetch = 0 : i64, scratch_operands = 0 : i64, tpu.core_type = #tpu.core_type<tc>, window_params = [{transform_indices = @transform_0, window_bounds = array<i64: 40, 32>}, {pipeline_mode = #tpu.pipeline_mode<synchronous>, transform_indices = @transform_1, window_bounds = array<i64: 1, 32>}, {pipeline_mode = #tpu.pipeline_mode<synchronous>, transform_indices = @transform_2, window_bounds = array<i64: 1, 32>}, {pipeline_mode = #tpu.pipeline_mode<synchronous>, transform_indices = @transform_3, window_bounds = array<i64: 32, 128>}, {pipeline_mode = #tpu.pipeline_mode<synchronous>, transform_indices = @transform_4, window_bounds = array<i64: 1, 128>}, {transform_indices = @transform_5, window_bounds = array<i64: 40, 128>}]} {
    %c0 = arith.constant 0 : index
    %c0_0 = arith.constant 0 : index
    %0 = vector.load %arg1[%c0, %c0_0] : memref<40x32xbf16, #tpu.memory_space<vmem>>, vector<40x32xbf16>
    %1 = arith.extf %0 : vector<40x32xbf16> to vector<40x32xf32>
    %cst = arith.constant dense<0.000000e+00> : vector<40xf32>
    %2 = vector.multi_reduction <add>, %1, %cst [1] : vector<40x32xf32> to vector<40xf32>
    %3 = vector.shape_cast %2 : vector<40xf32> to vector<40x1xf32>
    %cst_1 = arith.constant 3.200000e+01 : f32
    %4 = vector.broadcast %cst_1 : f32 to vector<40x1xf32>
    %5 = arith.divf %3, %4 : vector<40x1xf32>
    %6 = vector.broadcast %5 : vector<40x1xf32> to vector<40x32xf32>
    %7 = arith.subf %1, %6 : vector<40x32xf32>
    %8 = arith.mulf %7, %7 : vector<40x32xf32>
    %cst_2 = arith.constant dense<0.000000e+00> : vector<40xf32>
    %9 = vector.multi_reduction <add>, %8, %cst_2 [1] : vector<40x32xf32> to vector<40xf32>
    %10 = vector.shape_cast %9 : vector<40xf32> to vector<40x1xf32>
    %cst_3 = arith.constant 3.200000e+01 : f32
    %11 = vector.broadcast %cst_3 : f32 to vector<40x1xf32>
    %12 = arith.divf %10, %11 : vector<40x1xf32>
    %13 = vector.broadcast %5 : vector<40x1xf32> to vector<40x32xf32>
    %14 = arith.subf %1, %13 : vector<40x32xf32>
    %cst_4 = arith.constant 9.99999997E-7 : f32
    %15 = vector.broadcast %cst_4 : f32 to vector<40x1xf32>
    %16 = arith.addf %12, %15 : vector<40x1xf32>
    %17 = math.rsqrt %16 : vector<40x1xf32>
    %18 = vector.broadcast %17 : vector<40x1xf32> to vector<40x32xf32>
    %19 = arith.mulf %14, %18 : vector<40x32xf32>
    %c0_5 = arith.constant 0 : index
    %c0_6 = arith.constant 0 : index
    %20 = vector.load %arg2[%c0_5, %c0_6] : memref<1x32xf32, #tpu.memory_space<vmem>>, vector<1x32xf32>
    %21 = vector.broadcast %20 : vector<1x32xf32> to vector<40x32xf32>
    %22 = arith.mulf %19, %21 : vector<40x32xf32>
    %c0_7 = arith.constant 0 : index
    %c0_8 = arith.constant 0 : index
    %23 = vector.load %arg3[%c0_7, %c0_8] : memref<1x32xf32, #tpu.memory_space<vmem>>, vector<1x32xf32>
    %24 = vector.broadcast %23 : vector<1x32xf32> to vector<40x32xf32>
    %25 = arith.addf %22, %24 : vector<40x32xf32>
    %26 = arith.truncf %25 : vector<40x32xf32> to vector<40x32xbf16>
    %c0_9 = arith.constant 0 : index
    %c0_10 = arith.constant 0 : index
    %27 = vector.load %arg4[%c0_9, %c0_10] : memref<32x128xbf16, #tpu.memory_space<vmem>>, vector<32x128xbf16>
    %cst_11 = arith.constant dense<0.000000e+00> : vector<40x128xf32>
    %28 = tpu.matmul %26, %27, %cst_11 {dimension_numbers = #tpu.dot_dimension_numbers<[1], [0], [0], [1], [0, 0, 1, 1], [], []>} : vector<40x32xbf16>, vector<32x128xbf16>, vector<40x128xf32> -> vector<40x128xf32>
    %c0_12 = arith.constant 0 : index
    %c0_13 = arith.constant 0 : index
    %29 = vector.load %arg5[%c0_12, %c0_13] : memref<1x128xf32, #tpu.memory_space<vmem>>, vector<1x128xf32>
    %30 = vector.broadcast %29 : vector<1x128xf32> to vector<40x128xf32>
    %31 = arith.addf %28, %30 : vector<40x128xf32>
    %32 = arith.mulf %31, %31 : vector<40x128xf32>
    %33 = arith.mulf %31, %32 : vector<40x128xf32>
    %cst_14 = arith.constant 4.471500e-02 : f32
    %34 = vector.broadcast %cst_14 : f32 to vector<40x128xf32>
    %35 = arith.mulf %34, %33 : vector<40x128xf32>
    %36 = arith.addf %31, %35 : vector<40x128xf32>
    %cst_15 = arith.constant 0.797884583 : f32
    %37 = vector.broadcast %cst_15 : f32 to vector<40x128xf32>
    %38 = arith.mulf %37, %36 : vector<40x128xf32>
    %39 = math.tanh %38 : vector<40x128xf32>
    %cst_16 = arith.constant 1.000000e+00 : f32
    %40 = vector.broadcast %cst_16 : f32 to vector<40x128xf32>
    %41 = arith.addf %40, %39 : vector<40x128xf32>
    %cst_17 = arith.constant 5.000000e-01 : f32
    %42 = vector.broadcast %cst_17 : f32 to vector<40x128xf32>
    %43 = arith.mulf %42, %41 : vector<40x128xf32>
    %44 = arith.mulf %31, %43 : vector<40x128xf32>
    %45 = arith.truncf %44 : vector<40x128xf32> to vector<40x128xbf16>
    %c0_18 = arith.constant 0 : index
    %c0_19 = arith.constant 0 : index
    %46 = vector.load %arg6[%c0_18, %c0_19] : memref<40x128xbf16, #tpu.memory_space<vmem>>, vector<40x128xbf16>
    tpu.vector_store %arg6[%c0_18, %c0_19], %45 {strides = array<i32>} : memref<40x128xbf16, #tpu.memory_space<vmem>>, vector<40x128xbf16>,
    return
  }
  func.func @transform_0(%arg0: i32) -> (i32, i32) {
    %c0_i32 = arith.constant 0 : i32
    %c0_i32_0 = arith.constant 0 : i32
    return %arg0, %c0_i32 : i32, i32
  }
  func.func @transform_1(%arg0: i32) -> (i32, i32) {
    %c0_i32 = arith.constant 0 : i32
    %c0_i32_0 = arith.constant 0 : i32
    %c0_i32_1 = arith.constant 0 : i32
    return %c0_i32, %c0_i32_0 : i32, i32
  }
  func.func @transform_2(%arg0: i32) -> (i32, i32) {
    %c0_i32 = arith.constant 0 : i32
    %c0_i32_0 = arith.constant 0 : i32
    %c0_i32_1 = arith.constant 0 : i32
    return %c0_i32, %c0_i32_0 : i32, i32
  }
  func.func @transform_3(%arg0: i32) -> (i32, i32) {
    %c0_i32 = arith.constant 0 : i32
    %c0_i32_0 = arith.constant 0 : i32
    %c0_i32_1 = arith.constant 0 : i32
    return %c0_i32, %c0_i32_0 : i32, i32
  }
  func.func @transform_4(%arg0: i32) -> (i32, i32) {
    %c0_i32 = arith.constant 0 : i32
    %c0_i32_0 = arith.constant 0 : i32
    %c0_i32_1 = arith.constant 0 : i32
    return %c0_i32, %c0_i32_0 : i32, i32
  }
  func.func @transform_5(%arg0: i32) -> (i32, i32) {
    %c0_i32 = arith.constant 0 : i32
    %c0_i32_0 = arith.constant 0 : i32
    return %arg0, %c0_i32 : i32, i32
  }
}

module attributes {stable_mosaic.version = 11 : i64} {
  func.func @_matmul_res_kernel(%arg0: i32, %arg1: memref<40x128xbf16, #tpu.memory_space<vmem>>, %arg2: memref<128x32xbf16, #tpu.memory_space<vmem>>, %arg3: memref<1x32xf32, #tpu.memory_space<vmem>>, %arg4: memref<40x32xbf16, #tpu.memory_space<vmem>>, %arg5: memref<40x32xbf16, #tpu.memory_space<vmem>>) attributes {dimension_semantics = [#tpu.dimension_semantics<parallel>], iteration_bounds = array<i64: 1>, scalar_prefetch = 0 : i64, scratch_operands = 0 : i64, tpu.core_type = #tpu.core_type<tc>, window_params = [{transform_indices = @transform_0, window_bounds = array<i64: 40, 128>}, {pipeline_mode = #tpu.pipeline_mode<synchronous>, transform_indices = @transform_1, window_bounds = array<i64: 128, 32>}, {pipeline_mode = #tpu.pipeline_mode<synchronous>, transform_indices = @transform_2, window_bounds = array<i64: 1, 32>}, {transform_indices = @transform_3, window_bounds = array<i64: 40, 32>}, {transform_indices = @transform_4, window_bounds = array<i64: 40, 32>}]} {
    %c0 = arith.constant 0 : index
    %c0_0 = arith.constant 0 : index
    %0 = vector.load %arg1[%c0, %c0_0] : memref<40x128xbf16, #tpu.memory_space<vmem>>, vector<40x128xbf16>
    %c0_1 = arith.constant 0 : index
    %c0_2 = arith.constant 0 : index
    %1 = vector.load %arg2[%c0_1, %c0_2] : memref<128x32xbf16, #tpu.memory_space<vmem>>, vector<128x32xbf16>
    %cst = arith.constant dense<0.000000e+00> : vector<40x32xf32>
    %2 = tpu.matmul %0, %1, %cst {dimension_numbers = #tpu.dot_dimension_numbers<[1], [0], [0], [1], [0, 0, 1, 1], [], []>} : vector<40x128xbf16>, vector<128x32xbf16>, vector<40x32xf32> -> vector<40x32xf32>
    %c0_3 = arith.constant 0 : index
    %c0_4 = arith.constant 0 : index
    %3 = vector.load %arg3[%c0_3, %c0_4] : memref<1x32xf32, #tpu.memory_space<vmem>>, vector<1x32xf32>
    %4 = vector.broadcast %3 : vector<1x32xf32> to vector<40x32xf32>
    %5 = arith.addf %2, %4 : vector<40x32xf32>
    %c0_5 = arith.constant 0 : index
    %c0_6 = arith.constant 0 : index
    %6 = vector.load %arg4[%c0_5, %c0_6] : memref<40x32xbf16, #tpu.memory_space<vmem>>, vector<40x32xbf16>
    %7 = arith.extf %6 : vector<40x32xbf16> to vector<40x32xf32>
    %8 = arith.addf %5, %7 : vector<40x32xf32>
    %9 = arith.truncf %8 : vector<40x32xf32> to vector<40x32xbf16>
    %c0_7 = arith.constant 0 : index
    %c0_8 = arith.constant 0 : index
    %10 = vector.load %arg5[%c0_7, %c0_8] : memref<40x32xbf16, #tpu.memory_space<vmem>>, vector<40x32xbf16>
    tpu.vector_store %arg5[%c0_7, %c0_8], %9 {strides = array<i32>} : memref<40x32xbf16, #tpu.memory_space<vmem>>, vector<40x32xbf16>,
    return
  }
  func.func @transform_0(%arg0: i32) -> (i32, i32) {
    %c0_i32 = arith.constant 0 : i32
    %c0_i32_0 = arith.constant 0 : i32
    return %arg0, %c0_i32 : i32, i32
  }
  func.func @transform_1(%arg0: i32) -> (i32, i32) {
    %c0_i32 = arith.constant 0 : i32
    %c0_i32_0 = arith.constant 0 : i32
    %c0_i32_1 = arith.constant 0 : i32
    return %c0_i32, %c0_i32_0 : i32, i32
  }
  func.func @transform_2(%arg0: i32) -> (i32, i32) {
    %c0_i32 = arith.constant 0 : i32
    %c0_i32_0 = arith.constant 0 : i32
    %c0_i32_1 = arith.constant 0 : i32
    return %c0_i32, %c0_i32_0 : i32, i32
  }
  func.func @transform_3(%arg0: i32) -> (i32, i32) {
    %c0_i32 = arith.constant 0 : i32
    %c0_i32_0 = arith.constant 0 : i32
    return %arg0, %c0_i32 : i32, i32
  }
  func.func @transform_4(%arg0: i32) -> (i32, i32) {
    %c0_i32 = arith.constant 0 : i32
    %c0_i32_0 = arith.constant 0 : i32
    return %arg0, %c0_i32 : i32, i32
  }
}

module attributes {stable_mosaic.version = 11 : i64} {
  func.func @_layernorm_kernel(%arg0: i32, %arg1: memref<40x32xbf16, #tpu.memory_space<vmem>>, %arg2: memref<1x32xf32, #tpu.memory_space<vmem>>, %arg3: memref<1x32xf32, #tpu.memory_space<vmem>>, %arg4: memref<40x32xf32, #tpu.memory_space<vmem>>) attributes {dimension_semantics = [#tpu.dimension_semantics<parallel>], iteration_bounds = array<i64: 1>, scalar_prefetch = 0 : i64, scratch_operands = 0 : i64, tpu.core_type = #tpu.core_type<tc>, window_params = [{transform_indices = @transform_0, window_bounds = array<i64: 40, 32>}, {pipeline_mode = #tpu.pipeline_mode<synchronous>, transform_indices = @transform_1, window_bounds = array<i64: 1, 32>}, {pipeline_mode = #tpu.pipeline_mode<synchronous>, transform_indices = @transform_2, window_bounds = array<i64: 1, 32>}, {transform_indices = @transform_3, window_bounds = array<i64: 40, 32>}]} {
    %c0 = arith.constant 0 : index
    %c0_0 = arith.constant 0 : index
    %0 = vector.load %arg1[%c0, %c0_0] : memref<40x32xbf16, #tpu.memory_space<vmem>>, vector<40x32xbf16>
    %1 = arith.extf %0 : vector<40x32xbf16> to vector<40x32xf32>
    %cst = arith.constant dense<0.000000e+00> : vector<40xf32>
    %2 = vector.multi_reduction <add>, %1, %cst [1] : vector<40x32xf32> to vector<40xf32>
    %3 = vector.shape_cast %2 : vector<40xf32> to vector<40x1xf32>
    %cst_1 = arith.constant 3.200000e+01 : f32
    %4 = vector.broadcast %cst_1 : f32 to vector<40x1xf32>
    %5 = arith.divf %3, %4 : vector<40x1xf32>
    %6 = vector.broadcast %5 : vector<40x1xf32> to vector<40x32xf32>
    %7 = arith.subf %1, %6 : vector<40x32xf32>
    %8 = arith.mulf %7, %7 : vector<40x32xf32>
    %cst_2 = arith.constant dense<0.000000e+00> : vector<40xf32>
    %9 = vector.multi_reduction <add>, %8, %cst_2 [1] : vector<40x32xf32> to vector<40xf32>
    %10 = vector.shape_cast %9 : vector<40xf32> to vector<40x1xf32>
    %cst_3 = arith.constant 3.200000e+01 : f32
    %11 = vector.broadcast %cst_3 : f32 to vector<40x1xf32>
    %12 = arith.divf %10, %11 : vector<40x1xf32>
    %13 = vector.broadcast %5 : vector<40x1xf32> to vector<40x32xf32>
    %14 = arith.subf %1, %13 : vector<40x32xf32>
    %cst_4 = arith.constant 9.99999997E-7 : f32
    %15 = vector.broadcast %cst_4 : f32 to vector<40x1xf32>
    %16 = arith.addf %12, %15 : vector<40x1xf32>
    %17 = math.rsqrt %16 : vector<40x1xf32>
    %18 = vector.broadcast %17 : vector<40x1xf32> to vector<40x32xf32>
    %19 = arith.mulf %14, %18 : vector<40x32xf32>
    %c0_5 = arith.constant 0 : index
    %c0_6 = arith.constant 0 : index
    %20 = vector.load %arg2[%c0_5, %c0_6] : memref<1x32xf32, #tpu.memory_space<vmem>>, vector<1x32xf32>
    %21 = vector.broadcast %20 : vector<1x32xf32> to vector<40x32xf32>
    %22 = arith.mulf %19, %21 : vector<40x32xf32>
    %c0_7 = arith.constant 0 : index
    %c0_8 = arith.constant 0 : index
    %23 = vector.load %arg3[%c0_7, %c0_8] : memref<1x32xf32, #tpu.memory_space<vmem>>, vector<1x32xf32>
    %24 = vector.broadcast %23 : vector<1x32xf32> to vector<40x32xf32>
    %25 = arith.addf %22, %24 : vector<40x32xf32>
    %c0_9 = arith.constant 0 : index
    %c0_10 = arith.constant 0 : index
    %26 = vector.load %arg4[%c0_9, %c0_10] : memref<40x32xf32, #tpu.memory_space<vmem>>, vector<40x32xf32>
    tpu.vector_store %arg4[%c0_9, %c0_10], %25 {strides = array<i32>} : memref<40x32xf32, #tpu.memory_space<vmem>>, vector<40x32xf32>,
    return
  }
  func.func @transform_0(%arg0: i32) -> (i32, i32) {
    %c0_i32 = arith.constant 0 : i32
    %c0_i32_0 = arith.constant 0 : i32
    return %arg0, %c0_i32 : i32, i32
  }
  func.func @transform_1(%arg0: i32) -> (i32, i32) {
    %c0_i32 = arith.constant 0 : i32
    %c0_i32_0 = arith.constant 0 : i32
    %c0_i32_1 = arith.constant 0 : i32
    return %c0_i32, %c0_i32_0 : i32, i32
  }
  func.func @transform_2(%arg0: i32) -> (i32, i32) {
    %c0_i32 = arith.constant 0 : i32
    %c0_i32_0 = arith.constant 0 : i32
    %c0_i32_1 = arith.constant 0 : i32
    return %c0_i32, %c0_i32_0 : i32, i32
  }
  func.func @transform_3(%arg0: i32) -> (i32, i32) {
    %c0_i32 = arith.constant 0 : i32
    %c0_i32_0 = arith.constant 0 : i32
    return %arg0, %c0_i32 : i32, i32
  }
}

</mosaic_0001>

<llo_original>
// kernel: base_backbone_forward.4
$region0: #{base_backbone_forward.4}
  #allocation0 [shape = 'u32[]', space=smem, size = 0x4, offset = 0x4, fixed_abs, tag = 'smem constant byte address 0x4 - core index']
  #allocation1 [shape = 'u32[72,128]{1,0:T(1,128)}', space=vmem, size = 0x9000, scoped, tag = 'internal scratch']
  %s0 = inlined_call_operand.vmem [shape: bf16[32,48], index: 0, kind: input, shape index: {}]
  %s1 = inlined_call_operand.vmem [shape: bf16[48,32], index: 1, kind: input, shape index: {}]
  %s2 = inlined_call_operand.vmem [shape: f32[1,32], index: 2, kind: input, shape index: {}]
  %s3 = inlined_call_operand.vmem [shape: f32[32,32], index: 3, kind: output, shape index: {}]
  %s4 = sld [smem:[#allocation0]]
  $region45: #{base_backbone_forward.4} parent=0
    _
  %s6 = ssub.s32 1, %s4
  %s7 = scalar_select 0, %s6, %s4
  loop: start=0, step=1, limit=4
  $region2: #{base_backbone_forward.4} parent=0 // loop_pre_header
    _
  $region3: #{base_backbone_forward.4} parent=0 // loop_header
    %s9 = sphi 0, %s13
    %p10 = scmp.ge.s32.totalorder %s9, 4
    %s19 = sphi 0, %s21
    %s22 = sphi 0, %s19
    %s23 = sphi 0, %s22
    %s39 = sphi 0, %s23
    %s43 = sphi 0, %s43
    %s45 = sphi 0, %s43
    %s46 = sphi 0, %s45
    %s60 = sphi 0, %s46
    %s64 = sphi 0, %s64
    %s66 = sphi 0, %s64
    %s67 = sphi 0, %s66
    %s81 = sphi 0, %s67
    %s87 = sphi 0, %s89
    %s90 = sphi 0, %s87
    %s91 = sphi 0, %s90
    %s107 = sphi 0, %s91
  $region4: #{base_backbone_forward.4} parent=0 // loop_header_branch
    %12 = sbr.rel (%p10) target = $region8
  $region5: #{base_backbone_forward.4} parent=0 // loop_body
    %s14 = ssub.s32 %s9, 1
    %s15 = ssub.s32 %s9, 2
    %s16 = sadd.s32 %s9, 1
    %s17 = ssub.s32 %s9, %s16
    %p18 = scmp.eq.s32.totalorder %s17, 0
    %s20 = sadd.s32 %s19, 1
    %s21 = scalar_select %p18, %s19, %s20
    %p24 = pneg %p18
    %p25 = scmp.eq.s32.totalorder %s9, 1
    %p26 = por %p24, %p25
    %p27 = scmp.ne.s32.totalorder %s19, %s22
    %p28 = scmp.eq.s32.totalorder %s9, 0
    %p29 = por %p27, %p28
    %p30 = scmp.ne.s32.totalorder %s19, %s22
    %p31 = scmp.eq.s32.totalorder %s14, 1
    %p32 = por %p30, %p31
    %p33 = scmp.ne.s32.totalorder %s22, %s23
    %p34 = scmp.eq.s32.totalorder %s14, 0
    %p35 = por %p33, %p34
    %p36 = scmp.ne.s32.totalorder %s22, %s23
    %p37 = scmp.eq.s32.totalorder %s15, 1
    %p38 = por %p36, %p37
    %p40 = scmp.ne.s32.totalorder %s23, %s39
    %p41 = scmp.eq.s32.totalorder %s15, 0
    %p42 = por %p40, %p41
    %s44 = sadd.s32 %s43, 1
    %p47 = scmp.eq.s32.totalorder %s9, 1
    %p48 = scmp.ne.s32.totalorder %s43, %s45
    %p49 = scmp.eq.s32.totalorder %s9, 0
    %p50 = por %p48, %p49
    %p51 = scmp.ne.s32.totalorder %s43, %s45
    %p52 = scmp.eq.s32.totalorder %s14, 1
    %p53 = por %p51, %p52
    %p54 = scmp.ne.s32.totalorder %s45, %s46
    %p55 = scmp.eq.s32.totalorder %s14, 0
    %p56 = por %p54, %p55
    %p57 = scmp.ne.s32.totalorder %s45, %s46
    %p58 = scmp.eq.s32.totalorder %s15, 1
    %p59 = por %p57, %p58
    %p61 = scmp.ne.s32.totalorder %s46, %s60
    %p62 = scmp.eq.s32.totalorder %s15, 0
    %p63 = por %p61, %p62
    %s65 = sadd.s32 %s64, 1
    %p68 = scmp.eq.s32.totalorder %s9, 1
    %p69 = scmp.ne.s32.totalorder %s64, %s66
    %p70 = scmp.eq.s32.totalorder %s9, 0
    %p71 = por %p69, %p70
    %p72 = scmp.ne.s32.totalorder %s64, %s66
    %p73 = scmp.eq.s32.totalorder %s14, 1
    %p74 = por %p72, %p73
    %p75 = scmp.ne.s32.totalorder %s66, %s67
    %p76 = scmp.eq.s32.totalorder %s14, 0
    %p77 = por %p75, %p76
    %p78 = scmp.ne.s32.totalorder %s66, %s67
    %p79 = scmp.eq.s32.totalorder %s15, 1
    %p80 = por %p78, %p79
    %p82 = scmp.ne.s32.totalorder %s67, %s81
    %p83 = scmp.eq.s32.totalorder %s15, 0
    %p84 = por %p82, %p83
    %s85 = ssub.s32 %s9, %s16
    %p86 = scmp.eq.s32.totalorder %s85, 0
    %s88 = sadd.s32 %s87, 1
    %s89 = scalar_select %p86, %s87, %s88
    %p92 = pneg %p86
    %p93 = scmp.eq.s32.totalorder %s9, 1
    %p94 = por %p92, %p93
    %p95 = scmp.ne.s32.totalorder %s87, %s90
    %p96 = scmp.eq.s32.totalorder %s9, 0
    %p97 = por %p95, %p96
    %p98 = scmp.ne.s32.totalorder %s87, %s90
    %p99 = scmp.eq.s32.totalorder %s14, 1
    %p100 = por %p98, %p99
    %p101 = scmp.ne.s32.totalorder %s90, %s91
    %p102 = scmp.eq.s32.totalorder %s14, 0
    %p103 = por %p101, %p102
    %p104 = scmp.ne.s32.totalorder %s90, %s91
    %p105 = scmp.eq.s32.totalorder %s15, 1
    %p106 = por %p104, %p105
    %p108 = scmp.ne.s32.totalorder %s91, %s107
    %p109 = scmp.eq.s32.totalorder %s15, 0
    %p110 = por %p108, %p109
    %p111 = scmp.le.s32.totalorder 1, %s9
    %p112 = scmp.lt.s32.totalorder %s9, 3
    %p113 = pnand %p111, %p112
    %p114 = pneg %p113
    // Predicated region
    $region9: #{base_backbone_forward.4} parent=5 // pred_check
      _
    $region10: #{base_backbone_forward.4} parent=5 // pred_check_branch
      %116 = sbr.rel (%p113) target = $region12
    $region11: #{base_backbone_forward.4} parent=5 // pred_region
      %s117 = ssub.s32 %s9, 1
      // Predicated region
      $region13: #{base_backbone_forward.4} parent=11 // pred_check
        %p118 = pneg %p56
      $region14: #{base_backbone_forward.4} parent=11 // pred_check_branch
        %120 = sbr.rel (%p118) target = $region16
      $region15: #{base_backbone_forward.4} parent=11 // pred_region
        _
      $region16: #{base_backbone_forward.4} parent=11 // pred_fallthru
        _
      // Predicated region
      $region17: #{base_backbone_forward.4} parent=11 // pred_check
        %p121 = pneg %p77
      $region18: #{base_backbone_forward.4} parent=11 // pred_check_branch
        %123 = sbr.rel (%p121) target = $region20
      $region19: #{base_backbone_forward.4} parent=11 // pred_region
        _
      $region20: #{base_backbone_forward.4} parent=11 // pred_fallthru
        _
    $region12: #{base_backbone_forward.4} parent=5 // pred_fallthru
      _
    %p124 = scmp.lt.s32.totalorder %s9, 2
    // Predicated region
    $region21: #{base_backbone_forward.4} parent=5 // pred_check
      %p125 = pneg %p124
    $region22: #{base_backbone_forward.4} parent=5 // pred_check_branch
      %127 = sbr.rel (%p125) target = $region24
    $region23: #{base_backbone_forward.4} parent=5 // pred_region
      // Predicated region
      $region25: #{base_backbone_forward.4} parent=23 // pred_check
        %p128 = pneg %p29
      $region26: #{base_backbone_forward.4} parent=23 // pred_check_branch
        %130 = sbr.rel (%p128) target = $region28
      $region27: #{base_backbone_forward.4} parent=23 // pred_region
        %s131 = smul.u32 2, %s9
        %p132 = scmp.lt.s32.totalorder %s131, 3
        %s133 = scalar_select %p132, %s131, 3
        %s134 = smul.addr %s133, 4
        %s135 = scalar_lea.vmem %s0, %s134
        %s136 = smul.u32 2, %s9
      $region28: #{base_backbone_forward.4} parent=23 // pred_fallthru
        _
    $region24: #{base_backbone_forward.4} parent=5 // pred_fallthru
      _
    %p137 = scmp.le.s32.totalorder 1, %s9
    %p138 = scmp.lt.s32.totalorder %s9, 3
    %p139 = pnand %p137, %p138
    %p140 = pneg %p139
    // Predicated region
    $region29: #{base_backbone_forward.4} parent=5 // pred_check
      _
    $region30: #{base_backbone_forward.4} parent=5 // pred_check_branch
      %142 = sbr.rel (%p139) target = $region32
    $region31: #{base_backbone_forward.4} parent=5 // pred_region
      %s143 = ssub.s32 %s9, 1
      %s144 = smul.u32 2, %s14
      %p145 = scmp.lt.s32.totalorder %s144, 3
      %s146 = scalar_select %p145, %s144, 3
      %s147 = smul.addr %s146, 4
      %s148 = scalar_lea.vmem %s0, %s147
      %p149 = pneg %p35
      %p150 = pneg %p32
      %p151 = pneg %p56
      %p152 = pneg %p53
      %p153 = pneg %p77
      %p154 = pneg %p74
      %p155 = pneg %p103
      %p156 = pneg %p100
      %s157 = smul.u32 2, %s14
      %p158 = scmp.lt.s32.totalorder %s157, 3
      %s159 = scalar_select %p158, %s157, 3
      %s160 = smul.addr %s159, 8
      %s161 = scalar_lea.vmem %s3, %s160
      %s162 = smul.u32 2, %s14
      %p163 = scmp.lt.s32.totalorder %s162, 3
      %s164 = scalar_select %p163, %s162, 3
      %s165 = smul.addr %s164, 4
      %s166 = scalar_lea.vmem %s0, %s165
      %s167 = smul.u32 2, %s14
      %s168 = smul.u32 2, %s14
      %p169 = scmp.lt.s32.totalorder %s168, 3
      %s170 = scalar_select %p169, %s168, 3
      %s171 = smul.addr %s170, 8
      %s172 = scalar_lea.vmem %s3, %s171
      %s173 = smul.u32 2, %s14
      %v175 = vld [vmem:[%s166] sm:$0xf]
      %v176 = vld [vmem:[%s166 + $0x4] sm:$0xf]
      %v177 = vld [vmem:[%s1] sm:$0xf]
      %v178 = vld [vmem:[%s1 + $0x4] sm:$0xf]
      %v179 = vld [vmem:[%s1 + $0x8] sm:$0xf]
      %v180 = vld [vmem:[%s1 + $0xc] sm:$0xf]
      %v181 = vld [vmem:[%s1 + $0x10] sm:$0xf]
      %v182 = vld [vmem:[%s1 + $0x14] sm:$0xf]
      %v183 = vld [vmem:[%s2] sm:$0x1]
      %v185 = vperm.slane %v183, 0
      %v189 = vunpack.c.l.b16 %v175
      %v190 = vunpack.c.l.b16 %v176
      %v191 = vpack.c.b16 %v190, %v189
      %v198 = vunpack.c.l.b16 %v177
      %v199 = vunpack.c.l.b16 %v178
      %v200 = vunpack.c.l.b16 %v179
      %v201 = vunpack.c.l.b16 %v180
      %v202 = vunpack.c.l.b16 %v181
      %v203 = vunpack.c.l.b16 %v182
      %v204 = vpack.c.b16 %v199, %v198
      %v205 = vpack.c.b16 %v201, %v200
      %v206 = vpack.c.b16 %v203, %v202
      %vm210 = vcmask 392192
      %v212 = vsel %vm210, %v191, 0
      %214 = vmatpush.bf16.msra.mxu0 0
      %215 = vmatpush.bf16.msra.mxu0 0
      %216 = vmatpush.bf16.msra.mxu0 0
      %217 = vmatpush.bf16.msra.mxu0 0
      %218 = vmatpush.bf16.msra.mxu0 0
      %219 = vmatpush.bf16.msra.mxu0 %v206
      %220 = vmatpush.bf16.msra.mxu0 %v205
      %221 = vmatpush.bf16.msra.mxu0 %v204
      %222 = vmatmul.bf16.gmra.mxu0 %v212
      %v223 = vpop.f32.mrf.mxu0
      %v224 = vadd.f32 %v185, %v223
      %v225 = vpop.f32.mrf.mxu0
      %v226 = vadd.f32 %v185, %v225
      %227 = vdwg.mxu0
      %vm228 = vcmask 261120
      %229 = vst.msk [vmem:[%s172] sm:$0xff] %vm228, %v224
      %230 = vst.msk [vmem:[%s172 + $0x8] sm:$0xff] %vm228, %v226
      %s231 = smul.u32 2, %s14
      %p232 = scmp.lt.s32.totalorder %s231, 3
      %s233 = scalar_select %p232, %s231, 3
      %s234 = smul.addr %s233, 8
      %s235 = scalar_lea.vmem %s3, %s234
      // Predicated region
      $region33: #{base_backbone_forward.4} parent=31 // pred_check
        %p236 = pneg %p100
      $region34: #{base_backbone_forward.4} parent=31 // pred_check_branch
        %238 = sbr.rel (%p236) target = $region36
      $region35: #{base_backbone_forward.4} parent=31 // pred_region
        %s239 = smul.u32 2, %s14
      $region36: #{base_backbone_forward.4} parent=31 // pred_fallthru
        _
    $region32: #{base_backbone_forward.4} parent=5 // pred_fallthru
      _
    %p240 = scmp.le.s32.totalorder 2, %s9
    // Predicated region
    $region37: #{base_backbone_forward.4} parent=5 // pred_check
      %p241 = pneg %p240
    $region38: #{base_backbone_forward.4} parent=5 // pred_check_branch
      %243 = sbr.rel (%p241) target = $region40
    $region39: #{base_backbone_forward.4} parent=5 // pred_region
      %s244 = ssub.s32 %s9, 2
      // Predicated region
      $region41: #{base_backbone_forward.4} parent=39 // pred_check
        %p245 = pneg %p106
      $region42: #{base_backbone_forward.4} parent=39 // pred_check_branch
        %247 = sbr.rel (%p245) target = $region44
      $region43: #{base_backbone_forward.4} parent=39 // pred_region
        %s248 = smul.u32 2, %s15
        %p249 = scmp.lt.s32.totalorder %s248, 3
        %s250 = scalar_select %p249, %s248, 3
        %s251 = smul.addr %s250, 8
        %s252 = scalar_lea.vmem %s3, %s251
      $region44: #{base_backbone_forward.4} parent=39 // pred_fallthru
        _
    $region40: #{base_backbone_forward.4} parent=5 // pred_fallthru
      _
  $region6: #{base_backbone_forward.4} parent=0 // loop_footer
    %s13 = sadd.s32 1, %s9
  $region7: #{base_backbone_forward.4} parent=0 // loop_footer_branch
    %8 = sbr.rel target = $region3
  $region8: #{base_backbone_forward.4} parent=0 // loop_exit
    _

// kernel: base_backbone_forward.6
$region0: #{base_backbone_forward.6}
  #allocation0 [shape = 'u32[]', space=smem, size = 0x4, offset = 0x4, fixed_abs, tag = 'smem constant byte address 0x4 - core index']
  #allocation1 [shape = 'u32[72,128]{1,0:T(1,128)}', space=vmem, size = 0x9000, scoped, tag = 'internal scratch']
  %s0 = inlined_call_operand.vmem [shape: f32[32,32], index: 0, kind: input, shape index: {}]
  %s1 = inlined_call_operand.vmem [shape: f32[1,32], index: 1, kind: input, shape index: {}]
  %s2 = inlined_call_operand.vmem [shape: f32[1,32], index: 2, kind: input, shape index: {}]
  %s3 = inlined_call_operand.vmem [shape: f32[32,1], index: 3, kind: input, shape index: {}]
  %s4 = inlined_call_operand.vmem [shape: f32[32,32], index: 4, kind: output, shape index: {0}]
  %s5 = inlined_call_operand.vmem [shape: bf16[32,32], index: 5, kind: output, shape index: {1}]
  %6 = xla_tuple %s4, %s5
  %s7 = sld [smem:[#allocation0]]
  $region57: #{base_backbone_forward.6} parent=0
    _
  %s9 = ssub.s32 1, %s7
  %s10 = scalar_select 0, %s9, %s7
  loop: start=0, step=1, limit=4
  $region2: #{base_backbone_forward.6} parent=0 // loop_pre_header
    _
  $region3: #{base_backbone_forward.6} parent=0 // loop_header
    %s12 = sphi 0, %s16
    %p13 = scmp.ge.s32.totalorder %s12, 4
    %s22 = sphi 0, %s24
    %s25 = sphi 0, %s22
    %s26 = sphi 0, %s25
    %s42 = sphi 0, %s26
    %s46 = sphi 0, %s46
    %s48 = sphi 0, %s46
    %s49 = sphi 0, %s48
    %s63 = sphi 0, %s49
    %s67 = sphi 0, %s67
    %s69 = sphi 0, %s67
    %s70 = sphi 0, %s69
    %s84 = sphi 0, %s70
    %s90 = sphi 0, %s92
    %s93 = sphi 0, %s90
    %s94 = sphi 0, %s93
    %s110 = sphi 0, %s94
    %s116 = sphi 0, %s118
    %s119 = sphi 0, %s116
    %s120 = sphi 0, %s119
    %s136 = sphi 0, %s120
    %s142 = sphi 0, %s144
    %s145 = sphi 0, %s142
    %s146 = sphi 0, %s145
    %s162 = sphi 0, %s146
  $region4: #{base_backbone_forward.6} parent=0 // loop_header_branch
    %15 = sbr.rel (%p13) target = $region8
  $region5: #{base_backbone_forward.6} parent=0 // loop_body
    %s17 = ssub.s32 %s12, 1
    %s18 = ssub.s32 %s12, 2
    %s19 = sadd.s32 %s12, 1
    %s20 = ssub.s32 %s12, %s19
    %p21 = scmp.eq.s32.totalorder %s20, 0
    %s23 = sadd.s32 %s22, 1
    %s24 = scalar_select %p21, %s22, %s23
    %p27 = pneg %p21
    %p28 = scmp.eq.s32.totalorder %s12, 1
    %p29 = por %p27, %p28
    %p30 = scmp.ne.s32.totalorder %s22, %s25
    %p31 = scmp.eq.s32.totalorder %s12, 0
    %p32 = por %p30, %p31
    %p33 = scmp.ne.s32.totalorder %s22, %s25
    %p34 = scmp.eq.s32.totalorder %s17, 1
    %p35 = por %p33, %p34
    %p36 = scmp.ne.s32.totalorder %s25, %s26
    %p37 = scmp.eq.s32.totalorder %s17, 0
    %p38 = por %p36, %p37
    %p39 = scmp.ne.s32.totalorder %s25, %s26
    %p40 = scmp.eq.s32.totalorder %s18, 1
    %p41 = por %p39, %p40
    %p43 = scmp.ne.s32.totalorder %s26, %s42
    %p44 = scmp.eq.s32.totalorder %s18, 0
    %p45 = por %p43, %p44
    %s47 = sadd.s32 %s46, 1
    %p50 = scmp.eq.s32.totalorder %s12, 1
    %p51 = scmp.ne.s32.totalorder %s46, %s48
    %p52 = scmp.eq.s32.totalorder %s12, 0
    %p53 = por %p51, %p52
    %p54 = scmp.ne.s32.totalorder %s46, %s48
    %p55 = scmp.eq.s32.totalorder %s17, 1
    %p56 = por %p54, %p55
    %p57 = scmp.ne.s32.totalorder %s48, %s49
    %p58 = scmp.eq.s32.totalorder %s17, 0
    %p59 = por %p57, %p58
    %p60 = scmp.ne.s32.totalorder %s48, %s49
    %p61 = scmp.eq.s32.totalorder %s18, 1
    %p62 = por %p60, %p61
    %p64 = scmp.ne.s32.totalorder %s49, %s63
    %p65 = scmp.eq.s32.totalorder %s18, 0
    %p66 = por %p64, %p65
    %s68 = sadd.s32 %s67, 1
    %p71 = scmp.eq.s32.totalorder %s12, 1
    %p72 = scmp.ne.s32.totalorder %s67, %s69
    %p73 = scmp.eq.s32.totalorder %s12, 0
    %p74 = por %p72, %p73
    %p75 = scmp.ne.s32.totalorder %s67, %s69
    %p76 = scmp.eq.s32.totalorder %s17, 1
    %p77 = por %p75, %p76
    %p78 = scmp.ne.s32.totalorder %s69, %s70
    %p79 = scmp.eq.s32.totalorder %s17, 0
    %p80 = por %p78, %p79
    %p81 = scmp.ne.s32.totalorder %s69, %s70
    %p82 = scmp.eq.s32.totalorder %s18, 1
    %p83 = por %p81, %p82
    %p85 = scmp.ne.s32.totalorder %s70, %s84
    %p86 = scmp.eq.s32.totalorder %s18, 0
    %p87 = por %p85, %p86
    %s88 = ssub.s32 %s12, %s19
    %p89 = scmp.eq.s32.totalorder %s88, 0
    %s91 = sadd.s32 %s90, 1
    %s92 = scalar_select %p89, %s90, %s91
    %p95 = pneg %p89
    %p96 = scmp.eq.s32.totalorder %s12, 1
    %p97 = por %p95, %p96
    %p98 = scmp.ne.s32.totalorder %s90, %s93
    %p99 = scmp.eq.s32.totalorder %s12, 0
    %p100 = por %p98, %p99
    %p101 = scmp.ne.s32.totalorder %s90, %s93
    %p102 = scmp.eq.s32.totalorder %s17, 1
    %p103 = por %p101, %p102
    %p104 = scmp.ne.s32.totalorder %s93, %s94
    %p105 = scmp.eq.s32.totalorder %s17, 0
    %p106 = por %p104, %p105
    %p107 = scmp.ne.s32.totalorder %s93, %s94
    %p108 = scmp.eq.s32.totalorder %s18, 1
    %p109 = por %p107, %p108
    %p111 = scmp.ne.s32.totalorder %s94, %s110
    %p112 = scmp.eq.s32.totalorder %s18, 0
    %p113 = por %p111, %p112
    %s114 = ssub.s32 %s12, %s19
    %p115 = scmp.eq.s32.totalorder %s114, 0
    %s117 = sadd.s32 %s116, 1
    %s118 = scalar_select %p115, %s116, %s117
    %p121 = pneg %p115
    %p122 = scmp.eq.s32.totalorder %s12, 1
    %p123 = por %p121, %p122
    %p124 = scmp.ne.s32.totalorder %s116, %s119
    %p125 = scmp.eq.s32.totalorder %s12, 0
    %p126 = por %p124, %p125
    %p127 = scmp.ne.s32.totalorder %s116, %s119
    %p128 = scmp.eq.s32.totalorder %s17, 1
    %p129 = por %p127, %p128
    %p130 = scmp.ne.s32.totalorder %s119, %s120
    %p131 = scmp.eq.s32.totalorder %s17, 0
    %p132 = por %p130, %p131
    %p133 = scmp.ne.s32.totalorder %s119, %s120
    %p134 = scmp.eq.s32.totalorder %s18, 1
    %p135 = por %p133, %p134
    %p137 = scmp.ne.s32.totalorder %s120, %s136
    %p138 = scmp.eq.s32.totalorder %s18, 0
    %p139 = por %p137, %p138
    %s140 = ssub.s32 %s12, %s19
    %p141 = scmp.eq.s32.totalorder %s140, 0
    %s143 = sadd.s32 %s142, 1
    %s144 = scalar_select %p141, %s142, %s143
    %p147 = pneg %p141
    %p148 = scmp.eq.s32.totalorder %s12, 1
    %p149 = por %p147, %p148
    %p150 = scmp.ne.s32.totalorder %s142, %s145
    %p151 = scmp.eq.s32.totalorder %s12, 0
    %p152 = por %p150, %p151
    %p153 = scmp.ne.s32.totalorder %s142, %s145
    %p154 = scmp.eq.s32.totalorder %s17, 1
    %p155 = por %p153, %p154
    %p156 = scmp.ne.s32.totalorder %s145, %s146
    %p157 = scmp.eq.s32.totalorder %s17, 0
    %p158 = por %p156, %p157
    %p159 = scmp.ne.s32.totalorder %s145, %s146
    %p160 = scmp.eq.s32.totalorder %s18, 1
    %p161 = por %p159, %p160
    %p163 = scmp.ne.s32.totalorder %s146, %s162
    %p164 = scmp.eq.s32.totalorder %s18, 0
    %p165 = por %p163, %p164
    %p166 = scmp.le.s32.totalorder 1, %s12
    %p167 = scmp.lt.s32.totalorder %s12, 3
    %p168 = pnand %p166, %p167
    %p169 = pneg %p168
    // Predicated region
    $region9: #{base_backbone_forward.6} parent=5 // pred_check
      _
    $region10: #{base_backbone_forward.6} parent=5 // pred_check_branch
      %171 = sbr.rel (%p168) target = $region12
    $region11: #{base_backbone_forward.6} parent=5 // pred_region
      %s172 = ssub.s32 %s12, 1
      // Predicated region
      $region13: #{base_backbone_forward.6} parent=11 // pred_check
        %p173 = pneg %p59
      $region14: #{base_backbone_forward.6} parent=11 // pred_check_branch
        %175 = sbr.rel (%p173) target = $region16
      $region15: #{base_backbone_forward.6} parent=11 // pred_region
        _
      $region16: #{base_backbone_forward.6} parent=11 // pred_fallthru
        _
      // Predicated region
      $region17: #{base_backbone_forward.6} parent=11 // pred_check
        %p176 = pneg %p80
      $region18: #{base_backbone_forward.6} parent=11 // pred_check_branch
        %178 = sbr.rel (%p176) target = $region20
      $region19: #{base_backbone_forward.6} parent=11 // pred_region
        _
      $region20: #{base_backbone_forward.6} parent=11 // pred_fallthru
        _
    $region12: #{base_backbone_forward.6} parent=5 // pred_fallthru
      _
    %p179 = scmp.lt.s32.totalorder %s12, 2
    // Predicated region
    $region21: #{base_backbone_forward.6} parent=5 // pred_check
      %p180 = pneg %p179
    $region22: #{base_backbone_forward.6} parent=5 // pred_check_branch
      %182 = sbr.rel (%p180) target = $region24
    $region23: #{base_backbone_forward.6} parent=5 // pred_region
      // Predicated region
      $region25: #{base_backbone_forward.6} parent=23 // pred_check
        %p183 = pneg %p32
      $region26: #{base_backbone_forward.6} parent=23 // pred_check_branch
        %185 = sbr.rel (%p183) target = $region28
      $region27: #{base_backbone_forward.6} parent=23 // pred_region
        %s186 = smul.u32 2, %s12
        %p187 = scmp.lt.s32.totalorder %s186, 3
        %s188 = scalar_select %p187, %s186, 3
        %s189 = smul.addr %s188, 8
        %s190 = scalar_lea.vmem %s0, %s189
        %s191 = smul.u32 2, %s12
      $region28: #{base_backbone_forward.6} parent=23 // pred_fallthru
        _
      // Predicated region
      $region29: #{base_backbone_forward.6} parent=23 // pred_check
        %p192 = pneg %p100
      $region30: #{base_backbone_forward.6} parent=23 // pred_check_branch
        %194 = sbr.rel (%p192) target = $region32
      $region31: #{base_backbone_forward.6} parent=23 // pred_region
        %s195 = smul.u32 2, %s12
        %p196 = scmp.lt.s32.totalorder %s195, 3
        %s197 = scalar_select %p196, %s195, 3
        %s198 = smul.addr %s197, 8
        %s199 = scalar_lea.vmem %s3, %s198
        %s200 = smul.u32 2, %s12
      $region32: #{base_backbone_forward.6} parent=23 // pred_fallthru
        _
    $region24: #{base_backbone_forward.6} parent=5 // pred_fallthru
      _
    %p201 = scmp.le.s32.totalorder 1, %s12
    %p202 = scmp.lt.s32.totalorder %s12, 3
    %p203 = pnand %p201, %p202
    %p204 = pneg %p203
    // Predicated region
    $region33: #{base_backbone_forward.6} parent=5 // pred_check
      _
    $region34: #{base_backbone_forward.6} parent=5 // pred_check_branch
      %206 = sbr.rel (%p203) target = $region36
    $region35: #{base_backbone_forward.6} parent=5 // pred_region
      %s207 = ssub.s32 %s12, 1
      %s208 = smul.u32 2, %s17
      %p209 = scmp.lt.s32.totalorder %s208, 3
      %s210 = scalar_select %p209, %s208, 3
      %s211 = smul.addr %s210, 8
      %s212 = scalar_lea.vmem %s0, %s211
      %p213 = pneg %p38
      %p214 = pneg %p35
      %p215 = pneg %p59
      %p216 = pneg %p56
      %p217 = pneg %p80
      %p218 = pneg %p77
      %s219 = smul.u32 2, %s17
      %p220 = scmp.lt.s32.totalorder %s219, 3
      %s221 = scalar_select %p220, %s219, 3
      %s222 = smul.addr %s221, 8
      %s223 = scalar_lea.vmem %s3, %s222
      %p224 = pneg %p106
      %p225 = pneg %p103
      %p226 = pneg %p132
      %p227 = pneg %p129
      %s228 = smul.u32 2, %s17
      %p229 = scmp.lt.s32.totalorder %s228, 3
      %s230 = scalar_select %p229, %s228, 3
      %s231 = smul.addr %s230, 8
      %s232 = scalar_lea.vmem %s4, %s231
      %p233 = pneg %p158
      %p234 = pneg %p155
      %s235 = smul.u32 2, %s17
      %p236 = scmp.lt.s32.totalorder %s235, 3
      %s237 = scalar_select %p236, %s235, 3
      %s238 = smul.addr %s237, 4
      %s239 = scalar_lea.vmem %s5, %s238
      %s240 = smul.u32 2, %s17
      %p241 = scmp.lt.s32.totalorder %s240, 3
      %s242 = scalar_select %p241, %s240, 3
      %s243 = smul.addr %s242, 8
      %s244 = scalar_lea.vmem %s0, %s243
      %s245 = smul.u32 2, %s17
      %s246 = smul.u32 2, %s17
      %p247 = scmp.lt.s32.totalorder %s246, 3
      %s248 = scalar_select %p247, %s246, 3
      %s249 = smul.addr %s248, 8
      %s250 = scalar_lea.vmem %s3, %s249
      %s251 = smul.u32 2, %s17
      %s252 = smul.u32 2, %s17
      %p253 = scmp.lt.s32.totalorder %s252, 3
      %s254 = scalar_select %p253, %s252, 3
      %s255 = smul.addr %s254, 8
      %s256 = scalar_lea.vmem %s4, %s255
      %s257 = smul.u32 2, %s17
      %s258 = smul.u32 2, %s17
      %p259 = scmp.lt.s32.totalorder %s258, 3
      %s260 = scalar_select %p259, %s258, 3
      %s261 = smul.addr %s260, 4
      %s262 = scalar_lea.vmem %s5, %s261
      %s263 = smul.u32 2, %s17
      %v264 = vld [vmem:[%s244] sm:$0xff]
      %v265 = vld [vmem:[%s244 + $0x8] sm:$0xff]
      %vm266 = vcmask 261120
      %v267 = vsel %vm266, %v264, 0.0
      %268 = vadd.xlane.f32.xlu0 %v267
      %v269 = vpop.xlane.xlu0 %268
      %v270 = vsel %vm266, %v265, 0.0
      %271 = vadd.xlane.f32.xlu0 %v270
      %v272 = vpop.xlane.xlu0 %271
      %v273 = vrcp.pop 32.0
      %v274 = vmul.f32 32.0, %v273
      %v275 = vsub.f32 1.0, %v274
      %v276 = vmul.f32 %v273, %v275
      %v277 = vadd.f32 %v273, %v276
      %vm278 = vweird.f32 %v273
      %v279 = vsel %vm278, %v273, %v277
      %v280 = vmul.f32 %v269, %v279
      %v281 = vmul.f32 %v272, %v279
      %v282 = vsub.f32 %v264, %v280
      %v283 = vsub.f32 %v265, %v281
      %v284 = vmul.f32 %v282, %v282
      %v285 = vmul.f32 %v283, %v283
      %v286 = vsel %vm266, %v284, 0.0
      %287 = vadd.xlane.f32.xlu0 %v286
      %v288 = vpop.xlane.xlu0 %287
      %v289 = vsel %vm266, %v285, 0.0
      %290 = vadd.xlane.f32.xlu0 %v289
      %v291 = vpop.xlane.xlu0 %290
      %v292 = vmul.f32 %v288, %v279
      %v293 = vmul.f32 %v291, %v279
      %v294 = vadd.f32 %v292, 1e-06
      %v295 = vadd.f32 %v293, 1e-06
      %v296 = vrsqrt.pop %v294
      %v297 = vmul.f32 %v296, %v294
      %v298 = vmul.f32 %v297, %v296
      %v299 = vmul.f32 0.5, %v298
      %v300 = vsub.f32 1.5, %v299
      %v301 = vmul.f32 %v296, %v300
      %vm302 = vweird.f32 %v294
      %vm303 = vweird.f32 %v296
      %vm304 = vmor %vm302, %vm303
      %v305 = vsel %vm304, %v296, %v301
      %v306 = vrsqrt.pop %v295
      %v307 = vmul.f32 %v306, %v295
      %v308 = vmul.f32 %v307, %v306
      %v309 = vmul.f32 0.5, %v308
      %v310 = vsub.f32 1.5, %v309
      %v311 = vmul.f32 %v306, %v310
      %vm312 = vweird.f32 %v295
      %vm313 = vweird.f32 %v306
      %vm314 = vmor %vm312, %vm313
      %v315 = vsel %vm314, %v306, %v311
      %v316 = vmul.f32 %v282, %v305
      %v317 = vmul.f32 %v283, %v315
      %v318 = vld [vmem:[%s1] sm:$0x1]
      %v320 = vperm.slane %v318, 0
      %v322 = vmul.f32 %v316, %v320
      %v323 = vmul.f32 %v317, %v320
      %v324 = vld [vmem:[%s2] sm:$0x1]
      %v326 = vperm.slane %v324, 0
      %v328 = vadd.f32 %v322, %v326
      %v329 = vadd.f32 %v323, %v326
      %v330 = vpack.c.bf16 %v328, %v328
      %v331 = vpack.c.bf16 %v329, %v329
      %vm332 = vcmask 257024
      %333 = vst.msk [vmem:[%s262] sm:$0xf] %vm332, %v330
      %334 = vst.msk [vmem:[%s262 + $0x4] sm:$0xf] %vm332, %v331
      %v335 = vld [vmem:[%s250] sm:$0xff]
      %v336 = vld [vmem:[%s250 + $0x8] sm:$0xff]
      %338 = vset.pattern.permute.xlu0 0
      %339 = vperm.xlu0 %338, %v335
      %v340 = vpop.permute.xlu0 %339
      %343 = vset.pattern.permute.xlu0 0
      %344 = vperm.xlu0 %343, %v336
      %v345 = vpop.permute.xlu0 %344
      %v347 = vmul.f32 %v340, %v328
      %v348 = vmul.f32 %v345, %v329
      %v349 = vadd.f32 %v347, %v264
      %v350 = vadd.f32 %v348, %v265
      %351 = vst.msk [vmem:[%s256] sm:$0xff] %vm266, %v349
      %352 = vst.msk [vmem:[%s256 + $0x8] sm:$0xff] %vm266, %v350
      %s353 = smul.u32 2, %s17
      %p354 = scmp.lt.s32.totalorder %s353, 3
      %s355 = scalar_select %p354, %s353, 3
      %s356 = smul.addr %s355, 8
      %s357 = scalar_lea.vmem %s4, %s356
      %s358 = smul.u32 2, %s17
      %p359 = scmp.lt.s32.totalorder %s358, 3
      %s360 = scalar_select %p359, %s358, 3
      %s361 = smul.addr %s360, 4
      %s362 = scalar_lea.vmem %s5, %s361
      // Predicated region
      $region37: #{base_backbone_forward.6} parent=35 // pred_check
        %p363 = pneg %p129
      $region38: #{base_backbone_forward.6} parent=35 // pred_check_branch
        %365 = sbr.rel (%p363) target = $region40
      $region39: #{base_backbone_forward.6} parent=35 // pred_region
        %s366 = smul.u32 2, %s17
      $region40: #{base_backbone_forward.6} parent=35 // pred_fallthru
        _
      // Predicated region
      $region41: #{base_backbone_forward.6} parent=35 // pred_check
        %p367 = pneg %p155
      $region42: #{base_backbone_forward.6} parent=35 // pred_check_branch
        %369 = sbr.rel (%p367) target = $region44
      $region43: #{base_backbone_forward.6} parent=35 // pred_region
        %s370 = smul.u32 2, %s17
      $region44: #{base_backbone_forward.6} parent=35 // pred_fallthru
        _
    $region36: #{base_backbone_forward.6} parent=5 // pred_fallthru
      _
    %p371 = scmp.le.s32.totalorder 2, %s12
    // Predicated region
    $region45: #{base_backbone_forward.6} parent=5 // pred_check
      %p372 = pneg %p371
    $region46: #{base_backbone_forward.6} parent=5 // pred_check_branch
      %374 = sbr.rel (%p372) target = $region48
    $region47: #{base_backbone_forward.6} parent=5 // pred_region
      %s375 = ssub.s32 %s12, 2
      // Predicated region
      $region49: #{base_backbone_forward.6} parent=47 // pred_check
        %p376 = pneg %p135
      $region50: #{base_backbone_forward.6} parent=47 // pred_check_branch
        %378 = sbr.rel (%p376) target = $region52
      $region51: #{base_backbone_forward.6} parent=47 // pred_region
        %s379 = smul.u32 2, %s18
        %p380 = scmp.lt.s32.totalorder %s379, 3
        %s381 = scalar_select %p380, %s379, 3
        %s382 = smul.addr %s381, 8
        %s383 = scalar_lea.vmem %s4, %s382
      $region52: #{base_backbone_forward.6} parent=47 // pred_fallthru
        _
      // Predicated region
      $region53: #{base_backbone_forward.6} parent=47 // pred_check
        %p384 = pneg %p161
      $region54: #{base_backbone_forward.6} parent=47 // pred_check_branch
        %386 = sbr.rel (%p384) target = $region56
      $region55: #{base_backbone_forward.6} parent=47 // pred_region
        %s387 = smul.u32 2, %s18
        %p388 = scmp.lt.s32.totalorder %s387, 3
        %s389 = scalar_select %p388, %s387, 3
        %s390 = smul.addr %s389, 4
        %s391 = scalar_lea.vmem %s5, %s390
      $region56: #{base_backbone_forward.6} parent=47 // pred_fallthru
        _
    $region48: #{base_backbone_forward.6} parent=5 // pred_fallthru
      _
  $region6: #{base_backbone_forward.6} parent=0 // loop_footer
    %s16 = sadd.s32 1, %s12
  $region7: #{base_backbone_forward.6} parent=0 // loop_footer_branch
    %11 = sbr.rel target = $region3
  $region8: #{base_backbone_forward.6} parent=0 // loop_exit
    _

// kernel: base_backbone_forward.5
$region0: #{base_backbone_forward.5}
  #allocation0 [shape = 'u32[]', space=smem, size = 0x4, offset = 0x4, fixed_abs, tag = 'smem constant byte address 0x4 - core index']
  #allocation1 [shape = 'u32[72,128]{1,0:T(1,128)}', space=vmem, size = 0x9000, scoped, tag = 'internal scratch']
  %s0 = inlined_call_operand.vmem [shape: bf16[8,48], index: 0, kind: input, shape index: {}]
  %s1 = inlined_call_operand.vmem [shape: bf16[48,32], index: 1, kind: input, shape index: {}]
  %s2 = inlined_call_operand.vmem [shape: f32[1,32], index: 2, kind: input, shape index: {}]
  %s3 = inlined_call_operand.vmem [shape: f32[8,32], index: 3, kind: output, shape index: {}]
  %s4 = sld [smem:[#allocation0]]
  $region22: #{base_backbone_forward.5} parent=0
    _
  %s6 = ssub.s32 1, %s4
  %s7 = scalar_select 0, %s6, %s4
  // Predicated region
  $region2: #{base_backbone_forward.5} parent=0 // pred_check
    _
  $region3: #{base_backbone_forward.5} parent=0 // pred_check_branch
    %9 = sbr.rel (0) target = $region5
  $region4: #{base_backbone_forward.5} parent=0 // pred_region
    _
  $region5: #{base_backbone_forward.5} parent=0 // pred_fallthru
    _
  // Predicated region
  $region6: #{base_backbone_forward.5} parent=0 // pred_check
    _
  $region7: #{base_backbone_forward.5} parent=0 // pred_check_branch
    %11 = sbr.rel (0) target = $region9
  $region8: #{base_backbone_forward.5} parent=0 // pred_region
    _
  $region9: #{base_backbone_forward.5} parent=0 // pred_fallthru
    _
  // Predicated region
  $region10: #{base_backbone_forward.5} parent=0 // pred_check
    _
  $region11: #{base_backbone_forward.5} parent=0 // pred_check_branch
    %13 = sbr.rel (0) target = $region13
  $region12: #{base_backbone_forward.5} parent=0 // pred_region
    _
  $region13: #{base_backbone_forward.5} parent=0 // pred_fallthru
    _
  %v15 = vld [vmem:[%s0] sm:$0xf]
  %v16 = vld [vmem:[%s1] sm:$0xf]
  %v17 = vld [vmem:[%s1 + $0x4] sm:$0xf]
  %v18 = vld [vmem:[%s1 + $0x8] sm:$0xf]
  %v19 = vld [vmem:[%s1 + $0xc] sm:$0xf]
  %v20 = vld [vmem:[%s1 + $0x10] sm:$0xf]
  %v21 = vld [vmem:[%s1 + $0x14] sm:$0xf]
  %v22 = vld [vmem:[%s2] sm:$0x1]
  %v24 = vperm.slane %v22, 0
  %v32 = vunpack.c.l.b16 %v16
  %v33 = vunpack.c.l.b16 %v17
  %v34 = vunpack.c.l.b16 %v18
  %v35 = vunpack.c.l.b16 %v19
  %v36 = vunpack.c.l.b16 %v20
  %v37 = vunpack.c.l.b16 %v21
  %v38 = vpack.c.b16 %v33, %v32
  %v39 = vpack.c.b16 %v35, %v34
  %v40 = vpack.c.b16 %v37, %v36
  %vm44 = vcmask 392192
  %v46 = vsel %vm44, %v15, 0
  %48 = vmatpush.bf16.msra.mxu0 0
  %49 = vmatpush.bf16.msra.mxu0 0
  %50 = vmatpush.bf16.msra.mxu0 0
  %51 = vmatpush.bf16.msra.mxu0 0
  %52 = vmatpush.bf16.msra.mxu0 0
  %53 = vmatpush.bf16.msra.mxu0 %v40
  %54 = vmatpush.bf16.msra.mxu0 %v39
  %55 = vmatpush.bf16.msra.mxu0 %v38
  %56 = vmatmul.bf16.gmra.mxu0 %v46
  %v57 = vpop.f32.mrf.mxu0
  %v58 = vadd.f32 %v24, %v57
  %v59 = vpop.f32.mrf.mxu0
  %60 = vdwg.mxu0
  %vm61 = vcmask 261120
  %62 = vst.msk [vmem:[%s3] sm:$0xff] %vm61, %v58
  // Predicated region
  $region14: #{base_backbone_forward.5} parent=0 // pred_check
    _
  $region15: #{base_backbone_forward.5} parent=0 // pred_check_branch
    %64 = sbr.rel (0) target = $region17
  $region16: #{base_backbone_forward.5} parent=0 // pred_region
    _
  $region17: #{base_backbone_forward.5} parent=0 // pred_fallthru
    _
  // Predicated region
  $region18: #{base_backbone_forward.5} parent=0 // pred_check
    _
  $region19: #{base_backbone_forward.5} parent=0 // pred_check_branch
    %66 = sbr.rel (0) target = $region21
  $region20: #{base_backbone_forward.5} parent=0 // pred_region
    _
  $region21: #{base_backbone_forward.5} parent=0 // pred_fallthru
    _

// kernel: closed_call.20
$region0: #{closed_call.20}
  #allocation0 [shape = 'u32[]', space=smem, size = 0x4, offset = 0x4, fixed_abs, tag = 'smem constant byte address 0x4 - core index']
  #allocation1 [shape = 'u32[72,128]{1,0:T(1,128)}', space=vmem, size = 0x9000, scoped, tag = 'internal scratch']
  %s0 = inlined_call_operand.vmem [shape: bf16[40,32], index: 0, kind: input, shape index: {}]
  %s1 = inlined_call_operand.vmem [shape: bf16[32,32], index: 1, kind: input, shape index: {}]
  %s2 = inlined_call_operand.vmem [shape: f32[1,32], index: 2, kind: input, shape index: {}]
  %s3 = inlined_call_operand.vmem [shape: bf16[40,32], index: 3, kind: input, shape index: {}]
  %s4 = inlined_call_operand.vmem [shape: bf16[40,32], index: 4, kind: output, shape index: {}]
  %s5 = sld [smem:[#allocation0]]
  $region26: #{closed_call.20} parent=0
    _
  %s7 = ssub.s32 1, %s5
  %s8 = scalar_select 0, %s7, %s5
  // Predicated region
  $region2: #{closed_call.20} parent=0 // pred_check
    _
  $region3: #{closed_call.20} parent=0 // pred_check_branch
    %10 = sbr.rel (0) target = $region5
  $region4: #{closed_call.20} parent=0 // pred_region
    _
  $region5: #{closed_call.20} parent=0 // pred_fallthru
    _
  // Predicated region
  $region6: #{closed_call.20} parent=0 // pred_check
    _
  $region7: #{closed_call.20} parent=0 // pred_check_branch
    %12 = sbr.rel (0) target = $region9
  $region8: #{closed_call.20} parent=0 // pred_region
    _
  $region9: #{closed_call.20} parent=0 // pred_fallthru
    _
  // Predicated region
  $region10: #{closed_call.20} parent=0 // pred_check
    _
  $region11: #{closed_call.20} parent=0 // pred_check_branch
    %14 = sbr.rel (0) target = $region13
  $region12: #{closed_call.20} parent=0 // pred_region
    _
  $region13: #{closed_call.20} parent=0 // pred_fallthru
    _
  // Predicated region
  $region14: #{closed_call.20} parent=0 // pred_check
    _
  $region15: #{closed_call.20} parent=0 // pred_check_branch
    %16 = sbr.rel (0) target = $region17
  $region16: #{closed_call.20} parent=0 // pred_region
    _
  $region17: #{closed_call.20} parent=0 // pred_fallthru
    _
  %v18 = vld [vmem:[%s0] sm:$0xf]
  %v19 = vld [vmem:[%s0 + $0x4] sm:$0xf]
  %v20 = vld [vmem:[%s0 + $0x8] sm:$0xf]
  %v21 = vld [vmem:[%s0 + $0xc] sm:$0xf]
  %v22 = vld [vmem:[%s0 + $0x10] sm:$0xf]
  %v23 = vld [vmem:[%s1] sm:$0xf]
  %v24 = vld [vmem:[%s1 + $0x4] sm:$0xf]
  %v25 = vld [vmem:[%s1 + $0x8] sm:$0xf]
  %v26 = vld [vmem:[%s1 + $0xc] sm:$0xf]
  %v27 = vld [vmem:[%s2] sm:$0x1]
  %v29 = vperm.slane %v27, 0
  %v36 = vunpack.c.l.b16 %v18
  %v37 = vunpack.c.l.b16 %v19
  %v38 = vunpack.c.l.b16 %v20
  %v39 = vunpack.c.l.b16 %v21
  %v40 = vunpack.c.l.b16 %v22
  %v41 = vpack.c.b16 %v37, %v36
  %v42 = vpack.c.b16 %v39, %v38
  %v43 = vpack.c.b16 %v40, %v40
  %v48 = vunpack.c.l.b16 %v23
  %v49 = vunpack.c.l.b16 %v24
  %v50 = vunpack.c.l.b16 %v25
  %v51 = vunpack.c.l.b16 %v26
  %v52 = vpack.c.b16 %v49, %v48
  %v53 = vpack.c.b16 %v51, %v50
  %vm56 = vcmask 261120
  %v58 = vsel %vm56, %v41, 0
  %v61 = vsel %vm56, %v42, 0
  %v64 = vsel %vm56, %v43, 0
  %66 = vmatpush.bf16.msra.mxu0 0
  %67 = vmatpush.bf16.msra.mxu0 0
  %68 = vmatpush.bf16.msra.mxu0 0
  %69 = vmatpush.bf16.msra.mxu0 0
  %70 = vmatpush.bf16.msra.mxu0 0
  %71 = vmatpush.bf16.msra.mxu0 0
  %72 = vmatpush.bf16.msra.mxu0 %v53
  %73 = vmatpush.bf16.msra.mxu0 %v52
  %74 = vmatmul.bf16.gmra.mxu0 %v58
  %v75 = vpop.f32.mrf.mxu0
  %v76 = vadd.f32 %v29, %v75
  %v77 = vpop.f32.mrf.mxu0
  %v78 = vadd.f32 %v29, %v77
  %79 = vmatmul.bf16.gmra.mxu0 %v61
  %v80 = vpop.f32.mrf.mxu0
  %v81 = vadd.f32 %v29, %v80
  %v82 = vpop.f32.mrf.mxu0
  %v83 = vadd.f32 %v29, %v82
  %84 = vmatmul.bf16.gmra.mxu0 %v64
  %v85 = vpop.f32.mrf.mxu0
  %v86 = vadd.f32 %v29, %v85
  %v87 = vpop.f32.mrf.mxu0
  %88 = vdwg.mxu0
  %v89 = vld [vmem:[%s3] sm:$0xf]
  %v90 = vld [vmem:[%s3 + $0x4] sm:$0xf]
  %v91 = vld [vmem:[%s3 + $0x8] sm:$0xf]
  %v92 = vld [vmem:[%s3 + $0xc] sm:$0xf]
  %v93 = vld [vmem:[%s3 + $0x10] sm:$0xf]
  %v94 = vunpack.c.l.bf16 %v89
  %v95 = vunpack.c.l.bf16 %v90
  %v96 = vunpack.c.l.bf16 %v91
  %v97 = vunpack.c.l.bf16 %v92
  %v98 = vunpack.c.l.bf16 %v93
  %v99 = vadd.f32 %v76, %v94
  %v100 = vadd.f32 %v78, %v95
  %v101 = vadd.f32 %v81, %v96
  %v102 = vadd.f32 %v83, %v97
  %v103 = vadd.f32 %v86, %v98
  %v104 = vpack.c.bf16 %v99, %v99
  %v105 = vpack.c.bf16 %v100, %v100
  %v106 = vpack.c.bf16 %v101, %v101
  %v107 = vpack.c.bf16 %v102, %v102
  %v108 = vpack.c.bf16 %v103, %v103
  %vm109 = vcmask 257024
  %110 = vst.msk [vmem:[%s4] sm:$0xf] %vm109, %v104
  %111 = vst.msk [vmem:[%s4 + $0x4] sm:$0xf] %vm109, %v105
  %112 = vst.msk [vmem:[%s4 + $0x8] sm:$0xf] %vm109, %v106
  %113 = vst.msk [vmem:[%s4 + $0xc] sm:$0xf] %vm109, %v107
  %114 = vst.msk [vmem:[%s4 + $0x10] sm:$0xf] %vm109, %v108
  // Predicated region
  $region18: #{closed_call.20} parent=0 // pred_check
    _
  $region19: #{closed_call.20} parent=0 // pred_check_branch
    %116 = sbr.rel (0) target = $region21
  $region20: #{closed_call.20} parent=0 // pred_region
    _
  $region21: #{closed_call.20} parent=0 // pred_fallthru
    _
  // Predicated region
  $region22: #{closed_call.20} parent=0 // pred_check
    _
  $region23: #{closed_call.20} parent=0 // pred_check_branch
    %118 = sbr.rel (0) target = $region25
  $region24: #{closed_call.20} parent=0 // pred_region
    _
  $region25: #{closed_call.20} parent=0 // pred_fallthru
    _

// kernel: closed_call.18
$region0: #{closed_call.18}
  #allocation0 [shape = 'u32[]', space=smem, size = 0x4, offset = 0x4, fixed_abs, tag = 'smem constant byte address 0x4 - core index']
  #allocation1 [shape = 'u32[72,128]{1,0:T(1,128)}', space=vmem, size = 0x9000, scoped, tag = 'internal scratch']
  #allocation2 [shape = 'f32[1]{0:T(128)S(6)}', space=smem, size = 0x200, scoped, tag = 'scoped memory for closed_call.18']
  %s0 = inlined_call_operand.vmem [shape: bf16[40,32], index: 0, kind: input, shape index: {}]
  %s1 = inlined_call_operand.vmem [shape: bf16[40,32], index: 1, kind: input, shape index: {}]
  %s2 = inlined_call_operand.vmem [shape: f32[40,1], index: 2, kind: input, shape index: {}]
  %s3 = inlined_call_operand.<no memory space> [shape: f32[1], index: 3, kind: input, shape index: {}]
  %s4 = inlined_call_operand.vmem [shape: f32[1,32], index: 4, kind: input, shape index: {}]
  %s5 = inlined_call_operand.vmem [shape: f32[1,32], index: 5, kind: input, shape index: {}]
  %s6 = inlined_call_operand.vmem [shape: f32[1,32], index: 6, kind: input, shape index: {}]
  %s7 = inlined_call_operand.vmem [shape: f32[1,32], index: 7, kind: input, shape index: {}]
  %s8 = inlined_call_operand.vmem [shape: bf16[32,96], index: 8, kind: input, shape index: {}]
  %s9 = inlined_call_operand.vmem [shape: f32[1,96], index: 9, kind: input, shape index: {}]
  %s10 = inlined_call_operand.vmem [shape: bf16[40,32], index: 10, kind: output, shape index: {0}]
  %s11 = inlined_call_operand.vmem [shape: bf16[40,32], index: 11, kind: output, shape index: {1}]
  %s12 = inlined_call_operand.vmem [shape: bf16[40,32], index: 12, kind: output, shape index: {2}]
  %s13 = inlined_call_operand.vmem [shape: bf16[40,32], index: 13, kind: output, shape index: {3}]
  %s14 = inlined_call_operand.vmem [shape: bf16[40,32], index: 14, kind: output, shape index: {4}]
  %15 = xla_tuple %s10, %s11, %s12, %s13, %s14
  %s16 = sld [smem:[#allocation0]]
  $region82: #{closed_call.18} parent=0
    _
  %s18 = ssub.s32 1, %s16
  %s19 = scalar_select 0, %s18, %s16
  %20 = sst [smem:[#allocation2]] %s3
  // Predicated region
  $region2: #{closed_call.18} parent=0 // pred_check
    _
  $region3: #{closed_call.18} parent=0 // pred_check_branch
    %22 = sbr.rel (0) target = $region5
  $region4: #{closed_call.18} parent=0 // pred_region
    _
  $region5: #{closed_call.18} parent=0 // pred_fallthru
    _
  // Predicated region
  $region6: #{closed_call.18} parent=0 // pred_check
    _
  $region7: #{closed_call.18} parent=0 // pred_check_branch
    %24 = sbr.rel (0) target = $region9
  $region8: #{closed_call.18} parent=0 // pred_region
    _
  $region9: #{closed_call.18} parent=0 // pred_fallthru
    _
  // Predicated region
  $region10: #{closed_call.18} parent=0 // pred_check
    _
  $region11: #{closed_call.18} parent=0 // pred_check_branch
    %26 = sbr.rel (0) target = $region13
  $region12: #{closed_call.18} parent=0 // pred_region
    _
  $region13: #{closed_call.18} parent=0 // pred_fallthru
    _
  // Predicated region
  $region14: #{closed_call.18} parent=0 // pred_check
    _
  $region15: #{closed_call.18} parent=0 // pred_check_branch
    %28 = sbr.rel (0) target = $region17
  $region16: #{closed_call.18} parent=0 // pred_region
    _
  $region17: #{closed_call.18} parent=0 // pred_fallthru
    _
  // Predicated region
  $region18: #{closed_call.18} parent=0 // pred_check
    _
  $region19: #{closed_call.18} parent=0 // pred_check_branch
    %30 = sbr.rel (0) target = $region21
  $region20: #{closed_call.18} parent=0 // pred_region
    _
  $region21: #{closed_call.18} parent=0 // pred_fallthru
    _
  // Predicated region
  $region22: #{closed_call.18} parent=0 // pred_check
    _
  $region23: #{closed_call.18} parent=0 // pred_check_branch
    %32 = sbr.rel (0) target = $region25
  $region24: #{closed_call.18} parent=0 // pred_region
    _
  $region25: #{closed_call.18} parent=0 // pred_fallthru
    _
  // Predicated region
  $region26: #{closed_call.18} parent=0 // pred_check
    _
  $region27: #{closed_call.18} parent=0 // pred_check_branch
    %34 = sbr.rel (0) target = $region29
  $region28: #{closed_call.18} parent=0 // pred_region
    _
  $region29: #{closed_call.18} parent=0 // pred_fallthru
    _
  // Predicated region
  $region30: #{closed_call.18} parent=0 // pred_check
    _
  $region31: #{closed_call.18} parent=0 // pred_check_branch
    %36 = sbr.rel (0) target = $region33
  $region32: #{closed_call.18} parent=0 // pred_region
    _
  $region33: #{closed_call.18} parent=0 // pred_fallthru
    _
  // Predicated region
  $region34: #{closed_call.18} parent=0 // pred_check
    _
  $region35: #{closed_call.18} parent=0 // pred_check_branch
    %38 = sbr.rel (0) target = $region37
  $region36: #{closed_call.18} parent=0 // pred_region
    _
  $region37: #{closed_call.18} parent=0 // pred_fallthru
    _
  // Predicated region
  $region38: #{closed_call.18} parent=0 // pred_check
    _
  $region39: #{closed_call.18} parent=0 // pred_check_branch
    %40 = sbr.rel (0) target = $region41
  $region40: #{closed_call.18} parent=0 // pred_region
    _
  $region41: #{closed_call.18} parent=0 // pred_fallthru
    _
  %v42 = vld [vmem:[%s0] sm:$0xf]
  %v43 = vld [vmem:[%s0 + $0x4] sm:$0xf]
  %v44 = vld [vmem:[%s0 + $0x8] sm:$0xf]
  %v45 = vld [vmem:[%s0 + $0xc] sm:$0xf]
  %v46 = vld [vmem:[%s0 + $0x10] sm:$0xf]
  %v47 = vunpack.c.l.bf16 %v42
  %v48 = vunpack.c.l.bf16 %v43
  %v49 = vunpack.c.l.bf16 %v44
  %v50 = vunpack.c.l.bf16 %v45
  %v51 = vunpack.c.l.bf16 %v46
  %vm52 = vcmask 261120
  %v53 = vsel %vm52, %v47, 0.0
  %54 = vadd.xlane.f32.xlu0 %v53
  %v55 = vpop.xlane.xlu0 %54
  %v56 = vsel %vm52, %v48, 0.0
  %57 = vadd.xlane.f32.xlu0 %v56
  %v58 = vpop.xlane.xlu0 %57
  %v59 = vsel %vm52, %v49, 0.0
  %60 = vadd.xlane.f32.xlu0 %v59
  %v61 = vpop.xlane.xlu0 %60
  %v62 = vsel %vm52, %v50, 0.0
  %63 = vadd.xlane.f32.xlu0 %v62
  %v64 = vpop.xlane.xlu0 %63
  %v65 = vsel %vm52, %v51, 0.0
  %66 = vadd.xlane.f32.xlu0 %v65
  %v67 = vpop.xlane.xlu0 %66
  %v68 = vrcp.pop 32.0
  %v69 = vmul.f32 32.0, %v68
  %v70 = vsub.f32 1.0, %v69
  %v71 = vmul.f32 %v68, %v70
  %v72 = vadd.f32 %v68, %v71
  %vm73 = vweird.f32 %v68
  %v74 = vsel %vm73, %v68, %v72
  %v75 = vmul.f32 %v55, %v74
  %v76 = vmul.f32 %v58, %v74
  %v77 = vmul.f32 %v61, %v74
  %v78 = vmul.f32 %v64, %v74
  %v79 = vmul.f32 %v67, %v74
  %v80 = vsub.f32 %v47, %v75
  %v81 = vsub.f32 %v48, %v76
  %v82 = vsub.f32 %v49, %v77
  %v83 = vsub.f32 %v50, %v78
  %v84 = vsub.f32 %v51, %v79
  %v85 = vmul.f32 %v80, %v80
  %v86 = vmul.f32 %v81, %v81
  %v87 = vmul.f32 %v82, %v82
  %v88 = vmul.f32 %v83, %v83
  %v89 = vmul.f32 %v84, %v84
  %v90 = vsel %vm52, %v85, 0.0
  %91 = vadd.xlane.f32.xlu0 %v90
  %v92 = vpop.xlane.xlu0 %91
  %v93 = vsel %vm52, %v86, 0.0
  %94 = vadd.xlane.f32.xlu0 %v93
  %v95 = vpop.xlane.xlu0 %94
  %v96 = vsel %vm52, %v87, 0.0
  %97 = vadd.xlane.f32.xlu0 %v96
  %v98 = vpop.xlane.xlu0 %97
  %v99 = vsel %vm52, %v88, 0.0
  %100 = vadd.xlane.f32.xlu0 %v99
  %v101 = vpop.xlane.xlu0 %100
  %v102 = vsel %vm52, %v89, 0.0
  %103 = vadd.xlane.f32.xlu0 %v102
  %v104 = vpop.xlane.xlu0 %103
  %v105 = vmul.f32 %v92, %v74
  %v106 = vmul.f32 %v95, %v74
  %v107 = vmul.f32 %v98, %v74
  %v108 = vmul.f32 %v101, %v74
  %v109 = vmul.f32 %v104, %v74
  %v110 = vadd.f32 %v105, 1e-06
  %v111 = vadd.f32 %v106, 1e-06
  %v112 = vadd.f32 %v107, 1e-06
  %v113 = vadd.f32 %v108, 1e-06
  %v114 = vadd.f32 %v109, 1e-06
  %v115 = vrsqrt.pop %v110
  %v116 = vmul.f32 %v115, %v110
  %v117 = vmul.f32 %v116, %v115
  %v118 = vmul.f32 0.5, %v117
  %v119 = vsub.f32 1.5, %v118
  %v120 = vmul.f32 %v115, %v119
  %vm121 = vweird.f32 %v110
  %vm122 = vweird.f32 %v115
  %vm123 = vmor %vm121, %vm122
  %v124 = vsel %vm123, %v115, %v120
  %v125 = vrsqrt.pop %v111
  %v126 = vmul.f32 %v125, %v111
  %v127 = vmul.f32 %v126, %v125
  %v128 = vmul.f32 0.5, %v127
  %v129 = vsub.f32 1.5, %v128
  %v130 = vmul.f32 %v125, %v129
  %vm131 = vweird.f32 %v111
  %vm132 = vweird.f32 %v125
  %vm133 = vmor %vm131, %vm132
  %v134 = vsel %vm133, %v125, %v130
  %v135 = vrsqrt.pop %v112
  %v136 = vmul.f32 %v135, %v112
  %v137 = vmul.f32 %v136, %v135
  %v138 = vmul.f32 0.5, %v137
  %v139 = vsub.f32 1.5, %v138
  %v140 = vmul.f32 %v135, %v139
  %vm141 = vweird.f32 %v112
  %vm142 = vweird.f32 %v135
  %vm143 = vmor %vm141, %vm142
  %v144 = vsel %vm143, %v135, %v140
  %v145 = vrsqrt.pop %v113
  %v146 = vmul.f32 %v145, %v113
  %v147 = vmul.f32 %v146, %v145
  %v148 = vmul.f32 0.5, %v147
  %v149 = vsub.f32 1.5, %v148
  %v150 = vmul.f32 %v145, %v149
  %vm151 = vweird.f32 %v113
  %vm152 = vweird.f32 %v145
  %vm153 = vmor %vm151, %vm152
  %v154 = vsel %vm153, %v145, %v150
  %v155 = vrsqrt.pop %v114
  %v156 = vmul.f32 %v155, %v114
  %v157 = vmul.f32 %v156, %v155
  %v158 = vmul.f32 0.5, %v157
  %v159 = vsub.f32 1.5, %v158
  %v160 = vmul.f32 %v155, %v159
  %vm161 = vweird.f32 %v114
  %vm162 = vweird.f32 %v155
  %vm163 = vmor %vm161, %vm162
  %v164 = vsel %vm163, %v155, %v160
  %v165 = vmul.f32 %v80, %v124
  %v166 = vmul.f32 %v81, %v134
  %v167 = vmul.f32 %v82, %v144
  %v168 = vmul.f32 %v83, %v154
  %v169 = vmul.f32 %v84, %v164
  %v170 = vld [vmem:[%s4] sm:$0x1]
  %v172 = vperm.slane %v170, 0
  %v174 = vmul.f32 %v165, %v172
  %v175 = vmul.f32 %v166, %v172
  %v176 = vmul.f32 %v167, %v172
  %v177 = vmul.f32 %v168, %v172
  %v178 = vmul.f32 %v169, %v172
  %v179 = vld [vmem:[%s5] sm:$0x1]
  %v181 = vperm.slane %v179, 0
  %v183 = vadd.f32 %v174, %v181
  %v184 = vadd.f32 %v175, %v181
  %v185 = vadd.f32 %v176, %v181
  %v186 = vadd.f32 %v177, %v181
  %v187 = vadd.f32 %v178, %v181
  %s188 = sld [smem:[#allocation2]]
  %s189 = ssub.f32 1.0, %s188
  %v190 = vstv %s189
  %v191 = vmul.f32 %v190, %v183
  %v192 = vmul.f32 %v190, %v184
  %v193 = vmul.f32 %v190, %v185
  %v194 = vmul.f32 %v190, %v186
  %v195 = vmul.f32 %v190, %v187
  %v196 = vld [vmem:[%s1] sm:$0xf]
  %v197 = vld [vmem:[%s1 + $0x4] sm:$0xf]
  %v198 = vld [vmem:[%s1 + $0x8] sm:$0xf]
  %v199 = vld [vmem:[%s1 + $0xc] sm:$0xf]
  %v200 = vld [vmem:[%s1 + $0x10] sm:$0xf]
  %v201 = vunpack.c.l.bf16 %v196
  %v202 = vunpack.c.l.bf16 %v197
  %v203 = vunpack.c.l.bf16 %v198
  %v204 = vunpack.c.l.bf16 %v199
  %v205 = vunpack.c.l.bf16 %v200
  %v206 = vstv %s188
  %v207 = vmul.f32 %v206, %v201
  %v208 = vmul.f32 %v206, %v202
  %v209 = vmul.f32 %v206, %v203
  %v210 = vmul.f32 %v206, %v204
  %v211 = vmul.f32 %v206, %v205
  %v212 = vadd.f32 %v191, %v207
  %v213 = vadd.f32 %v192, %v208
  %v214 = vadd.f32 %v193, %v209
  %v215 = vadd.f32 %v194, %v210
  %v216 = vadd.f32 %v195, %v211
  %v217 = vpack.c.bf16 %v212, %v212
  %v218 = vpack.c.bf16 %v213, %v213
  %v219 = vpack.c.bf16 %v214, %v214
  %v220 = vpack.c.bf16 %v215, %v215
  %v221 = vpack.c.bf16 %v216, %v216
  %vm222 = vcmask 257024
  %223 = vst.msk [vmem:[%s14] sm:$0xf] %vm222, %v217
  %224 = vst.msk [vmem:[%s14 + $0x4] sm:$0xf] %vm222, %v218
  %225 = vst.msk [vmem:[%s14 + $0x8] sm:$0xf] %vm222, %v219
  %226 = vst.msk [vmem:[%s14 + $0xc] sm:$0xf] %vm222, %v220
  %227 = vst.msk [vmem:[%s14 + $0x10] sm:$0xf] %vm222, %v221
  %v228 = vld [vmem:[%s2] sm:$0xff]
  %v229 = vld [vmem:[%s2 + $0x8] sm:$0xff]
  %v230 = vld [vmem:[%s2 + $0x10] sm:$0xff]
  %v231 = vld [vmem:[%s2 + $0x18] sm:$0xff]
  %v232 = vld [vmem:[%s2 + $0x20] sm:$0xff]
  %234 = vset.pattern.permute.xlu0 0
  %235 = vperm.xlu0 %234, %v228
  %v236 = vpop.permute.xlu0 %235
  %239 = vset.pattern.permute.xlu0 0
  %240 = vperm.xlu0 %239, %v229
  %v241 = vpop.permute.xlu0 %240
  %244 = vset.pattern.permute.xlu0 0
  %245 = vperm.xlu0 %244, %v230
  %v246 = vpop.permute.xlu0 %245
  %249 = vset.pattern.permute.xlu0 0
  %250 = vperm.xlu0 %249, %v231
  %v251 = vpop.permute.xlu0 %250
  %254 = vset.pattern.permute.xlu0 0
  %255 = vperm.xlu0 %254, %v232
  %v256 = vpop.permute.xlu0 %255
  %v258 = vmul.f32 %v236, %v212
  %v259 = vmul.f32 %v241, %v213
  %v260 = vmul.f32 %v246, %v214
  %v261 = vmul.f32 %v251, %v215
  %v262 = vmul.f32 %v256, %v216
  %v263 = vadd.f32 %v258, %v47
  %v264 = vadd.f32 %v259, %v48
  %v265 = vadd.f32 %v260, %v49
  %v266 = vadd.f32 %v261, %v50
  %v267 = vadd.f32 %v262, %v51
  %v268 = vpack.c.bf16 %v263, %v263
  %v269 = vpack.c.bf16 %v264, %v264
  %v270 = vpack.c.bf16 %v265, %v265
  %v271 = vpack.c.bf16 %v266, %v266
  %v272 = vpack.c.bf16 %v267, %v267
  %273 = vst.msk [vmem:[%s13] sm:$0xf] %vm222, %v268
  %274 = vst.msk [vmem:[%s13 + $0x4] sm:$0xf] %vm222, %v269
  %275 = vst.msk [vmem:[%s13 + $0x8] sm:$0xf] %vm222, %v270
  %276 = vst.msk [vmem:[%s13 + $0xc] sm:$0xf] %vm222, %v271
  %277 = vst.msk [vmem:[%s13 + $0x10] sm:$0xf] %vm222, %v272
  %v278 = vsel %vm52, %v263, 0.0
  %279 = vadd.xlane.f32.xlu0 %v278
  %v280 = vpop.xlane.xlu0 %279
  %v281 = vsel %vm52, %v264, 0.0
  %282 = vadd.xlane.f32.xlu0 %v281
  %v283 = vpop.xlane.xlu0 %282
  %v284 = vsel %vm52, %v265, 0.0
  %285 = vadd.xlane.f32.xlu0 %v284
  %v286 = vpop.xlane.xlu0 %285
  %v287 = vsel %vm52, %v266, 0.0
  %288 = vadd.xlane.f32.xlu0 %v287
  %v289 = vpop.xlane.xlu0 %288
  %v290 = vsel %vm52, %v267, 0.0
  %291 = vadd.xlane.f32.xlu0 %v290
  %v292 = vpop.xlane.xlu0 %291
  %v293 = vmul.f32 %v280, %v74
  %v294 = vmul.f32 %v283, %v74
  %v295 = vmul.f32 %v286, %v74
  %v296 = vmul.f32 %v289, %v74
  %v297 = vmul.f32 %v292, %v74
  %v298 = vsub.f32 %v263, %v293
  %v299 = vsub.f32 %v264, %v294
  %v300 = vsub.f32 %v265, %v295
  %v301 = vsub.f32 %v266, %v296
  %v302 = vsub.f32 %v267, %v297
  %v303 = vmul.f32 %v298, %v298
  %v304 = vmul.f32 %v299, %v299
  %v305 = vmul.f32 %v300, %v300
  %v306 = vmul.f32 %v301, %v301
  %v307 = vmul.f32 %v302, %v302
  %v308 = vsel %vm52, %v303, 0.0
  %309 = vadd.xlane.f32.xlu0 %v308
  %v310 = vpop.xlane.xlu0 %309
  %v311 = vsel %vm52, %v304, 0.0
  %312 = vadd.xlane.f32.xlu0 %v311
  %v313 = vpop.xlane.xlu0 %312
  %v314 = vsel %vm52, %v305, 0.0
  %315 = vadd.xlane.f32.xlu0 %v314
  %v316 = vpop.xlane.xlu0 %315
  %v317 = vsel %vm52, %v306, 0.0
  %318 = vadd.xlane.f32.xlu0 %v317
  %v319 = vpop.xlane.xlu0 %318
  %v320 = vsel %vm52, %v307, 0.0
  %321 = vadd.xlane.f32.xlu0 %v320
  %v322 = vpop.xlane.xlu0 %321
  %v323 = vmul.f32 %v310, %v74
  %v324 = vmul.f32 %v313, %v74
  %v325 = vmul.f32 %v316, %v74
  %v326 = vmul.f32 %v319, %v74
  %v327 = vmul.f32 %v322, %v74
  %v328 = vadd.f32 %v323, 1e-06
  %v329 = vadd.f32 %v324, 1e-06
  %v330 = vadd.f32 %v325, 1e-06
  %v331 = vadd.f32 %v326, 1e-06
  %v332 = vadd.f32 %v327, 1e-06
  %v333 = vrsqrt.pop %v328
  %v334 = vmul.f32 %v333, %v328
  %v335 = vmul.f32 %v334, %v333
  %v336 = vmul.f32 0.5, %v335
  %v337 = vsub.f32 1.5, %v336
  %v338 = vmul.f32 %v333, %v337
  %vm339 = vweird.f32 %v328
  %vm340 = vweird.f32 %v333
  %vm341 = vmor %vm339, %vm340
  %v342 = vsel %vm341, %v333, %v338
  %v343 = vrsqrt.pop %v329
  %v344 = vmul.f32 %v343, %v329
  %v345 = vmul.f32 %v344, %v343
  %v346 = vmul.f32 0.5, %v345
  %v347 = vsub.f32 1.5, %v346
  %v348 = vmul.f32 %v343, %v347
  %vm349 = vweird.f32 %v329
  %vm350 = vweird.f32 %v343
  %vm351 = vmor %vm349, %vm350
  %v352 = vsel %vm351, %v343, %v348
  %v353 = vrsqrt.pop %v330
  %v354 = vmul.f32 %v353, %v330
  %v355 = vmul.f32 %v354, %v353
  %v356 = vmul.f32 0.5, %v355
  %v357 = vsub.f32 1.5, %v356
  %v358 = vmul.f32 %v353, %v357
  %vm359 = vweird.f32 %v330
  %vm360 = vweird.f32 %v353
  %vm361 = vmor %vm359, %vm360
  %v362 = vsel %vm361, %v353, %v358
  %v363 = vrsqrt.pop %v331
  %v364 = vmul.f32 %v363, %v331
  %v365 = vmul.f32 %v364, %v363
  %v366 = vmul.f32 0.5, %v365
  %v367 = vsub.f32 1.5, %v366
  %v368 = vmul.f32 %v363, %v367
  %vm369 = vweird.f32 %v331
  %vm370 = vweird.f32 %v363
  %vm371 = vmor %vm369, %vm370
  %v372 = vsel %vm371, %v363, %v368
  %v373 = vrsqrt.pop %v332
  %v374 = vmul.f32 %v373, %v332
  %v375 = vmul.f32 %v374, %v373
  %v376 = vmul.f32 0.5, %v375
  %v377 = vsub.f32 1.5, %v376
  %v378 = vmul.f32 %v373, %v377
  %vm379 = vweird.f32 %v332
  %vm380 = vweird.f32 %v373
  %vm381 = vmor %vm379, %vm380
  %v382 = vsel %vm381, %v373, %v378
  %v383 = vmul.f32 %v298, %v342
  %v384 = vmul.f32 %v299, %v352
  %v385 = vmul.f32 %v300, %v362
  %v386 = vmul.f32 %v301, %v372
  %v387 = vmul.f32 %v302, %v382
  %v388 = vld [vmem:[%s6] sm:$0x1]
  %v390 = vperm.slane %v388, 0
  %v392 = vmul.f32 %v383, %v390
  %v393 = vmul.f32 %v384, %v390
  %v394 = vmul.f32 %v385, %v390
  %v395 = vmul.f32 %v386, %v390
  %v396 = vmul.f32 %v387, %v390
  %v397 = vld [vmem:[%s7] sm:$0x1]
  %v399 = vperm.slane %v397, 0
  %v401 = vadd.f32 %v392, %v399
  %v402 = vadd.f32 %v393, %v399
  %v403 = vadd.f32 %v394, %v399
  %v404 = vadd.f32 %v395, %v399
  %v405 = vadd.f32 %v396, %v399
  %v406 = vpack.c.bf16 %v402, %v401
  %v407 = vpack.c.bf16 %v404, %v403
  %v408 = vpack.c.bf16 %v405, %v405
  %v409 = vld [vmem:[%s8] sm:$0xf]
  %v410 = vld [vmem:[%s8 + $0x4] sm:$0xf]
  %v411 = vld [vmem:[%s8 + $0x8] sm:$0xf]
  %v412 = vld [vmem:[%s8 + $0xc] sm:$0xf]
  %v413 = vld [vmem:[%s9] sm:$0x1]
  %v415 = vperm.slane %v413, 0
  %v421 = vunpack.c.l.b16 %v409
  %v422 = vunpack.c.l.b16 %v410
  %v423 = vunpack.c.l.b16 %v411
  %v424 = vunpack.c.l.b16 %v412
  %v425 = vpack.c.b16 %v422, %v421
  %v426 = vpack.c.b16 %v424, %v423
  %v430 = vsel %vm52, %v406, 0
  %v433 = vsel %vm52, %v407, 0
  %v436 = vsel %vm52, %v408, 0
  %438 = vmatpush.bf16.msra.mxu0 0
  %439 = vmatpush.bf16.msra.mxu0 0
  %440 = vmatpush.bf16.msra.mxu0 0
  %441 = vmatpush.bf16.msra.mxu0 0
  %442 = vmatpush.bf16.msra.mxu0 0
  %443 = vmatpush.bf16.msra.mxu0 0
  %444 = vmatpush.bf16.msra.mxu0 %v426
  %445 = vmatpush.bf16.msra.mxu0 %v425
  %446 = vmatmul.bf16.gmra.mxu0 %v430
  %v447 = vpop.f32.mrf.mxu0
  %v448 = vadd.f32 %v415, %v447
  %v449 = vpop.f32.mrf.mxu0
  %v450 = vadd.f32 %v415, %v449
  %451 = vmatmul.bf16.gmra.mxu0 %v433
  %v452 = vpop.f32.mrf.mxu0
  %v453 = vadd.f32 %v415, %v452
  %v454 = vpop.f32.mrf.mxu0
  %v455 = vadd.f32 %v415, %v454
  %456 = vmatmul.bf16.gmra.mxu0 %v436
  %v457 = vpop.f32.mrf.mxu0
  %v458 = vadd.f32 %v415, %v457
  %v459 = vpop.f32.mrf.mxu0
  %460 = vdwg.mxu0
  %v461 = vpack.c.bf16 %v448, %v448
  %v462 = vpack.c.bf16 %v450, %v450
  %v463 = vpack.c.bf16 %v453, %v453
  %v464 = vpack.c.bf16 %v455, %v455
  %v465 = vpack.c.bf16 %v458, %v458
  %466 = vst.msk [vmem:[%s10] sm:$0xf] %vm222, %v461
  %467 = vst.msk [vmem:[%s10 + $0x4] sm:$0xf] %vm222, %v462
  %468 = vst.msk [vmem:[%s10 + $0x8] sm:$0xf] %vm222, %v463
  %469 = vst.msk [vmem:[%s10 + $0xc] sm:$0xf] %vm222, %v464
  %470 = vst.msk [vmem:[%s10 + $0x10] sm:$0xf] %vm222, %v465
  %476 = vrot.lane.b32.xlu0 %v461, 96
  %v477 = vpop.permute.xlu0 %476
  %478 = vrot.lane.b32.xlu0 %v462, 96
  %v479 = vpop.permute.xlu0 %478
  %480 = vrot.lane.b32.xlu0 %v463, 96
  %v481 = vpop.permute.xlu0 %480
  %482 = vrot.lane.b32.xlu0 %v464, 96
  %v483 = vpop.permute.xlu0 %482
  %484 = vrot.lane.b32.xlu0 %v465, 96
  %v485 = vpop.permute.xlu0 %484
  %491 = vst.msk [vmem:[%s11] sm:$0xf] %vm222, %v477
  %492 = vst.msk [vmem:[%s11 + $0x4] sm:$0xf] %vm222, %v479
  %493 = vst.msk [vmem:[%s11 + $0x8] sm:$0xf] %vm222, %v481
  %494 = vst.msk [vmem:[%s11 + $0xc] sm:$0xf] %vm222, %v483
  %495 = vst.msk [vmem:[%s11 + $0x10] sm:$0xf] %vm222, %v485
  %496 = vrot.lane.b32.xlu0 %v461, 64
  %v497 = vpop.permute.xlu0 %496
  %498 = vrot.lane.b32.xlu0 %v462, 64
  %v499 = vpop.permute.xlu0 %498
  %500 = vrot.lane.b32.xlu0 %v463, 64
  %v501 = vpop.permute.xlu0 %500
  %502 = vrot.lane.b32.xlu0 %v464, 64
  %v503 = vpop.permute.xlu0 %502
  %504 = vrot.lane.b32.xlu0 %v465, 64
  %v505 = vpop.permute.xlu0 %504
  %511 = vst.msk [vmem:[%s12] sm:$0xf] %vm222, %v497
  %512 = vst.msk [vmem:[%s12 + $0x4] sm:$0xf] %vm222, %v499
  %513 = vst.msk [vmem:[%s12 + $0x8] sm:$0xf] %vm222, %v501
  %514 = vst.msk [vmem:[%s12 + $0xc] sm:$0xf] %vm222, %v503
  %515 = vst.msk [vmem:[%s12 + $0x10] sm:$0xf] %vm222, %v505
  // Predicated region
  $region42: #{closed_call.18} parent=0 // pred_check
    _
  $region43: #{closed_call.18} parent=0 // pred_check_branch
    %517 = sbr.rel (0) target = $region45
  $region44: #{closed_call.18} parent=0 // pred_region
    _
  $region45: #{closed_call.18} parent=0 // pred_fallthru
    _
  // Predicated region
  $region46: #{closed_call.18} parent=0 // pred_check
    _
  $region47: #{closed_call.18} parent=0 // pred_check_branch
    %519 = sbr.rel (0) target = $region49
  $region48: #{closed_call.18} parent=0 // pred_region
    _
  $region49: #{closed_call.18} parent=0 // pred_fallthru
    _
  // Predicated region
  $region50: #{closed_call.18} parent=0 // pred_check
    _
  $region51: #{closed_call.18} parent=0 // pred_check_branch
    %521 = sbr.rel (0) target = $region53
  $region52: #{closed_call.18} parent=0 // pred_region
    _
  $region53: #{closed_call.18} parent=0 // pred_fallthru
    _
  // Predicated region
  $region54: #{closed_call.18} parent=0 // pred_check
    _
  $region55: #{closed_call.18} parent=0 // pred_check_branch
    %523 = sbr.rel (0) target = $region57
  $region56: #{closed_call.18} parent=0 // pred_region
    _
  $region57: #{closed_call.18} parent=0 // pred_fallthru
    _
  // Predicated region
  $region58: #{closed_call.18} parent=0 // pred_check
    _
  $region59: #{closed_call.18} parent=0 // pred_check_branch
    %525 = sbr.rel (0) target = $region61
  $region60: #{closed_call.18} parent=0 // pred_region
    _
  $region61: #{closed_call.18} parent=0 // pred_fallthru
    _
  // Predicated region
  $region62: #{closed_call.18} parent=0 // pred_check
    _
  $region63: #{closed_call.18} parent=0 // pred_check_branch
    %527 = sbr.rel (0) target = $region65
  $region64: #{closed_call.18} parent=0 // pred_region
    _
  $region65: #{closed_call.18} parent=0 // pred_fallthru
    _
  // Predicated region
  $region66: #{closed_call.18} parent=0 // pred_check
    _
  $region67: #{closed_call.18} parent=0 // pred_check_branch
    %529 = sbr.rel (0) target = $region69
  $region68: #{closed_call.18} parent=0 // pred_region
    _
  $region69: #{closed_call.18} parent=0 // pred_fallthru
    _
  // Predicated region
  $region70: #{closed_call.18} parent=0 // pred_check
    _
  $region71: #{closed_call.18} parent=0 // pred_check_branch
    %531 = sbr.rel (0) target = $region73
  $region72: #{closed_call.18} parent=0 // pred_region
    _
  $region73: #{closed_call.18} parent=0 // pred_fallthru
    _
  // Predicated region
  $region74: #{closed_call.18} parent=0 // pred_check
    _
  $region75: #{closed_call.18} parent=0 // pred_check_branch
    %533 = sbr.rel (0) target = $region77
  $region76: #{closed_call.18} parent=0 // pred_region
    _
  $region77: #{closed_call.18} parent=0 // pred_fallthru
    _
  // Predicated region
  $region78: #{closed_call.18} parent=0 // pred_check
    _
  $region79: #{closed_call.18} parent=0 // pred_check_branch
    %535 = sbr.rel (0) target = $region81
  $region80: #{closed_call.18} parent=0 // pred_region
    _
  $region81: #{closed_call.18} parent=0 // pred_fallthru
    _

// kernel: closed_call.19
$region0: #{closed_call.19}
  #allocation0 [shape = 'u32[]', space=smem, size = 0x4, offset = 0x4, fixed_abs, tag = 'smem constant byte address 0x4 - core index']
  #allocation1 [shape = 'u32[72,128]{1,0:T(1,128)}', space=vmem, size = 0x9000, scoped, tag = 'internal scratch']
  %s0 = inlined_call_operand.vmem [shape: bf16[2,20,32], index: 0, kind: input, shape index: {}]
  %s1 = inlined_call_operand.vmem [shape: bf16[2,20,32], index: 1, kind: input, shape index: {}]
  %s2 = inlined_call_operand.vmem [shape: bf16[2,20,32], index: 2, kind: input, shape index: {}]
  %s3 = inlined_call_operand.vmem [shape: bf16[2,20,32], index: 3, kind: output, shape index: {}]
  %s4 = sld [smem:[#allocation0]]
  $region45: #{closed_call.19} parent=0
    _
  %s6 = ssub.s32 1, %s4
  %s7 = scalar_select 0, %s6, %s4
  loop: start=0, step=1, limit=4
  $region2: #{closed_call.19} parent=0 // loop_pre_header
    _
  $region3: #{closed_call.19} parent=0 // loop_header
    %s9 = sphi 0, %s13
    %p10 = scmp.ge.s32.totalorder %s9, 4
    %s16 = sphi 0, %s28
    %s17 = sphi 0, %s24
    %s18 = sphi 0, %s16
    %s19 = sphi 0, %s17
    %s20 = sphi 0, %s18
    %s21 = sphi 0, %s19
    %s33 = sphi 0, %s35
    %s36 = sphi 0, %s33
    %s37 = sphi 0, %s36
    %s53 = sphi 0, %s37
    %s61 = sphi 0, %s63
    %s64 = sphi 0, %s61
    %s65 = sphi 0, %s64
    %s81 = sphi 0, %s65
    %s89 = sphi 0, %s91
    %s92 = sphi 0, %s89
    %s93 = sphi 0, %s92
    %s109 = sphi 0, %s93
    %s117 = sphi 0, %s119
    %s120 = sphi 0, %s117
    %s121 = sphi 0, %s120
    %s137 = sphi 0, %s121
  $region4: #{closed_call.19} parent=0 // loop_header_branch
    %12 = sbr.rel (%p10) target = $region8
  $region5: #{closed_call.19} parent=0 // loop_body
    %s14 = ssub.s32 %s9, 1
    %s15 = ssub.s32 %s9, 2
    %s22 = sadd.s32 1, %s17
    %p23 = scmp.ge.s32.totalorder %s22, 1
    %s24 = scalar_select %p23, 0, %s22
    %s25 = sadd.s32 1, %s16
    %s26 = scalar_select %p23, %s25, %s16
    %p27 = scmp.ge.s32.totalorder %s26, 2
    %s28 = scalar_select %p27, 0, %s26
    %s29 = ssub.s32 %s16, %s28
    %s30 = ssub.s32 %s17, %s24
    %s31 = sor.u32 %s29, %s30
    %p32 = scmp.eq.s32.totalorder %s31, 0
    %s34 = sadd.s32 %s33, 1
    %s35 = scalar_select %p32, %s33, %s34
    %p38 = pneg %p32
    %p39 = scmp.eq.s32.totalorder %s9, 1
    %p40 = por %p38, %p39
    %p41 = scmp.ne.s32.totalorder %s33, %s36
    %p42 = scmp.eq.s32.totalorder %s9, 0
    %p43 = por %p41, %p42
    %p44 = scmp.ne.s32.totalorder %s33, %s36
    %p45 = scmp.eq.s32.totalorder %s14, 1
    %p46 = por %p44, %p45
    %p47 = scmp.ne.s32.totalorder %s36, %s37
    %p48 = scmp.eq.s32.totalorder %s14, 0
    %p49 = por %p47, %p48
    %p50 = scmp.ne.s32.totalorder %s36, %s37
    %p51 = scmp.eq.s32.totalorder %s15, 1
    %p52 = por %p50, %p51
    %p54 = scmp.ne.s32.totalorder %s37, %s53
    %p55 = scmp.eq.s32.totalorder %s15, 0
    %p56 = por %p54, %p55
    %s57 = ssub.s32 %s16, %s28
    %s58 = ssub.s32 %s17, %s24
    %s59 = sor.u32 %s57, %s58
    %p60 = scmp.eq.s32.totalorder %s59, 0
    %s62 = sadd.s32 %s61, 1
    %s63 = scalar_select %p60, %s61, %s62
    %p66 = pneg %p60
    %p67 = scmp.eq.s32.totalorder %s9, 1
    %p68 = por %p66, %p67
    %p69 = scmp.ne.s32.totalorder %s61, %s64
    %p70 = scmp.eq.s32.totalorder %s9, 0
    %p71 = por %p69, %p70
    %p72 = scmp.ne.s32.totalorder %s61, %s64
    %p73 = scmp.eq.s32.totalorder %s14, 1
    %p74 = por %p72, %p73
    %p75 = scmp.ne.s32.totalorder %s64, %s65
    %p76 = scmp.eq.s32.totalorder %s14, 0
    %p77 = por %p75, %p76
    %p78 = scmp.ne.s32.totalorder %s64, %s65
    %p79 = scmp.eq.s32.totalorder %s15, 1
    %p80 = por %p78, %p79
    %p82 = scmp.ne.s32.totalorder %s65, %s81
    %p83 = scmp.eq.s32.totalorder %s15, 0
    %p84 = por %p82, %p83
    %s85 = ssub.s32 %s16, %s28
    %s86 = ssub.s32 %s17, %s24
    %s87 = sor.u32 %s85, %s86
    %p88 = scmp.eq.s32.totalorder %s87, 0
    %s90 = sadd.s32 %s89, 1
    %s91 = scalar_select %p88, %s89, %s90
    %p94 = pneg %p88
    %p95 = scmp.eq.s32.totalorder %s9, 1
    %p96 = por %p94, %p95
    %p97 = scmp.ne.s32.totalorder %s89, %s92
    %p98 = scmp.eq.s32.totalorder %s9, 0
    %p99 = por %p97, %p98
    %p100 = scmp.ne.s32.totalorder %s89, %s92
    %p101 = scmp.eq.s32.totalorder %s14, 1
    %p102 = por %p100, %p101
    %p103 = scmp.ne.s32.totalorder %s92, %s93
    %p104 = scmp.eq.s32.totalorder %s14, 0
    %p105 = por %p103, %p104
    %p106 = scmp.ne.s32.totalorder %s92, %s93
    %p107 = scmp.eq.s32.totalorder %s15, 1
    %p108 = por %p106, %p107
    %p110 = scmp.ne.s32.totalorder %s93, %s109
    %p111 = scmp.eq.s32.totalorder %s15, 0
    %p112 = por %p110, %p111
    %s113 = ssub.s32 %s16, %s28
    %s114 = ssub.s32 %s17, %s24
    %s115 = sor.u32 %s113, %s114
    %p116 = scmp.eq.s32.totalorder %s115, 0
    %s118 = sadd.s32 %s117, 1
    %s119 = scalar_select %p116, %s117, %s118
    %p122 = pneg %p116
    %p123 = scmp.eq.s32.totalorder %s9, 1
    %p124 = por %p122, %p123
    %p125 = scmp.ne.s32.totalorder %s117, %s120
    %p126 = scmp.eq.s32.totalorder %s9, 0
    %p127 = por %p125, %p126
    %p128 = scmp.ne.s32.totalorder %s117, %s120
    %p129 = scmp.eq.s32.totalorder %s14, 1
    %p130 = por %p128, %p129
    %p131 = scmp.ne.s32.totalorder %s120, %s121
    %p132 = scmp.eq.s32.totalorder %s14, 0
    %p133 = por %p131, %p132
    %p134 = scmp.ne.s32.totalorder %s120, %s121
    %p135 = scmp.eq.s32.totalorder %s15, 1
    %p136 = por %p134, %p135
    %p138 = scmp.ne.s32.totalorder %s121, %s137
    %p139 = scmp.eq.s32.totalorder %s15, 0
    %p140 = por %p138, %p139
    %p141 = scmp.le.s32.totalorder 1, %s9
    %p142 = scmp.lt.s32.totalorder %s9, 3
    %p143 = pnand %p141, %p142
    %p144 = pneg %p143
    // Predicated region
    $region9: #{closed_call.19} parent=5 // pred_check
      _
    $region10: #{closed_call.19} parent=5 // pred_check_branch
      %146 = sbr.rel (%p143) target = $region12
    $region11: #{closed_call.19} parent=5 // pred_region
      %s147 = ssub.s32 %s9, 1
    $region12: #{closed_call.19} parent=5 // pred_fallthru
      _
    %p148 = scmp.lt.s32.totalorder %s9, 2
    // Predicated region
    $region13: #{closed_call.19} parent=5 // pred_check
      %p149 = pneg %p148
    $region14: #{closed_call.19} parent=5 // pred_check_branch
      %151 = sbr.rel (%p149) target = $region16
    $region15: #{closed_call.19} parent=5 // pred_region
      // Predicated region
      $region17: #{closed_call.19} parent=15 // pred_check
        %p152 = pneg %p43
      $region18: #{closed_call.19} parent=15 // pred_check_branch
        %154 = sbr.rel (%p152) target = $region20
      $region19: #{closed_call.19} parent=15 // pred_region
        %p155 = scmp.lt.s32.totalorder %s16, 1
        %s156 = scalar_select %p155, %s16, 1
        %p157 = scmp.lt.s32.totalorder %s17, 0
        %s158 = scalar_select %p157, %s17, 0
        %s159 = smul.addr %s156, 3
        %s160 = sadd.s32 %s158, %s159
        %s161 = smul.addr %s160, 4
        %s162 = scalar_lea.vmem %s0, %s161
      $region20: #{closed_call.19} parent=15 // pred_fallthru
        _
      // Predicated region
      $region21: #{closed_call.19} parent=15 // pred_check
        %p163 = pneg %p71
      $region22: #{closed_call.19} parent=15 // pred_check_branch
        %165 = sbr.rel (%p163) target = $region24
      $region23: #{closed_call.19} parent=15 // pred_region
        %p166 = scmp.lt.s32.totalorder %s16, 1
        %s167 = scalar_select %p166, %s16, 1
        %p168 = scmp.lt.s32.totalorder %s17, 0
        %s169 = scalar_select %p168, %s17, 0
        %s170 = smul.addr %s167, 3
        %s171 = sadd.s32 %s169, %s170
        %s172 = smul.addr %s171, 4
        %s173 = scalar_lea.vmem %s1, %s172
      $region24: #{closed_call.19} parent=15 // pred_fallthru
        _
      // Predicated region
      $region25: #{closed_call.19} parent=15 // pred_check
        %p174 = pneg %p99
      $region26: #{closed_call.19} parent=15 // pred_check_branch
        %176 = sbr.rel (%p174) target = $region28
      $region27: #{closed_call.19} parent=15 // pred_region
        %p177 = scmp.lt.s32.totalorder %s16, 1
        %s178 = scalar_select %p177, %s16, 1
        %p179 = scmp.lt.s32.totalorder %s17, 0
        %s180 = scalar_select %p179, %s17, 0
        %s181 = smul.addr %s178, 3
        %s182 = sadd.s32 %s180, %s181
        %s183 = smul.addr %s182, 4
        %s184 = scalar_lea.vmem %s2, %s183
      $region28: #{closed_call.19} parent=15 // pred_fallthru
        _
    $region16: #{closed_call.19} parent=5 // pred_fallthru
      _
    %p185 = scmp.le.s32.totalorder 1, %s9
    %p186 = scmp.lt.s32.totalorder %s9, 3
    %p187 = pnand %p185, %p186
    %p188 = pneg %p187
    // Predicated region
    $region29: #{closed_call.19} parent=5 // pred_check
      _
    $region30: #{closed_call.19} parent=5 // pred_check_branch
      %190 = sbr.rel (%p187) target = $region32
    $region31: #{closed_call.19} parent=5 // pred_region
      %s191 = ssub.s32 %s9, 1
      %p192 = scmp.lt.s32.totalorder %s18, 1
      %s193 = scalar_select %p192, %s18, 1
      %p194 = scmp.lt.s32.totalorder %s19, 0
      %s195 = scalar_select %p194, %s19, 0
      %s196 = smul.addr %s193, 3
      %s197 = sadd.s32 %s195, %s196
      %s198 = smul.addr %s197, 4
      %s199 = scalar_lea.vmem %s0, %s198
      %p200 = pneg %p49
      %p201 = pneg %p46
      %p202 = scmp.lt.s32.totalorder %s18, 1
      %s203 = scalar_select %p202, %s18, 1
      %p204 = scmp.lt.s32.totalorder %s19, 0
      %s205 = scalar_select %p204, %s19, 0
      %s206 = smul.addr %s203, 3
      %s207 = sadd.s32 %s205, %s206
      %s208 = smul.addr %s207, 4
      %s209 = scalar_lea.vmem %s1, %s208
      %p210 = pneg %p77
      %p211 = pneg %p74
      %p212 = scmp.lt.s32.totalorder %s18, 1
      %s213 = scalar_select %p212, %s18, 1
      %p214 = scmp.lt.s32.totalorder %s19, 0
      %s215 = scalar_select %p214, %s19, 0
      %s216 = smul.addr %s213, 3
      %s217 = sadd.s32 %s215, %s216
      %s218 = smul.addr %s217, 4
      %s219 = scalar_lea.vmem %s2, %s218
      %p220 = pneg %p105
      %p221 = pneg %p102
      %p222 = pneg %p133
      %p223 = pneg %p130
      %p224 = scmp.lt.s32.totalorder %s18, 1
      %s225 = scalar_select %p224, %s18, 1
      %p226 = scmp.lt.s32.totalorder %s19, 0
      %s227 = scalar_select %p226, %s19, 0
      %s228 = smul.addr %s225, 3
      %s229 = sadd.s32 %s227, %s228
      %s230 = smul.addr %s229, 4
      %s231 = scalar_lea.vmem %s3, %s230
      %p232 = scmp.lt.s32.totalorder %s18, 1
      %s233 = scalar_select %p232, %s18, 1
      %p234 = scmp.lt.s32.totalorder %s19, 0
      %s235 = scalar_select %p234, %s19, 0
      %s236 = smul.addr %s233, 3
      %s237 = sadd.s32 %s235, %s236
      %s238 = smul.addr %s237, 4
      %s239 = scalar_lea.vmem %s0, %s238
      %p240 = scmp.lt.s32.totalorder %s18, 1
      %s241 = scalar_select %p240, %s18, 1
      %p242 = scmp.lt.s32.totalorder %s19, 0
      %s243 = scalar_select %p242, %s19, 0
      %s244 = smul.addr %s241, 3
      %s245 = sadd.s32 %s243, %s244
      %s246 = smul.addr %s245, 4
      %s247 = scalar_lea.vmem %s1, %s246
      %p248 = scmp.lt.s32.totalorder %s18, 1
      %s249 = scalar_select %p248, %s18, 1
      %p250 = scmp.lt.s32.totalorder %s19, 0
      %s251 = scalar_select %p250, %s19, 0
      %s252 = smul.addr %s249, 3
      %s253 = sadd.s32 %s251, %s252
      %s254 = smul.addr %s253, 4
      %s255 = scalar_lea.vmem %s2, %s254
      %p256 = scmp.lt.s32.totalorder %s18, 1
      %s257 = scalar_select %p256, %s18, 1
      %p258 = scmp.lt.s32.totalorder %s19, 0
      %s259 = scalar_select %p258, %s19, 0
      %s260 = smul.addr %s257, 3
      %s261 = sadd.s32 %s259, %s260
      %s262 = smul.addr %s261, 4
      %s263 = scalar_lea.vmem %s3, %s262
      %v265 = vld [vmem:[%s239] sm:$0xf]
      %v266 = vld [vmem:[%s239 + $0x4] sm:$0xf]
      %v267 = vld [vmem:[%s239 + $0x8] sm:$0x3]
      %v268 = vld [vmem:[%s247] sm:$0xf]
      %v269 = vld [vmem:[%s247 + $0x4] sm:$0xf]
      %v270 = vld [vmem:[%s247 + $0x8] sm:$0x3]
      %v271 = vld [vmem:[%s255] sm:$0xf]
      %v272 = vld [vmem:[%s255 + $0x4] sm:$0xf]
      %v273 = vld [vmem:[%s255 + $0x8] sm:$0x3]
      %v277 = vunpack.c.l.b16 %v265
      %v278 = vunpack.c.l.b16 %v266
      %v279 = vunpack.c.l.b16 %v267
      %v280 = vpack.c.b16 %v278, %v277
      %v281 = vpack.c.b16 %v279, %v279
      %v285 = vunpack.c.l.b16 %v268
      %v286 = vunpack.c.l.b16 %v269
      %v287 = vunpack.c.l.b16 %v270
      %v288 = vpack.c.b16 %v286, %v285
      %v289 = vpack.c.b16 %v287, %v287
      %vm290 = vcmask 64512
      %v292 = vsel %vm290, %v280, 0
      %v295 = vsel %vm290, %v281, 0
      %v298 = vsel %vm290, %v288, 0
      %v301 = vsel %vm290, %v289, 0
      %303 = vmatpush.bf16.xpose.msra.mxu0 0
      %304 = vmatpush.bf16.xpose.msra.mxu0 0
      %305 = vmatpush.bf16.xpose.msra.mxu0 0
      %306 = vmatpush.bf16.xpose.msra.mxu0 0
      %307 = vmatpush.bf16.xpose.msra.mxu0 0
      %308 = vmatpush.bf16.xpose.msra.mxu0 0
      %309 = vmatpush.bf16.xpose.msra.mxu0 %v301
      %310 = vmatpush.bf16.xpose.msra.mxu0 %v298
      %311 = vmatmul.bf16.gmra.mxu0 %v292
      %v312 = vpop.f32.mrf.mxu0
      %v313 = vadd.f32 0.0, %v312
      %v314 = vpop.f32.mrf.mxu0
      %v315 = vadd.f32 0.0, %v314
      %316 = vmatmul.bf16.gmra.mxu0 %v295
      %v317 = vpop.f32.mrf.mxu0
      %v318 = vadd.f32 0.0, %v317
      %v319 = vpop.f32.mrf.mxu0
      %320 = vdwg.mxu0
      %v321 = vmul.f32 %v313, 0.35355338
      %v322 = vmul.f32 %v315, 0.35355338
      %v323 = vmul.f32 %v318, 0.35355338
      %vm324 = vcmask 162816
      %v325 = vsel %vm324, %v321, -inf
      %326 = vmax.xlane.f32.xlu0 %v325
      %v327 = vpop.xlane.xlu0 %326
      %v328 = vsel %vm324, %v322, -inf
      %329 = vmax.xlane.f32.xlu0 %v328
      %v330 = vpop.xlane.xlu0 %329
      %vm331 = vcmask 158720
      %v332 = vsel %vm331, %v323, -inf
      %333 = vmax.xlane.f32.xlu0 %v332
      %v334 = vpop.xlane.xlu0 %333
      %v335 = vsub.f32 %v321, %v327
      %v336 = vsub.f32 %v322, %v330
      %v337 = vsub.f32 %v323, %v334
      %v338 = vmul.f32 %v335, 1.442695
      %v339 = vpow.pop %v338
      %v340 = vmul.f32 %v336, 1.442695
      %v341 = vpow.pop %v340
      %v342 = vmul.f32 %v337, 1.442695
      %v343 = vpow.pop %v342
      %v344 = vsel %vm324, %v339, 0.0
      %345 = vadd.xlane.f32.xlu0 %v344
      %v346 = vpop.xlane.xlu0 %345
      %v347 = vsel %vm324, %v341, 0.0
      %348 = vadd.xlane.f32.xlu0 %v347
      %v349 = vpop.xlane.xlu0 %348
      %v350 = vsel %vm331, %v343, 0.0
      %351 = vadd.xlane.f32.xlu0 %v350
      %v352 = vpop.xlane.xlu0 %351
      %v353 = vrcp.pop %v346
      %v354 = vrcp.pop %v349
      %v355 = vrcp.pop %v352
      %v356 = vmul.f32 %v339, %v353
      %v357 = vmul.f32 %v341, %v354
      %v358 = vmul.f32 %v343, %v355
      %v359 = vpack.c.bf16 %v357, %v356
      %v360 = vpack.c.bf16 %v358, %v358
      %v364 = vunpack.c.l.b16 %v271
      %v365 = vunpack.c.l.b16 %v272
      %v366 = vunpack.c.l.b16 %v273
      %v367 = vpack.c.b16 %v365, %v364
      %v368 = vpack.c.b16 %v366, %v366
      %v371 = vsel %vm324, %v359, 0
      %v374 = vsel %vm324, %v360, 0
      %vm376 = vcmask 1041408
      %v378 = vsel %vm376, %v368, 0
      %380 = vmatpush.bf16.msra.mxu0 0
      %381 = vmatpush.bf16.msra.mxu0 0
      %382 = vmatpush.bf16.msra.mxu0 0
      %383 = vmatpush.bf16.msra.mxu0 0
      %384 = vmatpush.bf16.msra.mxu0 0
      %385 = vmatpush.bf16.msra.mxu0 0
      %386 = vmatpush.bf16.msra.mxu0 %v378
      %387 = vmatpush.bf16.msra.mxu0 %v367
      %388 = vmatmul.bf16.gmra.mxu0 %v371
      %v389 = vpop.f32.mrf.mxu0
      %v390 = vadd.f32 0.0, %v389
      %v391 = vpop.f32.mrf.mxu0
      %v392 = vadd.f32 0.0, %v391
      %393 = vmatmul.bf16.gmra.mxu0 %v374
      %v394 = vpop.f32.mrf.mxu0
      %v395 = vadd.f32 0.0, %v394
      %v396 = vpop.f32.mrf.mxu0
      %397 = vdwg.mxu0
      %v398 = vpack.c.bf16 %v390, %v390
      %v399 = vpack.c.bf16 %v392, %v392
      %v400 = vpack.c.bf16 %v395, %v395
      %vm401 = vcmask 60416
      %402 = vst.msk [vmem:[%s263] sm:$0xf] %vm401, %v398
      %403 = vst.msk [vmem:[%s263 + $0x4] sm:$0xf] %vm401, %v399
      %vm404 = vcmask 58368
      %405 = vst.msk [vmem:[%s263 + $0x8] sm:$0x3] %vm404, %v400
      %v406 = vld [vmem:[%s239] sm:$0xf]
      %v407 = vld [vmem:[%s239 + $0x4] sm:$0xf]
      %v408 = vld [vmem:[%s239 + $0x8] sm:$0x3]
      %v409 = vld [vmem:[%s247] sm:$0xf]
      %v410 = vld [vmem:[%s247 + $0x4] sm:$0xf]
      %v411 = vld [vmem:[%s247 + $0x8] sm:$0x3]
      %v412 = vld [vmem:[%s255] sm:$0xf]
      %v413 = vld [vmem:[%s255 + $0x4] sm:$0xf]
      %v414 = vld [vmem:[%s255 + $0x8] sm:$0x3]
      %v418 = vunpack.c.l.b16 %v406
      %v419 = vunpack.c.l.b16 %v407
      %v420 = vunpack.c.l.b16 %v408
      %v421 = vpack.c.b16 %v419, %v418
      %v422 = vpack.c.b16 %v420, %v420
      %423 = vrot.lane.b32.xlu0 %v421, 120
      %v424 = vpop.permute.xlu0 %423
      %425 = vrot.lane.b32.xlu0 %v422, 120
      %v426 = vpop.permute.xlu0 %425
      %v430 = vunpack.c.l.b16 %v409
      %v431 = vunpack.c.l.b16 %v410
      %v432 = vunpack.c.l.b16 %v411
      %v433 = vpack.c.b16 %v431, %v430
      %v434 = vpack.c.b16 %v432, %v432
      %435 = vrot.lane.b32.xlu0 %v433, 120
      %v436 = vpop.permute.xlu0 %435
      %437 = vrot.lane.b32.xlu0 %v434, 120
      %v438 = vpop.permute.xlu0 %437
      %v440 = vsel %vm290, %v424, 0
      %v443 = vsel %vm290, %v426, 0
      %v446 = vsel %vm290, %v436, 0
      %v449 = vsel %vm290, %v438, 0
      %451 = vmatpush.bf16.xpose.msra.mxu0 0
      %452 = vmatpush.bf16.xpose.msra.mxu0 0
      %453 = vmatpush.bf16.xpose.msra.mxu0 0
      %454 = vmatpush.bf16.xpose.msra.mxu0 0
      %455 = vmatpush.bf16.xpose.msra.mxu0 0
      %456 = vmatpush.bf16.xpose.msra.mxu0 0
      %457 = vmatpush.bf16.xpose.msra.mxu0 %v449
      %458 = vmatpush.bf16.xpose.msra.mxu0 %v446
      %459 = vmatmul.bf16.gmra.mxu0 %v440
      %v460 = vpop.f32.mrf.mxu0
      %v461 = vadd.f32 0.0, %v460
      %v462 = vpop.f32.mrf.mxu0
      %v463 = vadd.f32 0.0, %v462
      %464 = vmatmul.bf16.gmra.mxu0 %v443
      %v465 = vpop.f32.mrf.mxu0
      %v466 = vadd.f32 0.0, %v465
      %v467 = vpop.f32.mrf.mxu0
      %468 = vdwg.mxu0
      %v469 = vmul.f32 %v461, 0.35355338
      %v470 = vmul.f32 %v463, 0.35355338
      %v471 = vmul.f32 %v466, 0.35355338
      %v472 = vsel %vm324, %v469, -inf
      %473 = vmax.xlane.f32.xlu0 %v472
      %v474 = vpop.xlane.xlu0 %473
      %v475 = vsel %vm324, %v470, -inf
      %476 = vmax.xlane.f32.xlu0 %v475
      %v477 = vpop.xlane.xlu0 %476
      %v478 = vsel %vm331, %v471, -inf
      %479 = vmax.xlane.f32.xlu0 %v478
      %v480 = vpop.xlane.xlu0 %479
      %v481 = vsub.f32 %v469, %v474
      %v482 = vsub.f32 %v470, %v477
      %v483 = vsub.f32 %v471, %v480
      %v484 = vmul.f32 %v481, 1.442695
      %v485 = vpow.pop %v484
      %v486 = vmul.f32 %v482, 1.442695
      %v487 = vpow.pop %v486
      %v488 = vmul.f32 %v483, 1.442695
      %v489 = vpow.pop %v488
      %v490 = vsel %vm324, %v485, 0.0
      %491 = vadd.xlane.f32.xlu0 %v490
      %v492 = vpop.xlane.xlu0 %491
      %v493 = vsel %vm324, %v487, 0.0
      %494 = vadd.xlane.f32.xlu0 %v493
      %v495 = vpop.xlane.xlu0 %494
      %v496 = vsel %vm331, %v489, 0.0
      %497 = vadd.xlane.f32.xlu0 %v496
      %v498 = vpop.xlane.xlu0 %497
      %v499 = vrcp.pop %v492
      %v500 = vrcp.pop %v495
      %v501 = vrcp.pop %v498
      %v502 = vmul.f32 %v485, %v499
      %v503 = vmul.f32 %v487, %v500
      %v504 = vmul.f32 %v489, %v501
      %v505 = vpack.c.bf16 %v503, %v502
      %v506 = vpack.c.bf16 %v504, %v504
      %v510 = vunpack.c.l.b16 %v412
      %v511 = vunpack.c.l.b16 %v413
      %v512 = vunpack.c.l.b16 %v414
      %v513 = vpack.c.b16 %v511, %v510
      %v514 = vpack.c.b16 %v512, %v512
      %515 = vrot.lane.b32.xlu0 %v513, 120
      %v516 = vpop.permute.xlu0 %515
      %517 = vrot.lane.b32.xlu0 %v514, 120
      %v518 = vpop.permute.xlu0 %517
      %v521 = vsel %vm324, %v505, 0
      %v524 = vsel %vm324, %v506, 0
      %v527 = vsel %vm376, %v518, 0
      %529 = vmatpush.bf16.msra.mxu0 0
      %530 = vmatpush.bf16.msra.mxu0 0
      %531 = vmatpush.bf16.msra.mxu0 0
      %532 = vmatpush.bf16.msra.mxu0 0
      %533 = vmatpush.bf16.msra.mxu0 0
      %534 = vmatpush.bf16.msra.mxu0 0
      %535 = vmatpush.bf16.msra.mxu0 %v527
      %536 = vmatpush.bf16.msra.mxu0 %v516
      %537 = vmatmul.bf16.gmra.mxu0 %v521
      %v538 = vpop.f32.mrf.mxu0
      %v539 = vadd.f32 0.0, %v538
      %v540 = vpop.f32.mrf.mxu0
      %v541 = vadd.f32 0.0, %v540
      %542 = vmatmul.bf16.gmra.mxu0 %v524
      %v543 = vpop.f32.mrf.mxu0
      %v544 = vadd.f32 0.0, %v543
      %v545 = vpop.f32.mrf.mxu0
      %546 = vdwg.mxu0
      %v547 = vpack.c.bf16 %v539, %v539
      %v548 = vpack.c.bf16 %v541, %v541
      %v549 = vpack.c.bf16 %v544, %v544
      %553 = vrot.lane.b32.xlu0 %v547, 8
      %v554 = vpop.permute.xlu0 %553
      %555 = vrot.lane.b32.xlu0 %v548, 8
      %v556 = vpop.permute.xlu0 %555
      %557 = vrot.lane.b32.xlu0 %v549, 8
      %v558 = vpop.permute.xlu0 %557
      %vm562 = vcmask 126016
      %563 = vst.msk [vmem:[%s263] sm:$0xf] %vm562, %v554
      %564 = vst.msk [vmem:[%s263 + $0x4] sm:$0xf] %vm562, %v556
      %vm565 = vcmask 123968
      %566 = vst.msk [vmem:[%s263 + $0x8] sm:$0x3] %vm565, %v558
      %v567 = vld [vmem:[%s239] sm:$0xf]
      %v568 = vld [vmem:[%s239 + $0x4] sm:$0xf]
      %v569 = vld [vmem:[%s239 + $0x8] sm:$0x3]
      %v570 = vld [vmem:[%s247] sm:$0xf]
      %v571 = vld [vmem:[%s247 + $0x4] sm:$0xf]
      %v572 = vld [vmem:[%s247 + $0x8] sm:$0x3]
      %v573 = vld [vmem:[%s255] sm:$0xf]
      %v574 = vld [vmem:[%s255 + $0x4] sm:$0xf]
      %v575 = vld [vmem:[%s255 + $0x8] sm:$0x3]
      %v579 = vunpack.c.l.b16 %v567
      %v580 = vunpack.c.l.b16 %v568
      %v581 = vunpack.c.l.b16 %v569
      %v582 = vpack.c.b16 %v580, %v579
      %v583 = vpack.c.b16 %v581, %v581
      %584 = vrot.lane.b32.xlu0 %v582, 112
      %v585 = vpop.permute.xlu0 %584
      %586 = vrot.lane.b32.xlu0 %v583, 112
      %v587 = vpop.permute.xlu0 %586
      %v591 = vunpack.c.l.b16 %v570
      %v592 = vunpack.c.l.b16 %v571
      %v593 = vunpack.c.l.b16 %v572
      %v594 = vpack.c.b16 %v592, %v591
      %v595 = vpack.c.b16 %v593, %v593
      %596 = vrot.lane.b32.xlu0 %v594, 112
      %v597 = vpop.permute.xlu0 %596
      %598 = vrot.lane.b32.xlu0 %v595, 112
      %v599 = vpop.permute.xlu0 %598
      %v601 = vsel %vm290, %v585, 0
      %v604 = vsel %vm290, %v587, 0
      %v607 = vsel %vm290, %v597, 0
      %v610 = vsel %vm290, %v599, 0
      %612 = vmatpush.bf16.xpose.msra.mxu0 0
      %613 = vmatpush.bf16.xpose.msra.mxu0 0
      %614 = vmatpush.bf16.xpose.msra.mxu0 0
      %615 = vmatpush.bf16.xpose.msra.mxu0 0
      %616 = vmatpush.bf16.xpose.msra.mxu0 0
      %617 = vmatpush.bf16.xpose.msra.mxu0 0
      %618 = vmatpush.bf16.xpose.msra.mxu0 %v610
      %619 = vmatpush.bf16.xpose.msra.mxu0 %v607
      %620 = vmatmul.bf16.gmra.mxu0 %v601
      %v621 = vpop.f32.mrf.mxu0
      %v622 = vadd.f32 0.0, %v621
      %v623 = vpop.f32.mrf.mxu0
      %v624 = vadd.f32 0.0, %v623
      %625 = vmatmul.bf16.gmra.mxu0 %v604
      %v626 = vpop.f32.mrf.mxu0
      %v627 = vadd.f32 0.0, %v626
      %v628 = vpop.f32.mrf.mxu0
      %629 = vdwg.mxu0
      %v630 = vmul.f32 %v622, 0.35355338
      %v631 = vmul.f32 %v624, 0.35355338
      %v632 = vmul.f32 %v627, 0.35355338
      %v633 = vsel %vm324, %v630, -inf
      %634 = vmax.xlane.f32.xlu0 %v633
      %v635 = vpop.xlane.xlu0 %634
      %v636 = vsel %vm324, %v631, -inf
      %637 = vmax.xlane.f32.xlu0 %v636
      %v638 = vpop.xlane.xlu0 %637
      %v639 = vsel %vm331, %v632, -inf
      %640 = vmax.xlane.f32.xlu0 %v639
      %v641 = vpop.xlane.xlu0 %640
      %v642 = vsub.f32 %v630, %v635
      %v643 = vsub.f32 %v631, %v638
      %v644 = vsub.f32 %v632, %v641
      %v645 = vmul.f32 %v642, 1.442695
      %v646 = vpow.pop %v645
      %v647 = vmul.f32 %v643, 1.442695
      %v648 = vpow.pop %v647
      %v649 = vmul.f32 %v644, 1.442695
      %v650 = vpow.pop %v649
      %v651 = vsel %vm324, %v646, 0.0
      %652 = vadd.xlane.f32.xlu0 %v651
      %v653 = vpop.xlane.xlu0 %652
      %v654 = vsel %vm324, %v648, 0.0
      %655 = vadd.xlane.f32.xlu0 %v654
      %v656 = vpop.xlane.xlu0 %655
      %v657 = vsel %vm331, %v650, 0.0
      %658 = vadd.xlane.f32.xlu0 %v657
      %v659 = vpop.xlane.xlu0 %658
      %v660 = vrcp.pop %v653
      %v661 = vrcp.pop %v656
      %v662 = vrcp.pop %v659
      %v663 = vmul.f32 %v646, %v660
      %v664 = vmul.f32 %v648, %v661
      %v665 = vmul.f32 %v650, %v662
      %v666 = vpack.c.bf16 %v664, %v663
      %v667 = vpack.c.bf16 %v665, %v665
      %v671 = vunpack.c.l.b16 %v573
      %v672 = vunpack.c.l.b16 %v574
      %v673 = vunpack.c.l.b16 %v575
      %v674 = vpack.c.b16 %v672, %v671
      %v675 = vpack.c.b16 %v673, %v673
      %676 = vrot.lane.b32.xlu0 %v674, 112
      %v677 = vpop.permute.xlu0 %676
      %678 = vrot.lane.b32.xlu0 %v675, 112
      %v679 = vpop.permute.xlu0 %678
      %v682 = vsel %vm324, %v666, 0
      %v685 = vsel %vm324, %v667, 0
      %v688 = vsel %vm376, %v679, 0
      %690 = vmatpush.bf16.msra.mxu0 0
      %691 = vmatpush.bf16.msra.mxu0 0
      %692 = vmatpush.bf16.msra.mxu0 0
      %693 = vmatpush.bf16.msra.mxu0 0
      %694 = vmatpush.bf16.msra.mxu0 0
      %695 = vmatpush.bf16.msra.mxu0 0
      %696 = vmatpush.bf16.msra.mxu0 %v688
      %697 = vmatpush.bf16.msra.mxu0 %v677
      %698 = vmatmul.bf16.gmra.mxu0 %v682
      %v699 = vpop.f32.mrf.mxu0
      %v700 = vadd.f32 0.0, %v699
      %v701 = vpop.f32.mrf.mxu0
      %v702 = vadd.f32 0.0, %v701
      %703 = vmatmul.bf16.gmra.mxu0 %v685
      %v704 = vpop.f32.mrf.mxu0
      %v705 = vadd.f32 0.0, %v704
      %v706 = vpop.f32.mrf.mxu0
      %707 = vdwg.mxu0
      %v708 = vpack.c.bf16 %v700, %v700
      %v709 = vpack.c.bf16 %v702, %v702
      %v710 = vpack.c.bf16 %v705, %v705
      %714 = vrot.lane.b32.xlu0 %v708, 16
      %v715 = vpop.permute.xlu0 %714
      %716 = vrot.lane.b32.xlu0 %v709, 16
      %v717 = vpop.permute.xlu0 %716
      %718 = vrot.lane.b32.xlu0 %v710, 16
      %v719 = vpop.permute.xlu0 %718
      %vm723 = vcmask 191616
      %724 = vst.msk [vmem:[%s263] sm:$0xf] %vm723, %v715
      %725 = vst.msk [vmem:[%s263 + $0x4] sm:$0xf] %vm723, %v717
      %vm726 = vcmask 189568
      %727 = vst.msk [vmem:[%s263 + $0x8] sm:$0x3] %vm726, %v719
      %v728 = vld [vmem:[%s239] sm:$0xf]
      %v729 = vld [vmem:[%s239 + $0x4] sm:$0xf]
      %v730 = vld [vmem:[%s239 + $0x8] sm:$0x3]
      %v731 = vld [vmem:[%s247] sm:$0xf]
      %v732 = vld [vmem:[%s247 + $0x4] sm:$0xf]
      %v733 = vld [vmem:[%s247 + $0x8] sm:$0x3]
      %v734 = vld [vmem:[%s255] sm:$0xf]
      %v735 = vld [vmem:[%s255 + $0x4] sm:$0xf]
      %v736 = vld [vmem:[%s255 + $0x8] sm:$0x3]
      %v740 = vunpack.c.l.b16 %v728
      %v741 = vunpack.c.l.b16 %v729
      %v742 = vunpack.c.l.b16 %v730
      %v743 = vpack.c.b16 %v741, %v740
      %v744 = vpack.c.b16 %v742, %v742
      %745 = vrot.lane.b32.xlu0 %v743, 104
      %v746 = vpop.permute.xlu0 %745
      %747 = vrot.lane.b32.xlu0 %v744, 104
      %v748 = vpop.permute.xlu0 %747
      %v752 = vunpack.c.l.b16 %v731
      %v753 = vunpack.c.l.b16 %v732
      %v754 = vunpack.c.l.b16 %v733
      %v755 = vpack.c.b16 %v753, %v752
      %v756 = vpack.c.b16 %v754, %v754
      %757 = vrot.lane.b32.xlu0 %v755, 104
      %v758 = vpop.permute.xlu0 %757
      %759 = vrot.lane.b32.xlu0 %v756, 104
      %v760 = vpop.permute.xlu0 %759
      %v762 = vsel %vm290, %v746, 0
      %v765 = vsel %vm290, %v748, 0
      %v768 = vsel %vm290, %v758, 0
      %v771 = vsel %vm290, %v760, 0
      %773 = vmatpush.bf16.xpose.msra.mxu0 0
      %774 = vmatpush.bf16.xpose.msra.mxu0 0
      %775 = vmatpush.bf16.xpose.msra.mxu0 0
      %776 = vmatpush.bf16.xpose.msra.mxu0 0
      %777 = vmatpush.bf16.xpose.msra.mxu0 0
      %778 = vmatpush.bf16.xpose.msra.mxu0 0
      %779 = vmatpush.bf16.xpose.msra.mxu0 %v771
      %780 = vmatpush.bf16.xpose.msra.mxu0 %v768
      %781 = vmatmul.bf16.gmra.mxu0 %v762
      %v782 = vpop.f32.mrf.mxu0
      %v783 = vadd.f32 0.0, %v782
      %v784 = vpop.f32.mrf.mxu0
      %v785 = vadd.f32 0.0, %v784
      %786 = vmatmul.bf16.gmra.mxu0 %v765
      %v787 = vpop.f32.mrf.mxu0
      %v788 = vadd.f32 0.0, %v787
      %v789 = vpop.f32.mrf.mxu0
      %790 = vdwg.mxu0
      %v791 = vmul.f32 %v783, 0.35355338
      %v792 = vmul.f32 %v785, 0.35355338
      %v793 = vmul.f32 %v788, 0.35355338
      %v794 = vsel %vm324, %v791, -inf
      %795 = vmax.xlane.f32.xlu0 %v794
      %v796 = vpop.xlane.xlu0 %795
      %v797 = vsel %vm324, %v792, -inf
      %798 = vmax.xlane.f32.xlu0 %v797
      %v799 = vpop.xlane.xlu0 %798
      %v800 = vsel %vm331, %v793, -inf
      %801 = vmax.xlane.f32.xlu0 %v800
      %v802 = vpop.xlane.xlu0 %801
      %v803 = vsub.f32 %v791, %v796
      %v804 = vsub.f32 %v792, %v799
      %v805 = vsub.f32 %v793, %v802
      %v806 = vmul.f32 %v803, 1.442695
      %v807 = vpow.pop %v806
      %v808 = vmul.f32 %v804, 1.442695
      %v809 = vpow.pop %v808
      %v810 = vmul.f32 %v805, 1.442695
      %v811 = vpow.pop %v810
      %v812 = vsel %vm324, %v807, 0.0
      %813 = vadd.xlane.f32.xlu0 %v812
      %v814 = vpop.xlane.xlu0 %813
      %v815 = vsel %vm324, %v809, 0.0
      %816 = vadd.xlane.f32.xlu0 %v815
      %v817 = vpop.xlane.xlu0 %816
      %v818 = vsel %vm331, %v811, 0.0
      %819 = vadd.xlane.f32.xlu0 %v818
      %v820 = vpop.xlane.xlu0 %819
      %v821 = vrcp.pop %v814
      %v822 = vrcp.pop %v817
      %v823 = vrcp.pop %v820
      %v824 = vmul.f32 %v807, %v821
      %v825 = vmul.f32 %v809, %v822
      %v826 = vmul.f32 %v811, %v823
      %v827 = vpack.c.bf16 %v825, %v824
      %v828 = vpack.c.bf16 %v826, %v826
      %v832 = vunpack.c.l.b16 %v734
      %v833 = vunpack.c.l.b16 %v735
      %v834 = vunpack.c.l.b16 %v736
      %v835 = vpack.c.b16 %v833, %v832
      %v836 = vpack.c.b16 %v834, %v834
      %837 = vrot.lane.b32.xlu0 %v835, 104
      %v838 = vpop.permute.xlu0 %837
      %839 = vrot.lane.b32.xlu0 %v836, 104
      %v840 = vpop.permute.xlu0 %839
      %v843 = vsel %vm324, %v827, 0
      %v846 = vsel %vm324, %v828, 0
      %v849 = vsel %vm376, %v840, 0
      %851 = vmatpush.bf16.msra.mxu0 0
      %852 = vmatpush.bf16.msra.mxu0 0
      %853 = vmatpush.bf16.msra.mxu0 0
      %854 = vmatpush.bf16.msra.mxu0 0
      %855 = vmatpush.bf16.msra.mxu0 0
      %856 = vmatpush.bf16.msra.mxu0 0
      %857 = vmatpush.bf16.msra.mxu0 %v849
      %858 = vmatpush.bf16.msra.mxu0 %v838
      %859 = vmatmul.bf16.gmra.mxu0 %v843
      %v860 = vpop.f32.mrf.mxu0
      %v861 = vadd.f32 0.0, %v860
      %v862 = vpop.f32.mrf.mxu0
      %v863 = vadd.f32 0.0, %v862
      %864 = vmatmul.bf16.gmra.mxu0 %v846
      %v865 = vpop.f32.mrf.mxu0
      %v866 = vadd.f32 0.0, %v865
      %v867 = vpop.f32.mrf.mxu0
      %868 = vdwg.mxu0
      %v869 = vpack.c.bf16 %v861, %v861
      %v870 = vpack.c.bf16 %v863, %v863
      %v871 = vpack.c.bf16 %v866, %v866
      %875 = vrot.lane.b32.xlu0 %v869, 24
      %v876 = vpop.permute.xlu0 %875
      %877 = vrot.lane.b32.xlu0 %v870, 24
      %v878 = vpop.permute.xlu0 %877
      %879 = vrot.lane.b32.xlu0 %v871, 24
      %v880 = vpop.permute.xlu0 %879
      %vm884 = vcmask 257216
      %885 = vst.msk [vmem:[%s263] sm:$0xf] %vm884, %v876
      %886 = vst.msk [vmem:[%s263 + $0x4] sm:$0xf] %vm884, %v878
      %vm887 = vcmask 255168
      %888 = vst.msk [vmem:[%s263 + $0x8] sm:$0x3] %vm887, %v880
      %p889 = scmp.lt.s32.totalorder %s18, 1
      %s890 = scalar_select %p889, %s18, 1
      %p891 = scmp.lt.s32.totalorder %s19, 0
      %s892 = scalar_select %p891, %s19, 0
      %s893 = smul.addr %s890, 3
      %s894 = sadd.s32 %s892, %s893
      %s895 = smul.addr %s894, 4
      %s896 = scalar_lea.vmem %s3, %s895
      // Predicated region
      $region33: #{closed_call.19} parent=31 // pred_check
        %p897 = pneg %p130
      $region34: #{closed_call.19} parent=31 // pred_check_branch
        %899 = sbr.rel (%p897) target = $region36
      $region35: #{closed_call.19} parent=31 // pred_region
        _
      $region36: #{closed_call.19} parent=31 // pred_fallthru
        _
    $region32: #{closed_call.19} parent=5 // pred_fallthru
      _
    %p900 = scmp.le.s32.totalorder 2, %s9
    // Predicated region
    $region37: #{closed_call.19} parent=5 // pred_check
      %p901 = pneg %p900
    $region38: #{closed_call.19} parent=5 // pred_check_branch
      %903 = sbr.rel (%p901) target = $region40
    $region39: #{closed_call.19} parent=5 // pred_region
      %s904 = ssub.s32 %s9, 2
      // Predicated region
      $region41: #{closed_call.19} parent=39 // pred_check
        %p905 = pneg %p136
      $region42: #{closed_call.19} parent=39 // pred_check_branch
        %907 = sbr.rel (%p905) target = $region44
      $region43: #{closed_call.19} parent=39 // pred_region
        %p908 = scmp.lt.s32.totalorder %s20, 1
        %s909 = scalar_select %p908, %s20, 1
        %p910 = scmp.lt.s32.totalorder %s21, 0
        %s911 = scalar_select %p910, %s21, 0
        %s912 = smul.addr %s909, 3
        %s913 = sadd.s32 %s911, %s912
        %s914 = smul.addr %s913, 4
        %s915 = scalar_lea.vmem %s3, %s914
      $region44: #{closed_call.19} parent=39 // pred_fallthru
        _
    $region40: #{closed_call.19} parent=5 // pred_fallthru
      _
  $region6: #{closed_call.19} parent=0 // loop_footer
    %s13 = sadd.s32 1, %s9
  $region7: #{closed_call.19} parent=0 // loop_footer_branch
    %8 = sbr.rel target = $region3
  $region8: #{closed_call.19} parent=0 // loop_exit
    _

// kernel: closed_call.21
$region0: #{closed_call.21}
  #allocation0 [shape = 'u32[]', space=smem, size = 0x4, offset = 0x4, fixed_abs, tag = 'smem constant byte address 0x4 - core index']
  #allocation1 [shape = 'u32[72,128]{1,0:T(1,128)}', space=vmem, size = 0x9000, scoped, tag = 'internal scratch']
  %s0 = inlined_call_operand.vmem [shape: bf16[40,32], index: 0, kind: input, shape index: {}]
  %s1 = inlined_call_operand.vmem [shape: f32[1,32], index: 1, kind: input, shape index: {}]
  %s2 = inlined_call_operand.vmem [shape: f32[1,32], index: 2, kind: input, shape index: {}]
  %s3 = inlined_call_operand.vmem [shape: bf16[32,128], index: 3, kind: input, shape index: {}]
  %s4 = inlined_call_operand.vmem [shape: f32[1,128], index: 4, kind: input, shape index: {}]
  %s5 = inlined_call_operand.vmem [shape: bf16[40,128], index: 5, kind: output, shape index: {}]
  %s6 = sld [smem:[#allocation0]]
  $region30: #{closed_call.21} parent=0
    _
  %s8 = ssub.s32 1, %s6
  %s9 = scalar_select 0, %s8, %s6
  // Predicated region
  $region2: #{closed_call.21} parent=0 // pred_check
    _
  $region3: #{closed_call.21} parent=0 // pred_check_branch
    %11 = sbr.rel (0) target = $region5
  $region4: #{closed_call.21} parent=0 // pred_region
    _
  $region5: #{closed_call.21} parent=0 // pred_fallthru
    _
  // Predicated region
  $region6: #{closed_call.21} parent=0 // pred_check
    _
  $region7: #{closed_call.21} parent=0 // pred_check_branch
    %13 = sbr.rel (0) target = $region9
  $region8: #{closed_call.21} parent=0 // pred_region
    _
  $region9: #{closed_call.21} parent=0 // pred_fallthru
    _
  // Predicated region
  $region10: #{closed_call.21} parent=0 // pred_check
    _
  $region11: #{closed_call.21} parent=0 // pred_check_branch
    %15 = sbr.rel (0) target = $region13
  $region12: #{closed_call.21} parent=0 // pred_region
    _
  $region13: #{closed_call.21} parent=0 // pred_fallthru
    _
  // Predicated region
  $region14: #{closed_call.21} parent=0 // pred_check
    _
  $region15: #{closed_call.21} parent=0 // pred_check_branch
    %17 = sbr.rel (0) target = $region17
  $region16: #{closed_call.21} parent=0 // pred_region
    _
  $region17: #{closed_call.21} parent=0 // pred_fallthru
    _
  // Predicated region
  $region18: #{closed_call.21} parent=0 // pred_check
    _
  $region19: #{closed_call.21} parent=0 // pred_check_branch
    %19 = sbr.rel (0) target = $region21
  $region20: #{closed_call.21} parent=0 // pred_region
    _
  $region21: #{closed_call.21} parent=0 // pred_fallthru
    _
  %v21 = vld [vmem:[%s0] sm:$0xf]
  %v22 = vld [vmem:[%s0 + $0x4] sm:$0xf]
  %v23 = vld [vmem:[%s0 + $0x8] sm:$0xf]
  %v24 = vld [vmem:[%s0 + $0xc] sm:$0xf]
  %v25 = vld [vmem:[%s0 + $0x10] sm:$0xf]
  %v26 = vunpack.c.l.bf16 %v21
  %v27 = vunpack.c.l.bf16 %v22
  %v28 = vunpack.c.l.bf16 %v23
  %v29 = vunpack.c.l.bf16 %v24
  %v30 = vunpack.c.l.bf16 %v25
  %vm31 = vcmask 261120
  %v32 = vsel %vm31, %v26, 0.0
  %33 = vadd.xlane.f32.xlu0 %v32
  %v34 = vpop.xlane.xlu0 %33
  %v35 = vsel %vm31, %v27, 0.0
  %36 = vadd.xlane.f32.xlu0 %v35
  %v37 = vpop.xlane.xlu0 %36
  %v38 = vsel %vm31, %v28, 0.0
  %39 = vadd.xlane.f32.xlu0 %v38
  %v40 = vpop.xlane.xlu0 %39
  %v41 = vsel %vm31, %v29, 0.0
  %42 = vadd.xlane.f32.xlu0 %v41
  %v43 = vpop.xlane.xlu0 %42
  %v44 = vsel %vm31, %v30, 0.0
  %45 = vadd.xlane.f32.xlu0 %v44
  %v46 = vpop.xlane.xlu0 %45
  %v47 = vrcp.pop 32.0
  %v48 = vmul.f32 32.0, %v47
  %v49 = vsub.f32 1.0, %v48
  %v50 = vmul.f32 %v47, %v49
  %v51 = vadd.f32 %v47, %v50
  %vm52 = vweird.f32 %v47
  %v53 = vsel %vm52, %v47, %v51
  %v54 = vmul.f32 %v34, %v53
  %v55 = vmul.f32 %v37, %v53
  %v56 = vmul.f32 %v40, %v53
  %v57 = vmul.f32 %v43, %v53
  %v58 = vmul.f32 %v46, %v53
  %v59 = vsub.f32 %v26, %v54
  %v60 = vsub.f32 %v27, %v55
  %v61 = vsub.f32 %v28, %v56
  %v62 = vsub.f32 %v29, %v57
  %v63 = vsub.f32 %v30, %v58
  %v64 = vmul.f32 %v59, %v59
  %v65 = vmul.f32 %v60, %v60
  %v66 = vmul.f32 %v61, %v61
  %v67 = vmul.f32 %v62, %v62
  %v68 = vmul.f32 %v63, %v63
  %v69 = vsel %vm31, %v64, 0.0
  %70 = vadd.xlane.f32.xlu0 %v69
  %v71 = vpop.xlane.xlu0 %70
  %v72 = vsel %vm31, %v65, 0.0
  %73 = vadd.xlane.f32.xlu0 %v72
  %v74 = vpop.xlane.xlu0 %73
  %v75 = vsel %vm31, %v66, 0.0
  %76 = vadd.xlane.f32.xlu0 %v75
  %v77 = vpop.xlane.xlu0 %76
  %v78 = vsel %vm31, %v67, 0.0
  %79 = vadd.xlane.f32.xlu0 %v78
  %v80 = vpop.xlane.xlu0 %79
  %v81 = vsel %vm31, %v68, 0.0
  %82 = vadd.xlane.f32.xlu0 %v81
  %v83 = vpop.xlane.xlu0 %82
  %v84 = vmul.f32 %v71, %v53
  %v85 = vmul.f32 %v74, %v53
  %v86 = vmul.f32 %v77, %v53
  %v87 = vmul.f32 %v80, %v53
  %v88 = vmul.f32 %v83, %v53
  %v89 = vadd.f32 %v84, 1e-06
  %v90 = vadd.f32 %v85, 1e-06
  %v91 = vadd.f32 %v86, 1e-06
  %v92 = vadd.f32 %v87, 1e-06
  %v93 = vadd.f32 %v88, 1e-06
  %v94 = vrsqrt.pop %v89
  %v95 = vmul.f32 %v94, %v89
  %v96 = vmul.f32 %v95, %v94
  %v97 = vmul.f32 0.5, %v96
  %v98 = vsub.f32 1.5, %v97
  %v99 = vmul.f32 %v94, %v98
  %vm100 = vweird.f32 %v89
  %vm101 = vweird.f32 %v94
  %vm102 = vmor %vm100, %vm101
  %v103 = vsel %vm102, %v94, %v99
  %v104 = vrsqrt.pop %v90
  %v105 = vmul.f32 %v104, %v90
  %v106 = vmul.f32 %v105, %v104
  %v107 = vmul.f32 0.5, %v106
  %v108 = vsub.f32 1.5, %v107
  %v109 = vmul.f32 %v104, %v108
  %vm110 = vweird.f32 %v90
  %vm111 = vweird.f32 %v104
  %vm112 = vmor %vm110, %vm111
  %v113 = vsel %vm112, %v104, %v109
  %v114 = vrsqrt.pop %v91
  %v115 = vmul.f32 %v114, %v91
  %v116 = vmul.f32 %v115, %v114
  %v117 = vmul.f32 0.5, %v116
  %v118 = vsub.f32 1.5, %v117
  %v119 = vmul.f32 %v114, %v118
  %vm120 = vweird.f32 %v91
  %vm121 = vweird.f32 %v114
  %vm122 = vmor %vm120, %vm121
  %v123 = vsel %vm122, %v114, %v119
  %v124 = vrsqrt.pop %v92
  %v125 = vmul.f32 %v124, %v92
  %v126 = vmul.f32 %v125, %v124
  %v127 = vmul.f32 0.5, %v126
  %v128 = vsub.f32 1.5, %v127
  %v129 = vmul.f32 %v124, %v128
  %vm130 = vweird.f32 %v92
  %vm131 = vweird.f32 %v124
  %vm132 = vmor %vm130, %vm131
  %v133 = vsel %vm132, %v124, %v129
  %v134 = vrsqrt.pop %v93
  %v135 = vmul.f32 %v134, %v93
  %v136 = vmul.f32 %v135, %v134
  %v137 = vmul.f32 0.5, %v136
  %v138 = vsub.f32 1.5, %v137
  %v139 = vmul.f32 %v134, %v138
  %vm140 = vweird.f32 %v93
  %vm141 = vweird.f32 %v134
  %vm142 = vmor %vm140, %vm141
  %v143 = vsel %vm142, %v134, %v139
  %v144 = vmul.f32 %v59, %v103
  %v145 = vmul.f32 %v60, %v113
  %v146 = vmul.f32 %v61, %v123
  %v147 = vmul.f32 %v62, %v133
  %v148 = vmul.f32 %v63, %v143
  %v149 = vld [vmem:[%s1] sm:$0x1]
  %v151 = vperm.slane %v149, 0
  %v153 = vmul.f32 %v144, %v151
  %v154 = vmul.f32 %v145, %v151
  %v155 = vmul.f32 %v146, %v151
  %v156 = vmul.f32 %v147, %v151
  %v157 = vmul.f32 %v148, %v151
  %v158 = vld [vmem:[%s2] sm:$0x1]
  %v160 = vperm.slane %v158, 0
  %v162 = vadd.f32 %v153, %v160
  %v163 = vadd.f32 %v154, %v160
  %v164 = vadd.f32 %v155, %v160
  %v165 = vadd.f32 %v156, %v160
  %v166 = vadd.f32 %v157, %v160
  %v167 = vpack.c.bf16 %v163, %v162
  %v168 = vpack.c.bf16 %v165, %v164
  %v169 = vpack.c.bf16 %v166, %v166
  %v170 = vld [vmem:[%s3] sm:$0xf]
  %v171 = vld [vmem:[%s3 + $0x4] sm:$0xf]
  %v172 = vld [vmem:[%s3 + $0x8] sm:$0xf]
  %v173 = vld [vmem:[%s3 + $0xc] sm:$0xf]
  %v174 = vld [vmem:[%s4] sm:$0x1]
  %v176 = vperm.slane %v174, 0
  %v182 = vunpack.c.l.b16 %v170
  %v183 = vunpack.c.l.b16 %v171
  %v184 = vunpack.c.l.b16 %v172
  %v185 = vunpack.c.l.b16 %v173
  %v186 = vpack.c.b16 %v183, %v182
  %v187 = vpack.c.b16 %v185, %v184
  %v191 = vsel %vm31, %v167, 0
  %v194 = vsel %vm31, %v168, 0
  %v197 = vsel %vm31, %v169, 0
  %199 = vmatpush.bf16.msra.mxu0 0
  %200 = vmatpush.bf16.msra.mxu0 0
  %201 = vmatpush.bf16.msra.mxu0 0
  %202 = vmatpush.bf16.msra.mxu0 0
  %203 = vmatpush.bf16.msra.mxu0 0
  %204 = vmatpush.bf16.msra.mxu0 0
  %205 = vmatpush.bf16.msra.mxu0 %v187
  %206 = vmatpush.bf16.msra.mxu0 %v186
  %207 = vmatmul.bf16.gmra.mxu0 %v191
  %v208 = vpop.f32.mrf.mxu0
  %v209 = vadd.f32 %v176, %v208
  %v210 = vpop.f32.mrf.mxu0
  %v211 = vadd.f32 %v176, %v210
  %212 = vmatmul.bf16.gmra.mxu0 %v194
  %v213 = vpop.f32.mrf.mxu0
  %v214 = vadd.f32 %v176, %v213
  %v215 = vpop.f32.mrf.mxu0
  %v216 = vadd.f32 %v176, %v215
  %217 = vmatmul.bf16.gmra.mxu0 %v197
  %v218 = vpop.f32.mrf.mxu0
  %v219 = vadd.f32 %v176, %v218
  %v220 = vpop.f32.mrf.mxu0
  %221 = vdwg.mxu0
  %v222 = vmul.f32 %v209, %v209
  %v223 = vmul.f32 %v211, %v211
  %v224 = vmul.f32 %v214, %v214
  %v225 = vmul.f32 %v216, %v216
  %v226 = vmul.f32 %v219, %v219
  %v227 = vmul.f32 %v209, %v222
  %v228 = vmul.f32 %v211, %v223
  %v229 = vmul.f32 %v214, %v224
  %v230 = vmul.f32 %v216, %v225
  %v231 = vmul.f32 %v219, %v226
  %v232 = vmul.f32 %v227, 0.044715
  %v233 = vmul.f32 %v228, 0.044715
  %v234 = vmul.f32 %v229, 0.044715
  %v235 = vmul.f32 %v230, 0.044715
  %v236 = vmul.f32 %v231, 0.044715
  %v237 = vadd.f32 %v209, %v232
  %v238 = vadd.f32 %v211, %v233
  %v239 = vadd.f32 %v214, %v234
  %v240 = vadd.f32 %v216, %v235
  %v241 = vadd.f32 %v219, %v236
  %v242 = vmul.f32 %v237, 0.7978846
  %v243 = vmul.f32 %v238, 0.7978846
  %v244 = vmul.f32 %v239, 0.7978846
  %v245 = vmul.f32 %v240, 0.7978846
  %v246 = vmul.f32 %v241, 0.7978846
  %v247 = vtanh.pop %v242
  %v248 = vtanh.pop %v243
  %v249 = vtanh.pop %v244
  %v250 = vtanh.pop %v245
  %v251 = vtanh.pop %v246
  %v252 = vadd.f32 %v247, 1.0
  %v253 = vadd.f32 %v248, 1.0
  %v254 = vadd.f32 %v249, 1.0
  %v255 = vadd.f32 %v250, 1.0
  %v256 = vadd.f32 %v251, 1.0
  %v257 = vmul.f32 %v252, 0.5
  %v258 = vmul.f32 %v253, 0.5
  %v259 = vmul.f32 %v254, 0.5
  %v260 = vmul.f32 %v255, 0.5
  %v261 = vmul.f32 %v256, 0.5
  %v262 = vmul.f32 %v209, %v257
  %v263 = vmul.f32 %v211, %v258
  %v264 = vmul.f32 %v214, %v259
  %v265 = vmul.f32 %v216, %v260
  %v266 = vmul.f32 %v219, %v261
  %v267 = vpack.c.bf16 %v262, %v262
  %v268 = vpack.c.bf16 %v263, %v263
  %v269 = vpack.c.bf16 %v264, %v264
  %v270 = vpack.c.bf16 %v265, %v265
  %v271 = vpack.c.bf16 %v266, %v266
  %272 = vst [vmem:[%s5] sm:$0xf] %v267
  %273 = vst [vmem:[%s5 + $0x4] sm:$0xf] %v268
  %274 = vst [vmem:[%s5 + $0x8] sm:$0xf] %v269
  %275 = vst [vmem:[%s5 + $0xc] sm:$0xf] %v270
  %276 = vst [vmem:[%s5 + $0x10] sm:$0xf] %v271
  // Predicated region
  $region22: #{closed_call.21} parent=0 // pred_check
    _
  $region23: #{closed_call.21} parent=0 // pred_check_branch
    %278 = sbr.rel (0) target = $region25
  $region24: #{closed_call.21} parent=0 // pred_region
    _
  $region25: #{closed_call.21} parent=0 // pred_fallthru
    _
  // Predicated region
  $region26: #{closed_call.21} parent=0 // pred_check
    _
  $region27: #{closed_call.21} parent=0 // pred_check_branch
    %280 = sbr.rel (0) target = $region29
  $region28: #{closed_call.21} parent=0 // pred_region
    _
  $region29: #{closed_call.21} parent=0 // pred_fallthru
    _

// kernel: closed_call.22
$region0: #{closed_call.22}
  #allocation0 [shape = 'u32[]', space=smem, size = 0x4, offset = 0x4, fixed_abs, tag = 'smem constant byte address 0x4 - core index']
  #allocation1 [shape = 'u32[72,128]{1,0:T(1,128)}', space=vmem, size = 0x9000, scoped, tag = 'internal scratch']
  %s0 = inlined_call_operand.vmem [shape: bf16[40,128], index: 0, kind: input, shape index: {}]
  %s1 = inlined_call_operand.vmem [shape: bf16[128,32], index: 1, kind: input, shape index: {}]
  %s2 = inlined_call_operand.vmem [shape: f32[1,32], index: 2, kind: input, shape index: {}]
  %s3 = inlined_call_operand.vmem [shape: bf16[40,32], index: 3, kind: input, shape index: {}]
  %s4 = inlined_call_operand.vmem [shape: bf16[40,32], index: 4, kind: output, shape index: {}]
  %s5 = sld [smem:[#allocation0]]
  $region26: #{closed_call.22} parent=0
    _
  %s7 = ssub.s32 1, %s5
  %s8 = scalar_select 0, %s7, %s5
  // Predicated region
  $region2: #{closed_call.22} parent=0 // pred_check
    _
  $region3: #{closed_call.22} parent=0 // pred_check_branch
    %10 = sbr.rel (0) target = $region5
  $region4: #{closed_call.22} parent=0 // pred_region
    _
  $region5: #{closed_call.22} parent=0 // pred_fallthru
    _
  // Predicated region
  $region6: #{closed_call.22} parent=0 // pred_check
    _
  $region7: #{closed_call.22} parent=0 // pred_check_branch
    %12 = sbr.rel (0) target = $region9
  $region8: #{closed_call.22} parent=0 // pred_region
    _
  $region9: #{closed_call.22} parent=0 // pred_fallthru
    _
  // Predicated region
  $region10: #{closed_call.22} parent=0 // pred_check
    _
  $region11: #{closed_call.22} parent=0 // pred_check_branch
    %14 = sbr.rel (0) target = $region13
  $region12: #{closed_call.22} parent=0 // pred_region
    _
  $region13: #{closed_call.22} parent=0 // pred_fallthru
    _
  // Predicated region
  $region14: #{closed_call.22} parent=0 // pred_check
    _
  $region15: #{closed_call.22} parent=0 // pred_check_branch
    %16 = sbr.rel (0) target = $region17
  $region16: #{closed_call.22} parent=0 // pred_region
    _
  $region17: #{closed_call.22} parent=0 // pred_fallthru
    _
  %v17 = vld [vmem:[%s0] sm:$0xf]
  %v18 = vld [vmem:[%s0 + $0x4] sm:$0xf]
  %v19 = vld [vmem:[%s0 + $0x8] sm:$0xf]
  %v20 = vld [vmem:[%s0 + $0xc] sm:$0xf]
  %v21 = vld [vmem:[%s0 + $0x10] sm:$0xf]
  %v22 = vld [vmem:[%s1] sm:$0xf]
  %v23 = vld [vmem:[%s1 + $0x4] sm:$0xf]
  %v24 = vld [vmem:[%s1 + $0x8] sm:$0xf]
  %v25 = vld [vmem:[%s1 + $0xc] sm:$0xf]
  %v26 = vld [vmem:[%s1 + $0x10] sm:$0xf]
  %v27 = vld [vmem:[%s1 + $0x14] sm:$0xf]
  %v28 = vld [vmem:[%s1 + $0x18] sm:$0xf]
  %v29 = vld [vmem:[%s1 + $0x1c] sm:$0xf]
  %v30 = vld [vmem:[%s1 + $0x20] sm:$0xf]
  %v31 = vld [vmem:[%s1 + $0x24] sm:$0xf]
  %v32 = vld [vmem:[%s1 + $0x28] sm:$0xf]
  %v33 = vld [vmem:[%s1 + $0x2c] sm:$0xf]
  %v34 = vld [vmem:[%s1 + $0x30] sm:$0xf]
  %v35 = vld [vmem:[%s1 + $0x34] sm:$0xf]
  %v36 = vld [vmem:[%s1 + $0x38] sm:$0xf]
  %v37 = vld [vmem:[%s1 + $0x3c] sm:$0xf]
  %v38 = vld [vmem:[%s2] sm:$0x1]
  %v40 = vperm.slane %v38, 0
  %v47 = vunpack.c.l.b16 %v17
  %v48 = vunpack.c.l.b16 %v18
  %v49 = vunpack.c.l.b16 %v19
  %v50 = vunpack.c.l.b16 %v20
  %v51 = vunpack.c.l.b16 %v21
  %v52 = vpack.c.b16 %v48, %v47
  %v53 = vpack.c.b16 %v50, %v49
  %v54 = vpack.c.b16 %v51, %v51
  %v74 = vunpack.c.l.b16 %v22
  %v75 = vunpack.c.l.b16 %v23
  %v76 = vunpack.c.l.b16 %v24
  %v77 = vunpack.c.l.b16 %v25
  %v78 = vunpack.c.l.b16 %v26
  %v79 = vunpack.c.l.b16 %v27
  %v80 = vunpack.c.l.b16 %v28
  %v81 = vunpack.c.l.b16 %v29
  %v82 = vunpack.c.l.b16 %v30
  %v83 = vunpack.c.l.b16 %v31
  %v84 = vunpack.c.l.b16 %v32
  %v85 = vunpack.c.l.b16 %v33
  %v86 = vunpack.c.l.b16 %v34
  %v87 = vunpack.c.l.b16 %v35
  %v88 = vunpack.c.l.b16 %v36
  %v89 = vunpack.c.l.b16 %v37
  %v90 = vpack.c.b16 %v75, %v74
  %v91 = vpack.c.b16 %v77, %v76
  %v92 = vpack.c.b16 %v79, %v78
  %v93 = vpack.c.b16 %v81, %v80
  %v94 = vpack.c.b16 %v83, %v82
  %v95 = vpack.c.b16 %v85, %v84
  %v96 = vpack.c.b16 %v87, %v86
  %v97 = vpack.c.b16 %v89, %v88
  %106 = vmatpush.bf16.msra.mxu0 %v97
  %107 = vmatpush.bf16.msra.mxu0 %v96
  %108 = vmatpush.bf16.msra.mxu0 %v95
  %109 = vmatpush.bf16.msra.mxu0 %v94
  %110 = vmatpush.bf16.msra.mxu0 %v93
  %111 = vmatpush.bf16.msra.mxu0 %v92
  %112 = vmatpush.bf16.msra.mxu0 %v91
  %113 = vmatpush.bf16.msra.mxu0 %v90
  %114 = vmatmul.bf16.gmra.mxu0 %v52
  %v115 = vpop.f32.mrf.mxu0
  %v116 = vadd.f32 %v40, %v115
  %v117 = vpop.f32.mrf.mxu0
  %v118 = vadd.f32 %v40, %v117
  %119 = vmatmul.bf16.gmra.mxu0 %v53
  %v120 = vpop.f32.mrf.mxu0
  %v121 = vadd.f32 %v40, %v120
  %v122 = vpop.f32.mrf.mxu0
  %v123 = vadd.f32 %v40, %v122
  %124 = vmatmul.bf16.gmra.mxu0 %v54
  %v125 = vpop.f32.mrf.mxu0
  %v126 = vadd.f32 %v40, %v125
  %v127 = vpop.f32.mrf.mxu0
  %128 = vdwg.mxu0
  %v129 = vld [vmem:[%s3] sm:$0xf]
  %v130 = vld [vmem:[%s3 + $0x4] sm:$0xf]
  %v131 = vld [vmem:[%s3 + $0x8] sm:$0xf]
  %v132 = vld [vmem:[%s3 + $0xc] sm:$0xf]
  %v133 = vld [vmem:[%s3 + $0x10] sm:$0xf]
  %v134 = vunpack.c.l.bf16 %v129
  %v135 = vunpack.c.l.bf16 %v130
  %v136 = vunpack.c.l.bf16 %v131
  %v137 = vunpack.c.l.bf16 %v132
  %v138 = vunpack.c.l.bf16 %v133
  %v139 = vadd.f32 %v116, %v134
  %v140 = vadd.f32 %v118, %v135
  %v141 = vadd.f32 %v121, %v136
  %v142 = vadd.f32 %v123, %v137
  %v143 = vadd.f32 %v126, %v138
  %v144 = vpack.c.bf16 %v139, %v139
  %v145 = vpack.c.bf16 %v140, %v140
  %v146 = vpack.c.bf16 %v141, %v141
  %v147 = vpack.c.bf16 %v142, %v142
  %v148 = vpack.c.bf16 %v143, %v143
  %vm149 = vcmask 257024
  %150 = vst.msk [vmem:[%s4] sm:$0xf] %vm149, %v144
  %151 = vst.msk [vmem:[%s4 + $0x4] sm:$0xf] %vm149, %v145
  %152 = vst.msk [vmem:[%s4 + $0x8] sm:$0xf] %vm149, %v146
  %153 = vst.msk [vmem:[%s4 + $0xc] sm:$0xf] %vm149, %v147
  %154 = vst.msk [vmem:[%s4 + $0x10] sm:$0xf] %vm149, %v148
  // Predicated region
  $region18: #{closed_call.22} parent=0 // pred_check
    _
  $region19: #{closed_call.22} parent=0 // pred_check_branch
    %156 = sbr.rel (0) target = $region21
  $region20: #{closed_call.22} parent=0 // pred_region
    _
  $region21: #{closed_call.22} parent=0 // pred_fallthru
    _
  // Predicated region
  $region22: #{closed_call.22} parent=0 // pred_check
    _
  $region23: #{closed_call.22} parent=0 // pred_check_branch
    %158 = sbr.rel (0) target = $region25
  $region24: #{closed_call.22} parent=0 // pred_region
    _
  $region25: #{closed_call.22} parent=0 // pred_fallthru
    _

// kernel: base_backbone_forward.7
$region0: #{base_backbone_forward.7}
  #allocation0 [shape = 'u32[]', space=smem, size = 0x4, offset = 0x4, fixed_abs, tag = 'smem constant byte address 0x4 - core index']
  #allocation1 [shape = 'u32[72,128]{1,0:T(1,128)}', space=vmem, size = 0x9000, scoped, tag = 'internal scratch']
  %s0 = inlined_call_operand.vmem [shape: bf16[40,32], index: 0, kind: input, shape index: {}]
  %s1 = inlined_call_operand.vmem [shape: f32[1,32], index: 1, kind: input, shape index: {}]
  %s2 = inlined_call_operand.vmem [shape: f32[1,32], index: 2, kind: input, shape index: {}]
  %s3 = inlined_call_operand.vmem [shape: f32[40,32], index: 3, kind: output, shape index: {}]
  %s4 = sld [smem:[#allocation0]]
  $region22: #{base_backbone_forward.7} parent=0
    _
  %s6 = ssub.s32 1, %s4
  %s7 = scalar_select 0, %s6, %s4
  // Predicated region
  $region2: #{base_backbone_forward.7} parent=0 // pred_check
    _
  $region3: #{base_backbone_forward.7} parent=0 // pred_check_branch
    %9 = sbr.rel (0) target = $region5
  $region4: #{base_backbone_forward.7} parent=0 // pred_region
    _
  $region5: #{base_backbone_forward.7} parent=0 // pred_fallthru
    _
  // Predicated region
  $region6: #{base_backbone_forward.7} parent=0 // pred_check
    _
  $region7: #{base_backbone_forward.7} parent=0 // pred_check_branch
    %11 = sbr.rel (0) target = $region9
  $region8: #{base_backbone_forward.7} parent=0 // pred_region
    _
  $region9: #{base_backbone_forward.7} parent=0 // pred_fallthru
    _
  // Predicated region
  $region10: #{base_backbone_forward.7} parent=0 // pred_check
    _
  $region11: #{base_backbone_forward.7} parent=0 // pred_check_branch
    %13 = sbr.rel (0) target = $region13
  $region12: #{base_backbone_forward.7} parent=0 // pred_region
    _
  $region13: #{base_backbone_forward.7} parent=0 // pred_fallthru
    _
  %v14 = vld [vmem:[%s0] sm:$0xf]
  %v15 = vld [vmem:[%s0 + $0x4] sm:$0xf]
  %v16 = vld [vmem:[%s0 + $0x8] sm:$0xf]
  %v17 = vld [vmem:[%s0 + $0xc] sm:$0xf]
  %v18 = vld [vmem:[%s0 + $0x10] sm:$0xf]
  %v19 = vunpack.c.l.bf16 %v14
  %v20 = vunpack.c.l.bf16 %v15
  %v21 = vunpack.c.l.bf16 %v16
  %v22 = vunpack.c.l.bf16 %v17
  %v23 = vunpack.c.l.bf16 %v18
  %vm24 = vcmask 261120
  %v25 = vsel %vm24, %v19, 0.0
  %26 = vadd.xlane.f32.xlu0 %v25
  %v27 = vpop.xlane.xlu0 %26
  %v28 = vsel %vm24, %v20, 0.0
  %29 = vadd.xlane.f32.xlu0 %v28
  %v30 = vpop.xlane.xlu0 %29
  %v31 = vsel %vm24, %v21, 0.0
  %32 = vadd.xlane.f32.xlu0 %v31
  %v33 = vpop.xlane.xlu0 %32
  %v34 = vsel %vm24, %v22, 0.0
  %35 = vadd.xlane.f32.xlu0 %v34
  %v36 = vpop.xlane.xlu0 %35
  %v37 = vsel %vm24, %v23, 0.0
  %38 = vadd.xlane.f32.xlu0 %v37
  %v39 = vpop.xlane.xlu0 %38
  %v40 = vrcp.pop 32.0
  %v41 = vmul.f32 32.0, %v40
  %v42 = vsub.f32 1.0, %v41
  %v43 = vmul.f32 %v40, %v42
  %v44 = vadd.f32 %v40, %v43
  %vm45 = vweird.f32 %v40
  %v46 = vsel %vm45, %v40, %v44
  %v47 = vmul.f32 %v27, %v46
  %v48 = vmul.f32 %v30, %v46
  %v49 = vmul.f32 %v33, %v46
  %v50 = vmul.f32 %v36, %v46
  %v51 = vmul.f32 %v39, %v46
  %v52 = vsub.f32 %v19, %v47
  %v53 = vsub.f32 %v20, %v48
  %v54 = vsub.f32 %v21, %v49
  %v55 = vsub.f32 %v22, %v50
  %v56 = vsub.f32 %v23, %v51
  %v57 = vmul.f32 %v52, %v52
  %v58 = vmul.f32 %v53, %v53
  %v59 = vmul.f32 %v54, %v54
  %v60 = vmul.f32 %v55, %v55
  %v61 = vmul.f32 %v56, %v56
  %v62 = vsel %vm24, %v57, 0.0
  %63 = vadd.xlane.f32.xlu0 %v62
  %v64 = vpop.xlane.xlu0 %63
  %v65 = vsel %vm24, %v58, 0.0
  %66 = vadd.xlane.f32.xlu0 %v65
  %v67 = vpop.xlane.xlu0 %66
  %v68 = vsel %vm24, %v59, 0.0
  %69 = vadd.xlane.f32.xlu0 %v68
  %v70 = vpop.xlane.xlu0 %69
  %v71 = vsel %vm24, %v60, 0.0
  %72 = vadd.xlane.f32.xlu0 %v71
  %v73 = vpop.xlane.xlu0 %72
  %v74 = vsel %vm24, %v61, 0.0
  %75 = vadd.xlane.f32.xlu0 %v74
  %v76 = vpop.xlane.xlu0 %75
  %v77 = vmul.f32 %v64, %v46
  %v78 = vmul.f32 %v67, %v46
  %v79 = vmul.f32 %v70, %v46
  %v80 = vmul.f32 %v73, %v46
  %v81 = vmul.f32 %v76, %v46
  %v82 = vadd.f32 %v77, 1e-06
  %v83 = vadd.f32 %v78, 1e-06
  %v84 = vadd.f32 %v79, 1e-06
  %v85 = vadd.f32 %v80, 1e-06
  %v86 = vadd.f32 %v81, 1e-06
  %v87 = vrsqrt.pop %v82
  %v88 = vmul.f32 %v87, %v82
  %v89 = vmul.f32 %v88, %v87
  %v90 = vmul.f32 0.5, %v89
  %v91 = vsub.f32 1.5, %v90
  %v92 = vmul.f32 %v87, %v91
  %vm93 = vweird.f32 %v82
  %vm94 = vweird.f32 %v87
  %vm95 = vmor %vm93, %vm94
  %v96 = vsel %vm95, %v87, %v92
  %v97 = vrsqrt.pop %v83
  %v98 = vmul.f32 %v97, %v83
  %v99 = vmul.f32 %v98, %v97
  %v100 = vmul.f32 0.5, %v99
  %v101 = vsub.f32 1.5, %v100
  %v102 = vmul.f32 %v97, %v101
  %vm103 = vweird.f32 %v83
  %vm104 = vweird.f32 %v97
  %vm105 = vmor %vm103, %vm104
  %v106 = vsel %vm105, %v97, %v102
  %v107 = vrsqrt.pop %v84
  %v108 = vmul.f32 %v107, %v84
  %v109 = vmul.f32 %v108, %v107
  %v110 = vmul.f32 0.5, %v109
  %v111 = vsub.f32 1.5, %v110
  %v112 = vmul.f32 %v107, %v111
  %vm113 = vweird.f32 %v84
  %vm114 = vweird.f32 %v107
  %vm115 = vmor %vm113, %vm114
  %v116 = vsel %vm115, %v107, %v112
  %v117 = vrsqrt.pop %v85
  %v118 = vmul.f32 %v117, %v85
  %v119 = vmul.f32 %v118, %v117
  %v120 = vmul.f32 0.5, %v119
  %v121 = vsub.f32 1.5, %v120
  %v122 = vmul.f32 %v117, %v121
  %vm123 = vweird.f32 %v85
  %vm124 = vweird.f32 %v117
  %vm125 = vmor %vm123, %vm124
  %v126 = vsel %vm125, %v117, %v122
  %v127 = vrsqrt.pop %v86
  %v128 = vmul.f32 %v127, %v86
  %v129 = vmul.f32 %v128, %v127
  %v130 = vmul.f32 0.5, %v129
  %v131 = vsub.f32 1.5, %v130
  %v132 = vmul.f32 %v127, %v131
  %vm133 = vweird.f32 %v86
  %vm134 = vweird.f32 %v127
  %vm135 = vmor %vm133, %vm134
  %v136 = vsel %vm135, %v127, %v132
  %v137 = vmul.f32 %v52, %v96
  %v138 = vmul.f32 %v53, %v106
  %v139 = vmul.f32 %v54, %v116
  %v140 = vmul.f32 %v55, %v126
  %v141 = vmul.f32 %v56, %v136
  %v142 = vld [vmem:[%s1] sm:$0x1]
  %v144 = vperm.slane %v142, 0
  %v146 = vmul.f32 %v137, %v144
  %v147 = vmul.f32 %v138, %v144
  %v148 = vmul.f32 %v139, %v144
  %v149 = vmul.f32 %v140, %v144
  %v150 = vmul.f32 %v141, %v144
  %v151 = vld [vmem:[%s2] sm:$0x1]
  %v153 = vperm.slane %v151, 0
  %v155 = vadd.f32 %v146, %v153
  %v156 = vadd.f32 %v147, %v153
  %v157 = vadd.f32 %v148, %v153
  %v158 = vadd.f32 %v149, %v153
  %v159 = vadd.f32 %v150, %v153
  %160 = vst.msk [vmem:[%s3] sm:$0xff] %vm24, %v155
  %161 = vst.msk [vmem:[%s3 + $0x8] sm:$0xff] %vm24, %v156
  %162 = vst.msk [vmem:[%s3 + $0x10] sm:$0xff] %vm24, %v157
  %163 = vst.msk [vmem:[%s3 + $0x18] sm:$0xff] %vm24, %v158
  %164 = vst.msk [vmem:[%s3 + $0x20] sm:$0xff] %vm24, %v159
  // Predicated region
  $region14: #{base_backbone_forward.7} parent=0 // pred_check
    _
  $region15: #{base_backbone_forward.7} parent=0 // pred_check_branch
    %166 = sbr.rel (0) target = $region17
  $region16: #{base_backbone_forward.7} parent=0 // pred_region
    _
  $region17: #{base_backbone_forward.7} parent=0 // pred_fallthru
    _
  // Predicated region
  $region18: #{base_backbone_forward.7} parent=0 // pred_check
    _
  $region19: #{base_backbone_forward.7} parent=0 // pred_check_branch
    %168 = sbr.rel (0) target = $region21
  $region20: #{base_backbone_forward.7} parent=0 // pred_region
    _
  $region21: #{base_backbone_forward.7} parent=0 // pred_fallthru
    _

</llo_original>
